<compile_context>
chip_gen: v5e
topology: v5e:2x2
jax: 0.10.0
libtpu: 0.0.40
codegen_flags: <defaults>
</compile_context>

<pallas_src>
import functools

import jax
import jax.numpy as jnp
from jax.experimental import pallas as pl
from jax.experimental.pallas import tpu as pltpu


def _round_up(v, m):
    return (v + m - 1) // m * m


def _vmem_capacity_bytes():
    # Per-TensorCore VMEM: 128 MiB on v5e/v6e, 64 MiB on v7x.
    try:
        return int(pltpu.get_tpu_info().vmem_capacity_bytes)
    except Exception:
        return 64 << 20  # conservative fallback (v7x per-core VMEM)


def _step_vmem_bytes(tn, th, nfeat_p, nhid_p):
    """Per-step VMEM footprint assuming the default 2x buffering on every block."""
    x_tiles = 2 * tn * nfeat_p * 4            # f32 x tile
    out_tiles = 2 * tn * nhid_p * 4           # f32 out tile (doubles as accumulator)
    w1_tiles = 2 * nfeat_p * th * 2           # bf16 W1 tile
    w2_tiles = 2 * th * nhid_p * 2            # bf16 W2 tile
    bias = 2 * 8 * th * 4 + 2 * 8 * nhid_p * 4
    interm = tn * th * 4 + tn * th * 2 + tn * nhid_p * 4   # h f32, h bf16, dot result
    return x_tiles + out_tiles + w1_tiles + w2_tiles + bias + interm


def mlp_kernel(x_ref, w1_ref, b1_ref, w2_ref, b2_ref, o_ref):
    # grid = (row tiles [parallel], hidden tiles [arbitrary / reduction]).
    j = pl.program_id(1)

    @pl.when(j == 0)
    def _init():
        o_ref[...] = jnp.zeros_like(o_ref)

    # hidden_j = relu(x @ W1[:, j] + b1[j]); bf16 MXU operands, f32 accumulation,
    # f32 bias + ReLU epilogue.
    x = x_ref[...].astype(jnp.bfloat16)
    h = jnp.dot(x, w1_ref[...], preferred_element_type=jnp.float32)
    h = jnp.maximum(h + b1_ref[...], 0.0)

    # Dropout: nn.Dropout() in eval mode == identity.
    # TODO(synk): training-mode dropout (p=0.5 mask + 1/(1-p) scale via pltpu.prng_*).

    # out += hidden_j @ W2[j, :]  -- accumulate directly in the resident f32 out tile.
    o_ref[...] += jnp.dot(h.astype(jnp.bfloat16), w2_ref[...],
                          preferred_element_type=jnp.float32)

    @pl.when(j == pl.num_programs(1) - 1)
    def _epilogue():
        o_ref[...] = o_ref[...] + b2_ref[...]


@functools.partial(jax.jit, static_argnames=("nhid", "tn"))
def mlp_forward(x, w1, b1, w2, b2, *, nhid, tn=512):
    """x: (N, nfeat) f32; w1: (nfeat_p, nhid_p) bf16 (pre-padded); b1: (1, nhid_p) f32;
    w2: (nhid_p, nhid_p) bf16; b2: (1, nhid_p) f32.  Returns (N, nhid) f32."""
    n, nfeat_in = x.shape
    nfeat_p, nhid_p = w1.shape

    # Pad x feature columns only if the caller's nfeat is not already 128-aligned.
    # (Zero columns hit zero-padded W1 rows -> no semantic change.)  Weights/biases
    # are padded once in MLP.__init__, never per call.
    if nfeat_in != nfeat_p:
        x = jnp.pad(x, ((0, 0), (0, nfeat_p - nfeat_in)))

    # Row tile: multiple of 8, default 512 (better HBM pipeline efficiency than 256
    # and more LHS rows per weight fetch, which also helps feed the 256-deep MXU
    # on v6e/v7x when nfeat/nhid are only 128-wide).
    tn = max(8, min(_round_up(tn, 8), _round_up(n, 8)))

    # Hidden tile: largest 128-multiple divisor of nhid_p whose working set fits the
    # per-generation VMEM budget; if even th=128 doesn't fit, shrink the row tile.
    vmem_cap = _vmem_capacity_bytes()
    budget = int(0.70 * vmem_cap)
    th_candidates = [c for c in range(nhid_p, 0, -128) if nhid_p % c == 0]
    th = 128
    for cand in th_candidates:
        if _step_vmem_bytes(tn, cand, nfeat_p, nhid_p) <= budget:
            th = cand
            break
    while tn > 64 and _step_vmem_bytes(tn, th, nfeat_p, nhid_p) > budget:
        tn //= 2

    n_row = pl.cdiv(n, tn)          # partial last row block: OOB reads land only in
    n_hid = nhid_p // th            # discarded output rows; OOB writes are masked.
    grid = (n_row, n_hid)

    step_bytes = _step_vmem_bytes(tn, th, nfeat_p, nhid_p)
    vmem_limit = max(int(1.3 * step_bytes) + (2 << 20), 16 << 20)
    vmem_limit = min(vmem_limit, int(0.85 * vmem_cap))   # never request > physical VMEM

    weight_bytes = (w1.size * w1.dtype.itemsize + w2.size * w2.dtype.itemsize
                    + b1.size * b1.dtype.itemsize + b2.size * b2.dtype.itemsize)
    cost = pl.CostEstimate(
        flops=2 * n * nfeat_p * nhid_p + 2 * n * nhid_p * nhid_p,
        transcendentals=0,
        bytes_accessed=(x.size * x.dtype.itemsize + n * nhid_p * 4
                        + weight_bytes * (n_row if n_hid > 1 else 1)),
    )

    # NOTE: with megacore row-sharding ("parallel" row axis) each TensorCore DMAs its
    # own copy of the weights; acceptable here, the dominant cost for large N is rows.
    out = pl.pallas_call(
        mlp_kernel,
        out_shape=jax.ShapeDtypeStruct((n, nhid_p), jnp.float32),
        grid=grid,
        in_specs=[
            pl.BlockSpec((tn, nfeat_p), lambda i, j: (i, 0)),   # x: row-tiled
            pl.BlockSpec((nfeat_p, th), lambda i, j: (0, j)),   # W1: hidden-col tiled
            pl.BlockSpec((1, th), lambda i, j: (0, j)),         # b1: hidden tiled
            pl.BlockSpec((th, nhid_p), lambda i, j: (j, 0)),    # W2: hidden-row tiled
            pl.BlockSpec((1, nhid_p), lambda i, j: (0, 0)),     # b2: resident
        ],
        out_specs=pl.BlockSpec((tn, nhid_p), lambda i, j: (i, 0)),
        compiler_params=pltpu.CompilerParams(
            dimension_semantics=("parallel", "arbitrary"),
            vmem_limit_bytes=vmem_limit,
        ),
        cost_estimate=cost,
    )(x, w1, b1, w2, b2)

    return out if nhid == nhid_p else out[:, :nhid]


class MLP:
    """JAX mirror of the PyTorch MLP module; forward(x, edge_index) ignores edge_index."""

    def __init__(self, nfeat, nhid, key):
        self.nfeat = nfeat
        self.nhid = nhid
        nfeat_p = max(_round_up(nfeat, 128), 128)
        nhid_p = max(_round_up(nhid, 128), 128)

        k1, k2, k3, k4 = jax.random.split(key, 4)
        lim1 = 1.0 / jnp.sqrt(jnp.float32(nfeat))
        lim2 = 1.0 / jnp.sqrt(jnp.float32(nhid))
        # Stored as (in, out): transpose of PyTorch's (out, in) weight layout.
        w1 = jax.random.uniform(k1, (nfeat, nhid), jnp.float32, -lim1, lim1)
        b1 = jax.random.uniform(k2, (1, nhid), jnp.float32, -lim1, lim1)
        w2 = jax.random.uniform(k3, (nhid, nhid), jnp.float32, -lim2, lim2)
        b2 = jax.random.uniform(k4, (1, nhid), jnp.float32, -lim2, lim2)

        # Pad ONCE to lane-dense 128-multiples (zero padding is semantics preserving:
        # padded K rows/cols contribute 0, padded hidden cols have bias 0 so
        # relu(0)=0 and their W2 rows are 0, padded output cols are sliced off).
        # Weights stored bf16 (MXU-native, halves resident VMEM + HBM traffic);
        # biases stay f32 for the f32 epilogue.
        self.w1 = jnp.pad(w1, ((0, nfeat_p - nfeat), (0, nhid_p - nhid))).astype(jnp.bfloat16)
        self.b1 = jnp.pad(b1, ((0, 0), (0, nhid_p - nhid)))
        self.w2 = jnp.pad(w2, ((0, nhid_p - nhid), (0, nhid_p - nhid))).astype(jnp.bfloat16)
        self.b2 = jnp.pad(b2, ((0, 0), (0, nhid_p - nhid)))

    def forward(self, x, edge_index=None):
        return mlp_forward(x, self.w1, self.b1, self.w2, self.b2, nhid=self.nhid)


if __name__ == "__main__":
    key = jax.random.PRNGKey(0)
    kx, kp, ke = jax.random.split(key, 3)

    # Small but lane/MXU-aligned shapes; row grid has 2 steps (tn=512), hidden
    # grid has 1 step (weights fully VMEM-resident at this size).
    N, NFEAT, NHID = 1024, 128, 256
    x = jax.random.normal(kx, (N, NFEAT), jnp.float32)
    # edge_index is unused by the forward pass but constructed to match the signature.
    edge_index = jax.random.randint(ke, (2, 64), 0, N, jnp.int32)

    model = MLP(NFEAT, NHID, kp)
    out = model.forward(x, edge_index)
    out = jax.block_until_ready(out)

    # Reference in plain JAX with the same bf16-operand / f32-accumulate math
    # (eval-mode dropout = identity).  At these sizes the stored weights are unpadded.
    h_ref = jnp.maximum(
        jnp.dot(x.astype(jnp.bfloat16), model.w1,
                preferred_element_type=jnp.float32) + model.b1, 0.0)
    ref = jnp.dot(h_ref.astype(jnp.bfloat16), model.w2,
                  preferred_element_type=jnp.float32) + model.b2

    assert out.shape == (N, NHID)
    assert jnp.allclose(out, ref, atol=1e-2, rtol=1e-2)

    print("KERNEL_OK")
</pallas_src>

<mosaic_0001>
module attributes {stable_mosaic.version = 11 : i64} {
  func.func @mlp_kernel(%arg0: i32, %arg1: i32, %arg2: memref<512x128xf32, #tpu.memory_space<vmem>>, %arg3: memref<128x256xbf16, #tpu.memory_space<vmem>>, %arg4: memref<1x256xf32, #tpu.memory_space<vmem>>, %arg5: memref<256x256xbf16, #tpu.memory_space<vmem>>, %arg6: memref<1x256xf32, #tpu.memory_space<vmem>>, %arg7: memref<512x256xf32, #tpu.memory_space<vmem>>) attributes {dimension_semantics = [#tpu.dimension_semantics<parallel>, #tpu.dimension_semantics<arbitrary>], iteration_bounds = array<i64: 2, 1>, scalar_prefetch = 0 : i64, scratch_operands = 0 : i64, tpu.core_type = #tpu.core_type<tc>, window_params = [{transform_indices = @transform_0, window_bounds = array<i64: 512, 128>}, {transform_indices = @transform_1, window_bounds = array<i64: 128, 256>}, {transform_indices = @transform_2, window_bounds = array<i64: 1, 256>}, {transform_indices = @transform_3, window_bounds = array<i64: 256, 256>}, {pipeline_mode = #tpu.pipeline_mode<synchronous>, transform_indices = @transform_4, window_bounds = array<i64: 1, 256>}, {transform_indices = @transform_5, window_bounds = array<i64: 512, 256>}]} {
    %c0_i32 = arith.constant 0 : i32
    %0 = arith.cmpi eq, %arg1, %c0_i32 : i32
    %1 = arith.extui %0 : i1 to i32
    %c0_i32_0 = arith.constant 0 : i32
    %2 = arith.cmpi ne, %1, %c0_i32_0 : i32
    scf.if %2 {
      %cst_16 = arith.constant 0.000000e+00 : f32
      %21 = vector.broadcast %cst_16 : f32 to vector<512x256xf32>
      %c0_17 = arith.constant 0 : index
      %c0_18 = arith.constant 0 : index
      %22 = vector.load %arg7[%c0_17, %c0_18] : memref<512x256xf32, #tpu.memory_space<vmem>>, vector<512x256xf32>
      tpu.vector_store %arg7[%c0_17, %c0_18], %21 {strides = array<i32>} : memref<512x256xf32, #tpu.memory_space<vmem>>, vector<512x256xf32>,
    } else {
    }
    %c0 = arith.constant 0 : index
    %c0_1 = arith.constant 0 : index
    %3 = vector.load %arg2[%c0, %c0_1] : memref<512x128xf32, #tpu.memory_space<vmem>>, vector<512x128xf32>
    %4 = arith.truncf %3 : vector<512x128xf32> to vector<512x128xbf16>
    %c0_2 = arith.constant 0 : index
    %c0_3 = arith.constant 0 : index
    %5 = vector.load %arg3[%c0_2, %c0_3] : memref<128x256xbf16, #tpu.memory_space<vmem>>, vector<128x256xbf16>
    %cst = arith.constant dense<0.000000e+00> : vector<512x256xf32>
    %6 = tpu.matmul %4, %5, %cst {dimension_numbers = #tpu.dot_dimension_numbers<[1], [0], [0], [1], [0, 0, 1, 1], [], []>} : vector<512x128xbf16>, vector<128x256xbf16>, vector<512x256xf32> -> vector<512x256xf32>
    %c0_4 = arith.constant 0 : index
    %c0_5 = arith.constant 0 : index
    %7 = vector.load %arg4[%c0_4, %c0_5] : memref<1x256xf32, #tpu.memory_space<vmem>>, vector<1x256xf32>
    %8 = vector.broadcast %7 : vector<1x256xf32> to vector<512x256xf32>
    %9 = arith.addf %6, %8 : vector<512x256xf32>
    %cst_6 = arith.constant 0.000000e+00 : f32
    %10 = vector.broadcast %cst_6 : f32 to vector<512x256xf32>
    %11 = arith.maximumf %9, %10 : vector<512x256xf32>
    %c0_7 = arith.constant 0 : index
    %c0_8 = arith.constant 0 : index
    %12 = vector.load %arg7[%c0_7, %c0_8] : memref<512x256xf32, #tpu.memory_space<vmem>>, vector<512x256xf32>
    %13 = arith.truncf %11 : vector<512x256xf32> to vector<512x256xbf16>
    %c0_9 = arith.constant 0 : index
    %c0_10 = arith.constant 0 : index
    %14 = vector.load %arg5[%c0_9, %c0_10] : memref<256x256xbf16, #tpu.memory_space<vmem>>, vector<256x256xbf16>
    %cst_11 = arith.constant dense<0.000000e+00> : vector<512x256xf32>
    %15 = tpu.matmul %13, %14, %cst_11 {dimension_numbers = #tpu.dot_dimension_numbers<[1], [0], [0], [1], [0, 0, 1, 1], [], []>} : vector<512x256xbf16>, vector<256x256xbf16>, vector<512x256xf32> -> vector<512x256xf32>
    %16 = arith.addf %12, %15 : vector<512x256xf32>
    %c0_12 = arith.constant 0 : index
    %c0_13 = arith.constant 0 : index
    %17 = vector.load %arg7[%c0_12, %c0_13] : memref<512x256xf32, #tpu.memory_space<vmem>>, vector<512x256xf32>
    tpu.vector_store %arg7[%c0_12, %c0_13], %16 {strides = array<i32>} : memref<512x256xf32, #tpu.memory_space<vmem>>, vector<512x256xf32>,
    %c0_i32_14 = arith.constant 0 : i32
    %18 = arith.cmpi eq, %arg1, %c0_i32_14 : i32
    %19 = arith.extui %18 : i1 to i32
    %c0_i32_15 = arith.constant 0 : i32
    %20 = arith.cmpi ne, %19, %c0_i32_15 : i32
    scf.if %20 {
      %c0_16 = arith.constant 0 : index
      %c0_17 = arith.constant 0 : index
      %21 = vector.load %arg7[%c0_16, %c0_17] : memref<512x256xf32, #tpu.memory_space<vmem>>, vector<512x256xf32>
      %c0_18 = arith.constant 0 : index
      %c0_19 = arith.constant 0 : index
      %22 = vector.load %arg6[%c0_18, %c0_19] : memref<1x256xf32, #tpu.memory_space<vmem>>, vector<1x256xf32>
      %23 = vector.broadcast %22 : vector<1x256xf32> to vector<512x256xf32>
      %24 = arith.addf %21, %23 : vector<512x256xf32>
      %c0_20 = arith.constant 0 : index
      %c0_21 = arith.constant 0 : index
      %25 = vector.load %arg7[%c0_20, %c0_21] : memref<512x256xf32, #tpu.memory_space<vmem>>, vector<512x256xf32>
      tpu.vector_store %arg7[%c0_20, %c0_21], %24 {strides = array<i32>} : memref<512x256xf32, #tpu.memory_space<vmem>>, vector<512x256xf32>,
    } else {
    }
    return
  }
  func.func @transform_0(%arg0: i32, %arg1: i32) -> (i32, i32) {
    %c0_i32 = arith.constant 0 : i32
    %c0_i32_0 = arith.constant 0 : i32
    return %arg0, %c0_i32 : i32, i32
  }
  func.func @transform_1(%arg0: i32, %arg1: i32) -> (i32, i32) {
    %c0_i32 = arith.constant 0 : i32
    %c0_i32_0 = arith.constant 0 : i32
    return %c0_i32, %arg1 : i32, i32
  }
  func.func @transform_2(%arg0: i32, %arg1: i32) -> (i32, i32) {
    %c0_i32 = arith.constant 0 : i32
    %c0_i32_0 = arith.constant 0 : i32
    return %c0_i32, %arg1 : i32, i32
  }
  func.func @transform_3(%arg0: i32, %arg1: i32) -> (i32, i32) {
    %c0_i32 = arith.constant 0 : i32
    %c0_i32_0 = arith.constant 0 : i32
    return %arg1, %c0_i32 : i32, i32
  }
  func.func @transform_4(%arg0: i32, %arg1: i32) -> (i32, i32) {
    %c0_i32 = arith.constant 0 : i32
    %c0_i32_0 = arith.constant 0 : i32
    %c0_i32_1 = arith.constant 0 : i32
    return %c0_i32, %c0_i32_0 : i32, i32
  }
  func.func @transform_5(%arg0: i32, %arg1: i32) -> (i32, i32) {
    %c0_i32 = arith.constant 0 : i32
    %c0_i32_0 = arith.constant 0 : i32
    return %arg0, %c0_i32 : i32, i32
  }
}

</mosaic_0001>

<llo_original>
// kernel: mlp_forward.1
$region0: #{mlp_forward.1}
  #allocation0 [shape = 'u32[]', space=smem, size = 0x4, offset = 0x4, fixed_abs, tag = 'smem constant byte address 0x4 - core index']
  #allocation1 [shape = 'u32[72,128]{1,0:T(1,128)}', space=vmem, size = 0x9000, scoped, tag = 'internal scratch']
  %s0 = inlined_call_operand.hbm [shape: f32[1024,128], index: 0, kind: input, shape index: {}]
  %s1 = inlined_call_operand.hbm [shape: bf16[128,256], index: 1, kind: input, shape index: {}]
  %s2 = inlined_call_operand.hbm [shape: f32[1,256], index: 2, kind: input, shape index: {}]
  %s3 = inlined_call_operand.hbm [shape: bf16[256,256], index: 3, kind: input, shape index: {}]
  %s4 = inlined_call_operand.vmem [shape: f32[1,256], index: 4, kind: input, shape index: {}]
  %s5 = inlined_call_operand.hbm [shape: f32[1024,256], index: 5, kind: output, shape index: {}]
  %s6 = sld [smem:[#allocation0]]
  $region77: #{mlp_forward.1} parent=0
    _
  %s8 = ssub.s32 1, %s6
  %s9 = scalar_select 0, %s8, %s6
  $region1: #{mlp_forward.1} parent=0
    #allocation2 [shape = 'u8[524288]{0}', space=vmem, size = 0x80000, scoped, tag = 'input window, operand 0']
    #allocation3 [shape = 's32[2]{0}', space=sflag, size = 0x8, scoped, tag = 'scoped memory for mlp_forward.1']
    #allocation4 [shape = 's32[2]{0}', space=sflag, size = 0x8, scoped, tag = 'scoped memory for mlp_forward.1']
    #allocation5 [shape = 'u8[65536]{0}', space=vmem, size = 0x10000, scoped, tag = 'input window, operand 1, single buffered']
    #allocation6 [shape = 's32[1]{0}', space=sflag, size = 0x4, scoped, tag = 'scoped memory for mlp_forward.1']
    #allocation7 [shape = 'u8[1024]{0}', space=vmem, size = 0x400, scoped, tag = 'input window, operand 2, single buffered']
    #allocation8 [shape = 'u8[131072]{0}', space=vmem, size = 0x20000, scoped, tag = 'input window, operand 3, single buffered']
    #allocation9 [shape = 's32[1]{0}', space=sflag, size = 0x4, scoped, tag = 'scoped memory for mlp_forward.1']
    #allocation10 [shape = 'u8[1048576]{0}', space=vmem, size = 0x100000, scoped, tag = 'output window, operand 0']
    %10 = vsyncpa [#allocation3], 0
    %s11 = scalar_lea.sflag [#allocation3], 1
    %12 = vsyncpa %s11, 0
    %13 = vsyncpa [#allocation6], 0
    %14 = vsyncpa [#allocation9], 0
    %15 = vsyncpa [#allocation4], 0
    %s16 = scalar_lea.sflag [#allocation4], 1
    %17 = vsyncpa %s16, 0
    loop: start=0, step=1, limit=4
    $region2: #{mlp_forward.1} parent=1 // loop_pre_header
      _
    $region3: #{mlp_forward.1} parent=1 // loop_header
      %s19 = sphi 0, %s23
      %p20 = scmp.ge.s32.totalorder %s19, 4
      %s26 = sphi 0, %s38
      %s27 = sphi 0, %s34
      %s28 = sphi 0, %s26
      %s29 = sphi 0, %s27
      %s30 = sphi 0, %s28
      %s31 = sphi 0, %s29
      %s41 = sphi 0, %s43
      %s44 = sphi 0, %s41
      %s45 = sphi 0, %s44
      %s61 = sphi 0, %s45
      %s67 = sphi 0, %s69
      %s70 = sphi 0, %s67
      %s71 = sphi 0, %s70
      %s87 = sphi 0, %s71
      %s93 = sphi 0, %s95
      %s96 = sphi 0, %s93
      %s97 = sphi 0, %s96
      %s113 = sphi 0, %s97
      %s119 = sphi 0, %s121
      %s122 = sphi 0, %s119
      %s123 = sphi 0, %s122
      %s139 = sphi 0, %s123
      %s143 = sphi 0, %s143
      %s145 = sphi 0, %s143
      %s146 = sphi 0, %s145
      %s160 = sphi 0, %s146
      %s166 = sphi 0, %s168
      %s169 = sphi 0, %s166
      %s170 = sphi 0, %s169
      %s186 = sphi 0, %s170
    $region4: #{mlp_forward.1} parent=1 // loop_header_branch
      %22 = sbr.rel (%p20) target = $region8
    $region5: #{mlp_forward.1} parent=1 // loop_body
      %s24 = ssub.s32 %s19, 1
      %s25 = ssub.s32 %s19, 2
      %s32 = sadd.s32 1, %s27
      %p33 = scmp.ge.s32.totalorder %s32, 1
      %s34 = scalar_select %p33, 0, %s32
      %s35 = sadd.s32 1, %s26
      %s36 = scalar_select %p33, %s35, %s26
      %p37 = scmp.ge.s32.totalorder %s36, 2
      %s38 = scalar_select %p37, 0, %s36
      %s39 = ssub.s32 %s26, %s38
      %p40 = scmp.eq.s32.totalorder %s39, 0
      %s42 = sadd.s32 %s41, 1
      %s43 = scalar_select %p40, %s41, %s42
      %p46 = pneg %p40
      %p47 = scmp.eq.s32.totalorder %s19, 1
      %p48 = por %p46, %p47
      %p49 = scmp.ne.s32.totalorder %s41, %s44
      %p50 = scmp.eq.s32.totalorder %s19, 0
      %p51 = por %p49, %p50
      %p52 = scmp.ne.s32.totalorder %s41, %s44
      %p53 = scmp.eq.s32.totalorder %s24, 1
      %p54 = por %p52, %p53
      %p55 = scmp.ne.s32.totalorder %s44, %s45
      %p56 = scmp.eq.s32.totalorder %s24, 0
      %p57 = por %p55, %p56
      %p58 = scmp.ne.s32.totalorder %s44, %s45
      %p59 = scmp.eq.s32.totalorder %s25, 1
      %p60 = por %p58, %p59
      %p62 = scmp.ne.s32.totalorder %s45, %s61
      %p63 = scmp.eq.s32.totalorder %s25, 0
      %p64 = por %p62, %p63
      %s65 = ssub.s32 %s27, %s34
      %p66 = scmp.eq.s32.totalorder %s65, 0
      %s68 = sadd.s32 %s67, 1
      %s69 = scalar_select %p66, %s67, %s68
      %p72 = pneg %p66
      %p73 = scmp.eq.s32.totalorder %s19, 1
      %p74 = por %p72, %p73
      %p75 = scmp.ne.s32.totalorder %s67, %s70
      %p76 = scmp.eq.s32.totalorder %s19, 0
      %p77 = por %p75, %p76
      %p78 = scmp.ne.s32.totalorder %s67, %s70
      %p79 = scmp.eq.s32.totalorder %s24, 1
      %p80 = por %p78, %p79
      %p81 = scmp.ne.s32.totalorder %s70, %s71
      %p82 = scmp.eq.s32.totalorder %s24, 0
      %p83 = por %p81, %p82
      %p84 = scmp.ne.s32.totalorder %s70, %s71
      %p85 = scmp.eq.s32.totalorder %s25, 1
      %p86 = por %p84, %p85
      %p88 = scmp.ne.s32.totalorder %s71, %s87
      %p89 = scmp.eq.s32.totalorder %s25, 0
      %p90 = por %p88, %p89
      %s91 = ssub.s32 %s27, %s34
      %p92 = scmp.eq.s32.totalorder %s91, 0
      %s94 = sadd.s32 %s93, 1
      %s95 = scalar_select %p92, %s93, %s94
      %p98 = pneg %p92
      %p99 = scmp.eq.s32.totalorder %s19, 1
      %p100 = por %p98, %p99
      %p101 = scmp.ne.s32.totalorder %s93, %s96
      %p102 = scmp.eq.s32.totalorder %s19, 0
      %p103 = por %p101, %p102
      %p104 = scmp.ne.s32.totalorder %s93, %s96
      %p105 = scmp.eq.s32.totalorder %s24, 1
      %p106 = por %p104, %p105
      %p107 = scmp.ne.s32.totalorder %s96, %s97
      %p108 = scmp.eq.s32.totalorder %s24, 0
      %p109 = por %p107, %p108
      %p110 = scmp.ne.s32.totalorder %s96, %s97
      %p111 = scmp.eq.s32.totalorder %s25, 1
      %p112 = por %p110, %p111
      %p114 = scmp.ne.s32.totalorder %s97, %s113
      %p115 = scmp.eq.s32.totalorder %s25, 0
      %p116 = por %p114, %p115
      %s117 = ssub.s32 %s27, %s34
      %p118 = scmp.eq.s32.totalorder %s117, 0
      %s120 = sadd.s32 %s119, 1
      %s121 = scalar_select %p118, %s119, %s120
      %p124 = pneg %p118
      %p125 = scmp.eq.s32.totalorder %s19, 1
      %p126 = por %p124, %p125
      %p127 = scmp.ne.s32.totalorder %s119, %s122
      %p128 = scmp.eq.s32.totalorder %s19, 0
      %p129 = por %p127, %p128
      %p130 = scmp.ne.s32.totalorder %s119, %s122
      %p131 = scmp.eq.s32.totalorder %s24, 1
      %p132 = por %p130, %p131
      %p133 = scmp.ne.s32.totalorder %s122, %s123
      %p134 = scmp.eq.s32.totalorder %s24, 0
      %p135 = por %p133, %p134
      %p136 = scmp.ne.s32.totalorder %s122, %s123
      %p137 = scmp.eq.s32.totalorder %s25, 1
      %p138 = por %p136, %p137
      %p140 = scmp.ne.s32.totalorder %s123, %s139
      %p141 = scmp.eq.s32.totalorder %s25, 0
      %p142 = por %p140, %p141
      %s144 = sadd.s32 %s143, 1
      %p147 = scmp.eq.s32.totalorder %s19, 1
      %p148 = scmp.ne.s32.totalorder %s143, %s145
      %p149 = scmp.eq.s32.totalorder %s19, 0
      %p150 = por %p148, %p149
      %p151 = scmp.ne.s32.totalorder %s143, %s145
      %p152 = scmp.eq.s32.totalorder %s24, 1
      %p153 = por %p151, %p152
      %p154 = scmp.ne.s32.totalorder %s145, %s146
      %p155 = scmp.eq.s32.totalorder %s24, 0
      %p156 = por %p154, %p155
      %p157 = scmp.ne.s32.totalorder %s145, %s146
      %p158 = scmp.eq.s32.totalorder %s25, 1
      %p159 = por %p157, %p158
      %p161 = scmp.ne.s32.totalorder %s146, %s160
      %p162 = scmp.eq.s32.totalorder %s25, 0
      %p163 = por %p161, %p162
      %s164 = ssub.s32 %s26, %s38
      %p165 = scmp.eq.s32.totalorder %s164, 0
      %s167 = sadd.s32 %s166, 1
      %s168 = scalar_select %p165, %s166, %s167
      %p171 = pneg %p165
      %p172 = scmp.eq.s32.totalorder %s19, 1
      %p173 = por %p171, %p172
      %p174 = scmp.ne.s32.totalorder %s166, %s169
      %p175 = scmp.eq.s32.totalorder %s19, 0
      %p176 = por %p174, %p175
      %p177 = scmp.ne.s32.totalorder %s166, %s169
      %p178 = scmp.eq.s32.totalorder %s24, 1
      %p179 = por %p177, %p178
      %p180 = scmp.ne.s32.totalorder %s169, %s170
      %p181 = scmp.eq.s32.totalorder %s24, 0
      %p182 = por %p180, %p181
      %p183 = scmp.ne.s32.totalorder %s169, %s170
      %p184 = scmp.eq.s32.totalorder %s25, 1
      %p185 = por %p183, %p184
      %p187 = scmp.ne.s32.totalorder %s170, %s186
      %p188 = scmp.eq.s32.totalorder %s25, 0
      %p189 = por %p187, %p188
      %p190 = scmp.le.s32.totalorder 1, %s19
      %p191 = scmp.lt.s32.totalorder %s19, 3
      %p192 = pnand %p190, %p191
      %p193 = pneg %p192
      // Predicated region
      $region9: #{mlp_forward.1} parent=5 // pred_check
        _
      $region10: #{mlp_forward.1} parent=5 // pred_check_branch
        %195 = sbr.rel (%p192) target = $region12
      $region11: #{mlp_forward.1} parent=5 // pred_region
        %s196 = ssub.s32 %s19, 1
        // Predicated region
        $region13: #{mlp_forward.1} parent=11 // pred_check
          %p197 = pneg %p83
        $region14: #{mlp_forward.1} parent=11 // pred_check_branch
          %199 = sbr.rel (%p197) target = $region16
        $region15: #{mlp_forward.1} parent=11 // pred_region
          %s200 = smul.u32 2, %s29
          %202 = vsyncadd [#allocation6], 0
          %s203 = smul.addr %s200, 4
          %s204 = scalar_lea.hbm %s1, %s203
          %s205 = sshll.u32 %s204, 4
          %s206 = int_to_ptr.hbm [resolvable:$true] %s205
          %s207 = sshll.u32 [#allocation5], 4
          %s208 = int_to_ptr.vmem [resolvable:$true] %s207
          %213 = dma.hbm_to_vmem [thread:$0]  %s206, 2048, %s208, [#allocation6], 128, 128, 8
        $region16: #{mlp_forward.1} parent=11 // pred_fallthru
          _
        // Predicated region
        $region17: #{mlp_forward.1} parent=11 // pred_check
          %p214 = pneg %p109
        $region18: #{mlp_forward.1} parent=11 // pred_check_branch
          %216 = sbr.rel (%p214) target = $region20
        $region19: #{mlp_forward.1} parent=11 // pred_region
          %s217 = smul.u32 2, %s29
          %219 = vsyncadd [#allocation6], 0
          %s220 = scalar_lea.hbm %s2, %s217
          %s222 = sshll.u32 %s220, 4
          %s223 = int_to_ptr.hbm [resolvable:$true] %s222
          %s224 = sshll.u32 [#allocation7], 4
          %s225 = int_to_ptr.vmem [resolvable:$true] %s224
          %227 = dma.hbm_to_vmem [thread:$0]  %s223, 32, %s225, [#allocation6]
        $region20: #{mlp_forward.1} parent=11 // pred_fallthru
          _
        // Predicated region
        $region21: #{mlp_forward.1} parent=11 // pred_check
          %p228 = pneg %p135
        $region22: #{mlp_forward.1} parent=11 // pred_check_branch
          %230 = sbr.rel (%p228) target = $region24
        $region23: #{mlp_forward.1} parent=11 // pred_region
          %s231 = smul.u32 32, %s29
          %233 = vsyncadd [#allocation9], 0
          %s234 = smul.addr %s231, 2
          %s235 = smul.addr %s234, 4
          %s236 = scalar_lea.hbm %s3, %s235
          %s237 = sshll.u32 %s236, 4
          %s238 = int_to_ptr.hbm [resolvable:$true] %s237
          %s239 = sshll.u32 [#allocation8], 4
          %s240 = int_to_ptr.vmem [resolvable:$true] %s239
          %245 = dma.hbm_to_vmem [thread:$0]  %s238, 4096, %s240, [#allocation9], 128, 128, 8
        $region24: #{mlp_forward.1} parent=11 // pred_fallthru
          _
        // Predicated region
        $region25: #{mlp_forward.1} parent=11 // pred_check
          %p246 = pneg %p156
        $region26: #{mlp_forward.1} parent=11 // pred_check_branch
          %248 = sbr.rel (%p246) target = $region28
        $region27: #{mlp_forward.1} parent=11 // pred_region
          _
        $region28: #{mlp_forward.1} parent=11 // pred_fallthru
          _
      $region12: #{mlp_forward.1} parent=5 // pred_fallthru
        _
      %p249 = scmp.lt.s32.totalorder %s19, 2
      // Predicated region
      $region29: #{mlp_forward.1} parent=5 // pred_check
        %p250 = pneg %p249
      $region30: #{mlp_forward.1} parent=5 // pred_check_branch
        %252 = sbr.rel (%p250) target = $region32
      $region31: #{mlp_forward.1} parent=5 // pred_region
        // Predicated region
        $region33: #{mlp_forward.1} parent=31 // pred_check
          %p253 = pneg %p51
        $region34: #{mlp_forward.1} parent=31 // pred_check_branch
          %255 = sbr.rel (%p253) target = $region36
        $region35: #{mlp_forward.1} parent=31 // pred_region
          %s256 = sand.u32 %s41, 1
          %s257 = scalar_lea.sflag [#allocation3], %s256
          %s258 = sand.u32 %s41, 1
          %s259 = smul.addr %s258, 512
          %s260 = scalar_lea.vmem [#allocation2], %s259
          %s261 = smul.u32 64, %s26
          %263 = vsyncadd %s257, 0
          %s264 = smul.addr %s261, 8
          %s265 = scalar_lea.hbm %s0, %s264
          %s266 = sshll.u32 %s265, 4
          %s267 = int_to_ptr.hbm [resolvable:$true] %s266
          %s268 = sshll.u32 %s260, 4
          %s269 = int_to_ptr.vmem [resolvable:$true] %s268
          %274 = dma.hbm_to_vmem [thread:$0]  %s267, 8192, %s269, %s257, 128, 128, 8
        $region36: #{mlp_forward.1} parent=31 // pred_fallthru
          _
      $region32: #{mlp_forward.1} parent=5 // pred_fallthru
        _
      %p275 = scmp.le.s32.totalorder 1, %s19
      %p276 = scmp.lt.s32.totalorder %s19, 3
      %p277 = pnand %p275, %p276
      %p278 = pneg %p277
      // Predicated region
      $region37: #{mlp_forward.1} parent=5 // pred_check
        _
      $region38: #{mlp_forward.1} parent=5 // pred_check_branch
        %280 = sbr.rel (%p277) target = $region40
      $region39: #{mlp_forward.1} parent=5 // pred_region
        %s281 = ssub.s32 %s19, 1
        %s282 = sand.u32 %s44, 1
        %s283 = scalar_lea.sflag [#allocation3], %s282
        %s284 = sand.u32 %s44, 1
        %s285 = smul.addr %s284, 512
        %s286 = scalar_lea.vmem [#allocation2], %s285
        // Predicated region
        $region41: #{mlp_forward.1} parent=39 // pred_check
          %p287 = pneg %p57
        $region42: #{mlp_forward.1} parent=39 // pred_check_branch
          %289 = sbr.rel (%p287) target = $region44
        $region43: #{mlp_forward.1} parent=39 // pred_region
          %291 = dma.done %s283, 8192
        $region44: #{mlp_forward.1} parent=39 // pred_fallthru
          _
        // Predicated region
        $region45: #{mlp_forward.1} parent=39 // pred_check
          %p292 = pneg %p83
        $region46: #{mlp_forward.1} parent=39 // pred_check_branch
          %294 = sbr.rel (%p292) target = $region48
        $region47: #{mlp_forward.1} parent=39 // pred_region
          %296 = dma.done [#allocation6], 2048
        $region48: #{mlp_forward.1} parent=39 // pred_fallthru
          _
        // Predicated region
        $region49: #{mlp_forward.1} parent=39 // pred_check
          %p297 = pneg %p109
        $region50: #{mlp_forward.1} parent=39 // pred_check_branch
          %299 = sbr.rel (%p297) target = $region52
        $region51: #{mlp_forward.1} parent=39 // pred_region
          %301 = dma.done [#allocation6], 32
        $region52: #{mlp_forward.1} parent=39 // pred_fallthru
          _
        // Predicated region
        $region53: #{mlp_forward.1} parent=39 // pred_check
          %p302 = pneg %p135
        $region54: #{mlp_forward.1} parent=39 // pred_check_branch
          %304 = sbr.rel (%p302) target = $region56
        $region55: #{mlp_forward.1} parent=39 // pred_region
          %306 = dma.done [#allocation9], 4096
        $region56: #{mlp_forward.1} parent=39 // pred_fallthru
          _
        %s307 = sand.u32 %s44, 1
        %s308 = scalar_lea.sflag [#allocation3], %s307
        %s309 = sand.u32 %s44, 1
        %s310 = smul.addr %s309, 512
        %s311 = scalar_lea.vmem [#allocation2], %s310
        %p312 = pneg %p57
        %p313 = pneg %p54
        %p314 = pneg %p83
        %p315 = pneg %p80
        %p316 = pneg %p109
        %p317 = pneg %p106
        %p318 = pneg %p135
        %p319 = pneg %p132
        %p320 = pneg %p156
        %p321 = pneg %p153
        %p322 = pneg %p182
        %p323 = pneg %p179
        %s324 = sand.u32 %s169, 1
        %s325 = scalar_lea.sflag [#allocation4], %s324
        %s326 = sand.u32 %s169, 1
        %s327 = smul.addr %s326, 1024
        %s328 = scalar_lea.vmem [#allocation10], %s327
        %s329 = smul.u32 64, %s28
        %s330 = smul.u32 2, %s29
        %s331 = smul.u32 2, %s29
        %s332 = smul.u32 32, %s29
        %s333 = smul.u32 64, %s28
        %p334 = scmp.eq.s32.totalorder %s29, 0
        // Predicated region
        $region57: #{mlp_forward.1} parent=39 // pred_check
          %p335 = pneg %p334
        $region58: #{mlp_forward.1} parent=39 // pred_check_branch
          %337 = sbr.rel (%p335) target = $region60
        $region59: #{mlp_forward.1} parent=39 // pred_region
          %338 = vst [vmem:[%s328] sm:$0xff] 0.0
          %339 = vst [vmem:[%s328 + $0x8] sm:$0xff] 0.0
          %340 = vst [vmem:[%s328 + $0x10] sm:$0xff] 0.0
          %341 = vst [vmem:[%s328 + $0x18] sm:$0xff] 0.0
          %342 = vst [vmem:[%s328 + $0x20] sm:$0xff] 0.0
          %343 = vst [vmem:[%s328 + $0x28] sm:$0xff] 0.0
          %344 = vst [vmem:[%s328 + $0x30] sm:$0xff] 0.0
          %345 = vst [vmem:[%s328 + $0x38] sm:$0xff] 0.0
          %346 = vst [vmem:[%s328 + $0x40] sm:$0xff] 0.0
          %347 = vst [vmem:[%s328 + $0x48] sm:$0xff] 0.0
          %348 = vst [vmem:[%s328 + $0x50] sm:$0xff] 0.0
          %349 = vst [vmem:[%s328 + $0x58] sm:$0xff] 0.0
          %350 = vst [vmem:[%s328 + $0x60] sm:$0xff] 0.0
          %351 = vst [vmem:[%s328 + $0x68] sm:$0xff] 0.0
          %352 = vst [vmem:[%s328 + $0x70] sm:$0xff] 0.0
          %353 = vst [vmem:[%s328 + $0x78] sm:$0xff] 0.0
          %354 = vst [vmem:[%s328 + $0x80] sm:$0xff] 0.0
          %355 = vst [vmem:[%s328 + $0x88] sm:$0xff] 0.0
          %356 = vst [vmem:[%s328 + $0x90] sm:$0xff] 0.0
          %357 = vst [vmem:[%s328 + $0x98] sm:$0xff] 0.0
          %358 = vst [vmem:[%s328 + $0xa0] sm:$0xff] 0.0
          %359 = vst [vmem:[%s328 + $0xa8] sm:$0xff] 0.0
          %360 = vst [vmem:[%s328 + $0xb0] sm:$0xff] 0.0
          %361 = vst [vmem:[%s328 + $0xb8] sm:$0xff] 0.0
          %362 = vst [vmem:[%s328 + $0xc0] sm:$0xff] 0.0
          %363 = vst [vmem:[%s328 + $0xc8] sm:$0xff] 0.0
          %364 = vst [vmem:[%s328 + $0xd0] sm:$0xff] 0.0
          %365 = vst [vmem:[%s328 + $0xd8] sm:$0xff] 0.0
          %366 = vst [vmem:[%s328 + $0xe0] sm:$0xff] 0.0
          %367 = vst [vmem:[%s328 + $0xe8] sm:$0xff] 0.0
          %368 = vst [vmem:[%s328 + $0xf0] sm:$0xff] 0.0
          %369 = vst [vmem:[%s328 + $0xf8] sm:$0xff] 0.0
          %370 = vst [vmem:[%s328 + $0x100] sm:$0xff] 0.0
          %371 = vst [vmem:[%s328 + $0x108] sm:$0xff] 0.0
          %372 = vst [vmem:[%s328 + $0x110] sm:$0xff] 0.0
          %373 = vst [vmem:[%s328 + $0x118] sm:$0xff] 0.0
          %374 = vst [vmem:[%s328 + $0x120] sm:$0xff] 0.0
          %375 = vst [vmem:[%s328 + $0x128] sm:$0xff] 0.0
          %376 = vst [vmem:[%s328 + $0x130] sm:$0xff] 0.0
          %377 = vst [vmem:[%s328 + $0x138] sm:$0xff] 0.0
          %378 = vst [vmem:[%s328 + $0x140] sm:$0xff] 0.0
          %379 = vst [vmem:[%s328 + $0x148] sm:$0xff] 0.0
          %380 = vst [vmem:[%s328 + $0x150] sm:$0xff] 0.0
          %381 = vst [vmem:[%s328 + $0x158] sm:$0xff] 0.0
          %382 = vst [vmem:[%s328 + $0x160] sm:$0xff] 0.0
          %383 = vst [vmem:[%s328 + $0x168] sm:$0xff] 0.0
          %384 = vst [vmem:[%s328 + $0x170] sm:$0xff] 0.0
          %385 = vst [vmem:[%s328 + $0x178] sm:$0xff] 0.0
          %386 = vst [vmem:[%s328 + $0x180] sm:$0xff] 0.0
          %387 = vst [vmem:[%s328 + $0x188] sm:$0xff] 0.0
          %388 = vst [vmem:[%s328 + $0x190] sm:$0xff] 0.0
          %389 = vst [vmem:[%s328 + $0x198] sm:$0xff] 0.0
          %390 = vst [vmem:[%s328 + $0x1a0] sm:$0xff] 0.0
          %391 = vst [vmem:[%s328 + $0x1a8] sm:$0xff] 0.0
          %392 = vst [vmem:[%s328 + $0x1b0] sm:$0xff] 0.0
          %393 = vst [vmem:[%s328 + $0x1b8] sm:$0xff] 0.0
          %394 = vst [vmem:[%s328 + $0x1c0] sm:$0xff] 0.0
          %395 = vst [vmem:[%s328 + $0x1c8] sm:$0xff] 0.0
          %396 = vst [vmem:[%s328 + $0x1d0] sm:$0xff] 0.0
          %397 = vst [vmem:[%s328 + $0x1d8] sm:$0xff] 0.0
          %398 = vst [vmem:[%s328 + $0x1e0] sm:$0xff] 0.0
          %399 = vst [vmem:[%s328 + $0x1e8] sm:$0xff] 0.0
          %400 = vst [vmem:[%s328 + $0x1f0] sm:$0xff] 0.0
          %401 = vst [vmem:[%s328 + $0x1f8] sm:$0xff] 0.0
          %402 = vst [vmem:[%s328 + $0x200] sm:$0xff] 0.0
          %403 = vst [vmem:[%s328 + $0x208] sm:$0xff] 0.0
          %404 = vst [vmem:[%s328 + $0x210] sm:$0xff] 0.0
          %405 = vst [vmem:[%s328 + $0x218] sm:$0xff] 0.0
          %406 = vst [vmem:[%s328 + $0x220] sm:$0xff] 0.0
          %407 = vst [vmem:[%s328 + $0x228] sm:$0xff] 0.0
          %408 = vst [vmem:[%s328 + $0x230] sm:$0xff] 0.0
          %409 = vst [vmem:[%s328 + $0x238] sm:$0xff] 0.0
          %410 = vst [vmem:[%s328 + $0x240] sm:$0xff] 0.0
          %411 = vst [vmem:[%s328 + $0x248] sm:$0xff] 0.0
          %412 = vst [vmem:[%s328 + $0x250] sm:$0xff] 0.0
          %413 = vst [vmem:[%s328 + $0x258] sm:$0xff] 0.0
          %414 = vst [vmem:[%s328 + $0x260] sm:$0xff] 0.0
          %415 = vst [vmem:[%s328 + $0x268] sm:$0xff] 0.0
          %416 = vst [vmem:[%s328 + $0x270] sm:$0xff] 0.0
          %417 = vst [vmem:[%s328 + $0x278] sm:$0xff] 0.0
          %418 = vst [vmem:[%s328 + $0x280] sm:$0xff] 0.0
          %419 = vst [vmem:[%s328 + $0x288] sm:$0xff] 0.0
          %420 = vst [vmem:[%s328 + $0x290] sm:$0xff] 0.0
          %421 = vst [vmem:[%s328 + $0x298] sm:$0xff] 0.0
          %422 = vst [vmem:[%s328 + $0x2a0] sm:$0xff] 0.0
          %423 = vst [vmem:[%s328 + $0x2a8] sm:$0xff] 0.0
          %424 = vst [vmem:[%s328 + $0x2b0] sm:$0xff] 0.0
          %425 = vst [vmem:[%s328 + $0x2b8] sm:$0xff] 0.0
          %426 = vst [vmem:[%s328 + $0x2c0] sm:$0xff] 0.0
          %427 = vst [vmem:[%s328 + $0x2c8] sm:$0xff] 0.0
          %428 = vst [vmem:[%s328 + $0x2d0] sm:$0xff] 0.0
          %429 = vst [vmem:[%s328 + $0x2d8] sm:$0xff] 0.0
          %430 = vst [vmem:[%s328 + $0x2e0] sm:$0xff] 0.0
          %431 = vst [vmem:[%s328 + $0x2e8] sm:$0xff] 0.0
          %432 = vst [vmem:[%s328 + $0x2f0] sm:$0xff] 0.0
          %433 = vst [vmem:[%s328 + $0x2f8] sm:$0xff] 0.0
          %434 = vst [vmem:[%s328 + $0x300] sm:$0xff] 0.0
          %435 = vst [vmem:[%s328 + $0x308] sm:$0xff] 0.0
          %436 = vst [vmem:[%s328 + $0x310] sm:$0xff] 0.0
          %437 = vst [vmem:[%s328 + $0x318] sm:$0xff] 0.0
          %438 = vst [vmem:[%s328 + $0x320] sm:$0xff] 0.0
          %439 = vst [vmem:[%s328 + $0x328] sm:$0xff] 0.0
          %440 = vst [vmem:[%s328 + $0x330] sm:$0xff] 0.0
          %441 = vst [vmem:[%s328 + $0x338] sm:$0xff] 0.0
          %442 = vst [vmem:[%s328 + $0x340] sm:$0xff] 0.0
          %443 = vst [vmem:[%s328 + $0x348] sm:$0xff] 0.0
          %444 = vst [vmem:[%s328 + $0x350] sm:$0xff] 0.0
          %445 = vst [vmem:[%s328 + $0x358] sm:$0xff] 0.0
          %446 = vst [vmem:[%s328 + $0x360] sm:$0xff] 0.0
          %447 = vst [vmem:[%s328 + $0x368] sm:$0xff] 0.0
          %448 = vst [vmem:[%s328 + $0x370] sm:$0xff] 0.0
          %449 = vst [vmem:[%s328 + $0x378] sm:$0xff] 0.0
          %450 = vst [vmem:[%s328 + $0x380] sm:$0xff] 0.0
          %451 = vst [vmem:[%s328 + $0x388] sm:$0xff] 0.0
          %452 = vst [vmem:[%s328 + $0x390] sm:$0xff] 0.0
          %453 = vst [vmem:[%s328 + $0x398] sm:$0xff] 0.0
          %454 = vst [vmem:[%s328 + $0x3a0] sm:$0xff] 0.0
          %455 = vst [vmem:[%s328 + $0x3a8] sm:$0xff] 0.0
          %456 = vst [vmem:[%s328 + $0x3b0] sm:$0xff] 0.0
          %457 = vst [vmem:[%s328 + $0x3b8] sm:$0xff] 0.0
          %458 = vst [vmem:[%s328 + $0x3c0] sm:$0xff] 0.0
          %459 = vst [vmem:[%s328 + $0x3c8] sm:$0xff] 0.0
          %460 = vst [vmem:[%s328 + $0x3d0] sm:$0xff] 0.0
          %461 = vst [vmem:[%s328 + $0x3d8] sm:$0xff] 0.0
          %462 = vst [vmem:[%s328 + $0x3e0] sm:$0xff] 0.0
          %463 = vst [vmem:[%s328 + $0x3e8] sm:$0xff] 0.0
          %464 = vst [vmem:[%s328 + $0x3f0] sm:$0xff] 0.0
          %465 = vst [vmem:[%s328 + $0x3f8] sm:$0xff] 0.0
        $region60: #{mlp_forward.1} parent=39 // pred_fallthru
          _
        %v466 = vld [vmem:[%s286] sm:$0xff]
        %v467 = vld [vmem:[%s286 + $0x8] sm:$0xff]
        %v468 = vld [vmem:[%s286 + $0x10] sm:$0xff]
        %v469 = vld [vmem:[%s286 + $0x18] sm:$0xff]
        %v470 = vld [vmem:[%s286 + $0x20] sm:$0xff]
        %v471 = vld [vmem:[%s286 + $0x28] sm:$0xff]
        %v472 = vld [vmem:[%s286 + $0x30] sm:$0xff]
        %v473 = vld [vmem:[%s286 + $0x38] sm:$0xff]
        %v474 = vld [vmem:[%s286 + $0x40] sm:$0xff]
        %v475 = vld [vmem:[%s286 + $0x48] sm:$0xff]
        %v476 = vld [vmem:[%s286 + $0x50] sm:$0xff]
        %v477 = vld [vmem:[%s286 + $0x58] sm:$0xff]
        %v478 = vld [vmem:[%s286 + $0x60] sm:$0xff]
        %v479 = vld [vmem:[%s286 + $0x68] sm:$0xff]
        %v480 = vld [vmem:[%s286 + $0x70] sm:$0xff]
        %v481 = vld [vmem:[%s286 + $0x78] sm:$0xff]
        %v482 = vld [vmem:[%s286 + $0x80] sm:$0xff]
        %v483 = vld [vmem:[%s286 + $0x88] sm:$0xff]
        %v484 = vld [vmem:[%s286 + $0x90] sm:$0xff]
        %v485 = vld [vmem:[%s286 + $0x98] sm:$0xff]
        %v486 = vld [vmem:[%s286 + $0xa0] sm:$0xff]
        %v487 = vld [vmem:[%s286 + $0xa8] sm:$0xff]
        %v488 = vld [vmem:[%s286 + $0xb0] sm:$0xff]
        %v489 = vld [vmem:[%s286 + $0xb8] sm:$0xff]
        %v490 = vld [vmem:[%s286 + $0xc0] sm:$0xff]
        %v491 = vld [vmem:[%s286 + $0xc8] sm:$0xff]
        %v492 = vld [vmem:[%s286 + $0xd0] sm:$0xff]
        %v493 = vld [vmem:[%s286 + $0xd8] sm:$0xff]
        %v494 = vld [vmem:[%s286 + $0xe0] sm:$0xff]
        %v495 = vld [vmem:[%s286 + $0xe8] sm:$0xff]
        %v496 = vld [vmem:[%s286 + $0xf0] sm:$0xff]
        %v497 = vld [vmem:[%s286 + $0xf8] sm:$0xff]
        %v498 = vld [vmem:[%s286 + $0x100] sm:$0xff]
        %v499 = vld [vmem:[%s286 + $0x108] sm:$0xff]
        %v500 = vld [vmem:[%s286 + $0x110] sm:$0xff]
        %v501 = vld [vmem:[%s286 + $0x118] sm:$0xff]
        %v502 = vld [vmem:[%s286 + $0x120] sm:$0xff]
        %v503 = vld [vmem:[%s286 + $0x128] sm:$0xff]
        %v504 = vld [vmem:[%s286 + $0x130] sm:$0xff]
        %v505 = vld [vmem:[%s286 + $0x138] sm:$0xff]
        %v506 = vld [vmem:[%s286 + $0x140] sm:$0xff]
        %v507 = vld [vmem:[%s286 + $0x148] sm:$0xff]
        %v508 = vld [vmem:[%s286 + $0x150] sm:$0xff]
        %v509 = vld [vmem:[%s286 + $0x158] sm:$0xff]
        %v510 = vld [vmem:[%s286 + $0x160] sm:$0xff]
        %v511 = vld [vmem:[%s286 + $0x168] sm:$0xff]
        %v512 = vld [vmem:[%s286 + $0x170] sm:$0xff]
        %v513 = vld [vmem:[%s286 + $0x178] sm:$0xff]
        %v514 = vld [vmem:[%s286 + $0x180] sm:$0xff]
        %v515 = vld [vmem:[%s286 + $0x188] sm:$0xff]
        %v516 = vld [vmem:[%s286 + $0x190] sm:$0xff]
        %v517 = vld [vmem:[%s286 + $0x198] sm:$0xff]
        %v518 = vld [vmem:[%s286 + $0x1a0] sm:$0xff]
        %v519 = vld [vmem:[%s286 + $0x1a8] sm:$0xff]
        %v520 = vld [vmem:[%s286 + $0x1b0] sm:$0xff]
        %v521 = vld [vmem:[%s286 + $0x1b8] sm:$0xff]
        %v522 = vld [vmem:[%s286 + $0x1c0] sm:$0xff]
        %v523 = vld [vmem:[%s286 + $0x1c8] sm:$0xff]
        %v524 = vld [vmem:[%s286 + $0x1d0] sm:$0xff]
        %v525 = vld [vmem:[%s286 + $0x1d8] sm:$0xff]
        %v526 = vld [vmem:[%s286 + $0x1e0] sm:$0xff]
        %v527 = vld [vmem:[%s286 + $0x1e8] sm:$0xff]
        %v528 = vld [vmem:[%s286 + $0x1f0] sm:$0xff]
        %v529 = vld [vmem:[%s286 + $0x1f8] sm:$0xff]
        %v530 = vpack.c.bf16 %v467, %v466
        %v531 = vpack.c.bf16 %v469, %v468
        %v532 = vpack.c.bf16 %v471, %v470
        %v533 = vpack.c.bf16 %v473, %v472
        %v534 = vpack.c.bf16 %v475, %v474
        %v535 = vpack.c.bf16 %v477, %v476
        %v536 = vpack.c.bf16 %v479, %v478
        %v537 = vpack.c.bf16 %v481, %v480
        %v538 = vpack.c.bf16 %v483, %v482
        %v539 = vpack.c.bf16 %v485, %v484
        %v540 = vpack.c.bf16 %v487, %v486
        %v541 = vpack.c.bf16 %v489, %v488
        %v542 = vpack.c.bf16 %v491, %v490
        %v543 = vpack.c.bf16 %v493, %v492
        %v544 = vpack.c.bf16 %v495, %v494
        %v545 = vpack.c.bf16 %v497, %v496
        %v546 = vpack.c.bf16 %v499, %v498
        %v547 = vpack.c.bf16 %v501, %v500
        %v548 = vpack.c.bf16 %v503, %v502
        %v549 = vpack.c.bf16 %v505, %v504
        %v550 = vpack.c.bf16 %v507, %v506
        %v551 = vpack.c.bf16 %v509, %v508
        %v552 = vpack.c.bf16 %v511, %v510
        %v553 = vpack.c.bf16 %v513, %v512
        %v554 = vpack.c.bf16 %v515, %v514
        %v555 = vpack.c.bf16 %v517, %v516
        %v556 = vpack.c.bf16 %v519, %v518
        %v557 = vpack.c.bf16 %v521, %v520
        %v558 = vpack.c.bf16 %v523, %v522
        %v559 = vpack.c.bf16 %v525, %v524
        %v560 = vpack.c.bf16 %v527, %v526
        %v561 = vpack.c.bf16 %v529, %v528
        %v562 = vld [vmem:[#allocation5] sm:$0xff]
        %v563 = vld [vmem:[#allocation5 + $0x8] sm:$0xff]
        %v564 = vld [vmem:[#allocation5 + $0x10] sm:$0xff]
        %v565 = vld [vmem:[#allocation5 + $0x18] sm:$0xff]
        %v566 = vld [vmem:[#allocation5 + $0x20] sm:$0xff]
        %v567 = vld [vmem:[#allocation5 + $0x28] sm:$0xff]
        %v568 = vld [vmem:[#allocation5 + $0x30] sm:$0xff]
        %v569 = vld [vmem:[#allocation5 + $0x38] sm:$0xff]
        %v570 = vld [vmem:[#allocation5 + $0x40] sm:$0xff]
        %v571 = vld [vmem:[#allocation5 + $0x48] sm:$0xff]
        %v572 = vld [vmem:[#allocation5 + $0x50] sm:$0xff]
        %v573 = vld [vmem:[#allocation5 + $0x58] sm:$0xff]
        %v574 = vld [vmem:[#allocation5 + $0x60] sm:$0xff]
        %v575 = vld [vmem:[#allocation5 + $0x68] sm:$0xff]
        %v576 = vld [vmem:[#allocation5 + $0x70] sm:$0xff]
        %v577 = vld [vmem:[#allocation5 + $0x78] sm:$0xff]
        %v578 = vld [vmem:[#allocation7] sm:$0x3]
        %v580 = vperm.slane %v578, 0
        %v581 = vperm.slane %v578, 1
        %v600 = vunpack.c.l.b16 %v562
        %v601 = vunpack.c.h.b16 %v562
        %v602 = vunpack.c.l.b16 %v563
        %v603 = vunpack.c.h.b16 %v563
        %v604 = vunpack.c.l.b16 %v564
        %v605 = vunpack.c.h.b16 %v564
        %v606 = vunpack.c.l.b16 %v565
        %v607 = vunpack.c.h.b16 %v565
        %v608 = vunpack.c.l.b16 %v566
        %v609 = vunpack.c.h.b16 %v566
        %v610 = vunpack.c.l.b16 %v567
        %v611 = vunpack.c.h.b16 %v567
        %v612 = vunpack.c.l.b16 %v568
        %v613 = vunpack.c.h.b16 %v568
        %v614 = vunpack.c.l.b16 %v569
        %v615 = vunpack.c.h.b16 %v569
        %v616 = vunpack.c.l.b16 %v570
        %v617 = vunpack.c.h.b16 %v570
        %v618 = vunpack.c.l.b16 %v571
        %v619 = vunpack.c.h.b16 %v571
        %v620 = vunpack.c.l.b16 %v572
        %v621 = vunpack.c.h.b16 %v572
        %v622 = vunpack.c.l.b16 %v573
        %v623 = vunpack.c.h.b16 %v573
        %v624 = vunpack.c.l.b16 %v574
        %v625 = vunpack.c.h.b16 %v574
        %v626 = vunpack.c.l.b16 %v575
        %v627 = vunpack.c.h.b16 %v575
        %v628 = vunpack.c.l.b16 %v576
        %v629 = vunpack.c.h.b16 %v576
        %v630 = vunpack.c.l.b16 %v577
        %v631 = vunpack.c.h.b16 %v577
        %v632 = vpack.c.b16 %v602, %v600
        %v633 = vpack.c.b16 %v603, %v601
        %v634 = vpack.c.b16 %v606, %v604
        %v635 = vpack.c.b16 %v607, %v605
        %v636 = vpack.c.b16 %v610, %v608
        %v637 = vpack.c.b16 %v611, %v609
        %v638 = vpack.c.b16 %v614, %v612
        %v639 = vpack.c.b16 %v615, %v613
        %v640 = vpack.c.b16 %v618, %v616
        %v641 = vpack.c.b16 %v619, %v617
        %v642 = vpack.c.b16 %v622, %v620
        %v643 = vpack.c.b16 %v623, %v621
        %v644 = vpack.c.b16 %v626, %v624
        %v645 = vpack.c.b16 %v627, %v625
        %v646 = vpack.c.b16 %v630, %v628
        %v647 = vpack.c.b16 %v631, %v629
        %664 = vmatpush.bf16.msra.mxu0 %v646
        %665 = vmatpush.bf16.msra.mxu0 %v644
        %666 = vmatpush.bf16.msra.mxu0 %v642
        %667 = vmatpush.bf16.msra.mxu0 %v640
        %668 = vmatpush.bf16.msra.mxu0 %v638
        %669 = vmatpush.bf16.msra.mxu0 %v636
        %670 = vmatpush.bf16.msra.mxu0 %v634
        %671 = vmatpush.bf16.msra.mxu0 %v632
        %672 = vmatmul.bf16.gmra.mxu0 %v530
        %v673 = vpop.f32.mrf.mxu0
        %v674 = vadd.f32 %v580, %v673
        %v675 = vpop.f32.mrf.mxu0
        %v676 = vadd.f32 %v580, %v675
        %677 = vmatmul.bf16.gmra.mxu0 %v531
        %v678 = vpop.f32.mrf.mxu0
        %v679 = vadd.f32 %v580, %v678
        %v680 = vpop.f32.mrf.mxu0
        %v681 = vadd.f32 %v580, %v680
        %682 = vmatmul.bf16.gmra.mxu0 %v532
        %v683 = vpop.f32.mrf.mxu0
        %v684 = vadd.f32 %v580, %v683
        %v685 = vpop.f32.mrf.mxu0
        %v686 = vadd.f32 %v580, %v685
        %687 = vmatmul.bf16.gmra.mxu0 %v533
        %v688 = vpop.f32.mrf.mxu0
        %v689 = vadd.f32 %v580, %v688
        %v690 = vpop.f32.mrf.mxu0
        %v691 = vadd.f32 %v580, %v690
        %692 = vmatmul.bf16.gmra.mxu0 %v534
        %v693 = vpop.f32.mrf.mxu0
        %v694 = vadd.f32 %v580, %v693
        %v695 = vpop.f32.mrf.mxu0
        %v696 = vadd.f32 %v580, %v695
        %697 = vmatmul.bf16.gmra.mxu0 %v535
        %v698 = vpop.f32.mrf.mxu0
        %v699 = vadd.f32 %v580, %v698
        %v700 = vpop.f32.mrf.mxu0
        %v701 = vadd.f32 %v580, %v700
        %702 = vmatmul.bf16.gmra.mxu0 %v536
        %v703 = vpop.f32.mrf.mxu0
        %v704 = vadd.f32 %v580, %v703
        %v705 = vpop.f32.mrf.mxu0
        %v706 = vadd.f32 %v580, %v705
        %707 = vmatmul.bf16.gmra.mxu0 %v537
        %v708 = vpop.f32.mrf.mxu0
        %v709 = vadd.f32 %v580, %v708
        %v710 = vpop.f32.mrf.mxu0
        %v711 = vadd.f32 %v580, %v710
        %712 = vmatmul.bf16.gmra.mxu0 %v538
        %v713 = vpop.f32.mrf.mxu0
        %v714 = vadd.f32 %v580, %v713
        %v715 = vpop.f32.mrf.mxu0
        %v716 = vadd.f32 %v580, %v715
        %717 = vmatmul.bf16.gmra.mxu0 %v539
        %v718 = vpop.f32.mrf.mxu0
        %v719 = vadd.f32 %v580, %v718
        %v720 = vpop.f32.mrf.mxu0
        %v721 = vadd.f32 %v580, %v720
        %722 = vmatmul.bf16.gmra.mxu0 %v540
        %v723 = vpop.f32.mrf.mxu0
        %v724 = vadd.f32 %v580, %v723
        %v725 = vpop.f32.mrf.mxu0
        %v726 = vadd.f32 %v580, %v725
        %727 = vmatmul.bf16.gmra.mxu0 %v541
        %v728 = vpop.f32.mrf.mxu0
        %v729 = vadd.f32 %v580, %v728
        %v730 = vpop.f32.mrf.mxu0
        %v731 = vadd.f32 %v580, %v730
        %732 = vmatmul.bf16.gmra.mxu0 %v542
        %v733 = vpop.f32.mrf.mxu0
        %v734 = vadd.f32 %v580, %v733
        %v735 = vpop.f32.mrf.mxu0
        %v736 = vadd.f32 %v580, %v735
        %737 = vmatmul.bf16.gmra.mxu0 %v543
        %v738 = vpop.f32.mrf.mxu0
        %v739 = vadd.f32 %v580, %v738
        %v740 = vpop.f32.mrf.mxu0
        %v741 = vadd.f32 %v580, %v740
        %742 = vmatmul.bf16.gmra.mxu0 %v544
        %v743 = vpop.f32.mrf.mxu0
        %v744 = vadd.f32 %v580, %v743
        %v745 = vpop.f32.mrf.mxu0
        %v746 = vadd.f32 %v580, %v745
        %747 = vmatmul.bf16.gmra.mxu0 %v545
        %v748 = vpop.f32.mrf.mxu0
        %v749 = vadd.f32 %v580, %v748
        %v750 = vpop.f32.mrf.mxu0
        %v751 = vadd.f32 %v580, %v750
        %752 = vmatmul.bf16.gmra.mxu0 %v546
        %v753 = vpop.f32.mrf.mxu0
        %v754 = vadd.f32 %v580, %v753
        %v755 = vpop.f32.mrf.mxu0
        %v756 = vadd.f32 %v580, %v755
        %757 = vmatmul.bf16.gmra.mxu0 %v547
        %v758 = vpop.f32.mrf.mxu0
        %v759 = vadd.f32 %v580, %v758
        %v760 = vpop.f32.mrf.mxu0
        %v761 = vadd.f32 %v580, %v760
        %762 = vmatmul.bf16.gmra.mxu0 %v548
        %v763 = vpop.f32.mrf.mxu0
        %v764 = vadd.f32 %v580, %v763
        %v765 = vpop.f32.mrf.mxu0
        %v766 = vadd.f32 %v580, %v765
        %767 = vmatmul.bf16.gmra.mxu0 %v549
        %v768 = vpop.f32.mrf.mxu0
        %v769 = vadd.f32 %v580, %v768
        %v770 = vpop.f32.mrf.mxu0
        %v771 = vadd.f32 %v580, %v770
        %772 = vmatmul.bf16.gmra.mxu0 %v550
        %v773 = vpop.f32.mrf.mxu0
        %v774 = vadd.f32 %v580, %v773
        %v775 = vpop.f32.mrf.mxu0
        %v776 = vadd.f32 %v580, %v775
        %777 = vmatmul.bf16.gmra.mxu0 %v551
        %v778 = vpop.f32.mrf.mxu0
        %v779 = vadd.f32 %v580, %v778
        %v780 = vpop.f32.mrf.mxu0
        %v781 = vadd.f32 %v580, %v780
        %782 = vmatmul.bf16.gmra.mxu0 %v552
        %v783 = vpop.f32.mrf.mxu0
        %v784 = vadd.f32 %v580, %v783
        %v785 = vpop.f32.mrf.mxu0
        %v786 = vadd.f32 %v580, %v785
        %787 = vmatmul.bf16.gmra.mxu0 %v553
        %v788 = vpop.f32.mrf.mxu0
        %v789 = vadd.f32 %v580, %v788
        %v790 = vpop.f32.mrf.mxu0
        %v791 = vadd.f32 %v580, %v790
        %792 = vmatmul.bf16.gmra.mxu0 %v554
        %v793 = vpop.f32.mrf.mxu0
        %v794 = vadd.f32 %v580, %v793
        %v795 = vpop.f32.mrf.mxu0
        %v796 = vadd.f32 %v580, %v795
        %797 = vmatmul.bf16.gmra.mxu0 %v555
        %v798 = vpop.f32.mrf.mxu0
        %v799 = vadd.f32 %v580, %v798
        %v800 = vpop.f32.mrf.mxu0
        %v801 = vadd.f32 %v580, %v800
        %802 = vmatmul.bf16.gmra.mxu0 %v556
        %v803 = vpop.f32.mrf.mxu0
        %v804 = vadd.f32 %v580, %v803
        %v805 = vpop.f32.mrf.mxu0
        %v806 = vadd.f32 %v580, %v805
        %807 = vmatmul.bf16.gmra.mxu0 %v557
        %v808 = vpop.f32.mrf.mxu0
        %v809 = vadd.f32 %v580, %v808
        %v810 = vpop.f32.mrf.mxu0
        %v811 = vadd.f32 %v580, %v810
        %812 = vmatmul.bf16.gmra.mxu0 %v558
        %v813 = vpop.f32.mrf.mxu0
        %v814 = vadd.f32 %v580, %v813
        %v815 = vpop.f32.mrf.mxu0
        %v816 = vadd.f32 %v580, %v815
        %817 = vmatmul.bf16.gmra.mxu0 %v559
        %v818 = vpop.f32.mrf.mxu0
        %v819 = vadd.f32 %v580, %v818
        %v820 = vpop.f32.mrf.mxu0
        %v821 = vadd.f32 %v580, %v820
        %822 = vmatmul.bf16.gmra.mxu0 %v560
        %v823 = vpop.f32.mrf.mxu0
        %v824 = vadd.f32 %v580, %v823
        %v825 = vpop.f32.mrf.mxu0
        %v826 = vadd.f32 %v580, %v825
        %827 = vmatmul.bf16.gmra.mxu0 %v561
        %v828 = vpop.f32.mrf.mxu0
        %v829 = vadd.f32 %v580, %v828
        %v830 = vpop.f32.mrf.mxu0
        %v831 = vadd.f32 %v580, %v830
        %832 = vdwg.mxu0
        %833 = vmatpush.bf16.msra.mxu0 %v647
        %834 = vmatpush.bf16.msra.mxu0 %v645
        %835 = vmatpush.bf16.msra.mxu0 %v643
        %836 = vmatpush.bf16.msra.mxu0 %v641
        %837 = vmatpush.bf16.msra.mxu0 %v639
        %838 = vmatpush.bf16.msra.mxu0 %v637
        %839 = vmatpush.bf16.msra.mxu0 %v635
        %840 = vmatpush.bf16.msra.mxu0 %v633
        %841 = vmatmul.bf16.gmra.mxu0 %v530
        %v842 = vpop.f32.mrf.mxu0
        %v843 = vadd.f32 %v581, %v842
        %v844 = vpop.f32.mrf.mxu0
        %v845 = vadd.f32 %v581, %v844
        %846 = vmatmul.bf16.gmra.mxu0 %v531
        %v847 = vpop.f32.mrf.mxu0
        %v848 = vadd.f32 %v581, %v847
        %v849 = vpop.f32.mrf.mxu0
        %v850 = vadd.f32 %v581, %v849
        %851 = vmatmul.bf16.gmra.mxu0 %v532
        %v852 = vpop.f32.mrf.mxu0
        %v853 = vadd.f32 %v581, %v852
        %v854 = vpop.f32.mrf.mxu0
        %v855 = vadd.f32 %v581, %v854
        %856 = vmatmul.bf16.gmra.mxu0 %v533
        %v857 = vpop.f32.mrf.mxu0
        %v858 = vadd.f32 %v581, %v857
        %v859 = vpop.f32.mrf.mxu0
        %v860 = vadd.f32 %v581, %v859
        %861 = vmatmul.bf16.gmra.mxu0 %v534
        %v862 = vpop.f32.mrf.mxu0
        %v863 = vadd.f32 %v581, %v862
        %v864 = vpop.f32.mrf.mxu0
        %v865 = vadd.f32 %v581, %v864
        %866 = vmatmul.bf16.gmra.mxu0 %v535
        %v867 = vpop.f32.mrf.mxu0
        %v868 = vadd.f32 %v581, %v867
        %v869 = vpop.f32.mrf.mxu0
        %v870 = vadd.f32 %v581, %v869
        %871 = vmatmul.bf16.gmra.mxu0 %v536
        %v872 = vpop.f32.mrf.mxu0
        %v873 = vadd.f32 %v581, %v872
        %v874 = vpop.f32.mrf.mxu0
        %v875 = vadd.f32 %v581, %v874
        %876 = vmatmul.bf16.gmra.mxu0 %v537
        %v877 = vpop.f32.mrf.mxu0
        %v878 = vadd.f32 %v581, %v877
        %v879 = vpop.f32.mrf.mxu0
        %v880 = vadd.f32 %v581, %v879
        %881 = vmatmul.bf16.gmra.mxu0 %v538
        %v882 = vpop.f32.mrf.mxu0
        %v883 = vadd.f32 %v581, %v882
        %v884 = vpop.f32.mrf.mxu0
        %v885 = vadd.f32 %v581, %v884
        %886 = vmatmul.bf16.gmra.mxu0 %v539
        %v887 = vpop.f32.mrf.mxu0
        %v888 = vadd.f32 %v581, %v887
        %v889 = vpop.f32.mrf.mxu0
        %v890 = vadd.f32 %v581, %v889
        %891 = vmatmul.bf16.gmra.mxu0 %v540
        %v892 = vpop.f32.mrf.mxu0
        %v893 = vadd.f32 %v581, %v892
        %v894 = vpop.f32.mrf.mxu0
        %v895 = vadd.f32 %v581, %v894
        %896 = vmatmul.bf16.gmra.mxu0 %v541
        %v897 = vpop.f32.mrf.mxu0
        %v898 = vadd.f32 %v581, %v897
        %v899 = vpop.f32.mrf.mxu0
        %v900 = vadd.f32 %v581, %v899
        %901 = vmatmul.bf16.gmra.mxu0 %v542
        %v902 = vpop.f32.mrf.mxu0
        %v903 = vadd.f32 %v581, %v902
        %v904 = vpop.f32.mrf.mxu0
        %v905 = vadd.f32 %v581, %v904
        %906 = vmatmul.bf16.gmra.mxu0 %v543
        %v907 = vpop.f32.mrf.mxu0
        %v908 = vadd.f32 %v581, %v907
        %v909 = vpop.f32.mrf.mxu0
        %v910 = vadd.f32 %v581, %v909
        %911 = vmatmul.bf16.gmra.mxu0 %v544
        %v912 = vpop.f32.mrf.mxu0
        %v913 = vadd.f32 %v581, %v912
        %v914 = vpop.f32.mrf.mxu0
        %v915 = vadd.f32 %v581, %v914
        %916 = vmatmul.bf16.gmra.mxu0 %v545
        %v917 = vpop.f32.mrf.mxu0
        %v918 = vadd.f32 %v581, %v917
        %v919 = vpop.f32.mrf.mxu0
        %v920 = vadd.f32 %v581, %v919
        %921 = vmatmul.bf16.gmra.mxu0 %v546
        %v922 = vpop.f32.mrf.mxu0
        %v923 = vadd.f32 %v581, %v922
        %v924 = vpop.f32.mrf.mxu0
        %v925 = vadd.f32 %v581, %v924
        %926 = vmatmul.bf16.gmra.mxu0 %v547
        %v927 = vpop.f32.mrf.mxu0
        %v928 = vadd.f32 %v581, %v927
        %v929 = vpop.f32.mrf.mxu0
        %v930 = vadd.f32 %v581, %v929
        %931 = vmatmul.bf16.gmra.mxu0 %v548
        %v932 = vpop.f32.mrf.mxu0
        %v933 = vadd.f32 %v581, %v932
        %v934 = vpop.f32.mrf.mxu0
        %v935 = vadd.f32 %v581, %v934
        %936 = vmatmul.bf16.gmra.mxu0 %v549
        %v937 = vpop.f32.mrf.mxu0
        %v938 = vadd.f32 %v581, %v937
        %v939 = vpop.f32.mrf.mxu0
        %v940 = vadd.f32 %v581, %v939
        %941 = vmatmul.bf16.gmra.mxu0 %v550
        %v942 = vpop.f32.mrf.mxu0
        %v943 = vadd.f32 %v581, %v942
        %v944 = vpop.f32.mrf.mxu0
        %v945 = vadd.f32 %v581, %v944
        %946 = vmatmul.bf16.gmra.mxu0 %v551
        %v947 = vpop.f32.mrf.mxu0
        %v948 = vadd.f32 %v581, %v947
        %v949 = vpop.f32.mrf.mxu0
        %v950 = vadd.f32 %v581, %v949
        %951 = vmatmul.bf16.gmra.mxu0 %v552
        %v952 = vpop.f32.mrf.mxu0
        %v953 = vadd.f32 %v581, %v952
        %v954 = vpop.f32.mrf.mxu0
        %v955 = vadd.f32 %v581, %v954
        %956 = vmatmul.bf16.gmra.mxu0 %v553
        %v957 = vpop.f32.mrf.mxu0
        %v958 = vadd.f32 %v581, %v957
        %v959 = vpop.f32.mrf.mxu0
        %v960 = vadd.f32 %v581, %v959
        %961 = vmatmul.bf16.gmra.mxu0 %v554
        %v962 = vpop.f32.mrf.mxu0
        %v963 = vadd.f32 %v581, %v962
        %v964 = vpop.f32.mrf.mxu0
        %v965 = vadd.f32 %v581, %v964
        %966 = vmatmul.bf16.gmra.mxu0 %v555
        %v967 = vpop.f32.mrf.mxu0
        %v968 = vadd.f32 %v581, %v967
        %v969 = vpop.f32.mrf.mxu0
        %v970 = vadd.f32 %v581, %v969
        %971 = vmatmul.bf16.gmra.mxu0 %v556
        %v972 = vpop.f32.mrf.mxu0
        %v973 = vadd.f32 %v581, %v972
        %v974 = vpop.f32.mrf.mxu0
        %v975 = vadd.f32 %v581, %v974
        %976 = vmatmul.bf16.gmra.mxu0 %v557
        %v977 = vpop.f32.mrf.mxu0
        %v978 = vadd.f32 %v581, %v977
        %v979 = vpop.f32.mrf.mxu0
        %v980 = vadd.f32 %v581, %v979
        %981 = vmatmul.bf16.gmra.mxu0 %v558
        %v982 = vpop.f32.mrf.mxu0
        %v983 = vadd.f32 %v581, %v982
        %v984 = vpop.f32.mrf.mxu0
        %v985 = vadd.f32 %v581, %v984
        %986 = vmatmul.bf16.gmra.mxu0 %v559
        %v987 = vpop.f32.mrf.mxu0
        %v988 = vadd.f32 %v581, %v987
        %v989 = vpop.f32.mrf.mxu0
        %v990 = vadd.f32 %v581, %v989
        %991 = vmatmul.bf16.gmra.mxu0 %v560
        %v992 = vpop.f32.mrf.mxu0
        %v993 = vadd.f32 %v581, %v992
        %v994 = vpop.f32.mrf.mxu0
        %v995 = vadd.f32 %v581, %v994
        %996 = vmatmul.bf16.gmra.mxu0 %v561
        %v997 = vpop.f32.mrf.mxu0
        %v998 = vadd.f32 %v581, %v997
        %v999 = vpop.f32.mrf.mxu0
        %v1000 = vadd.f32 %v581, %v999
        %1001 = vdwg.mxu0
        %v1002 = vmax.f32 %v674, 0.0
        %v1003 = vmax.f32 %v843, 0.0
        %v1004 = vmax.f32 %v676, 0.0
        %v1005 = vmax.f32 %v845, 0.0
        %v1006 = vmax.f32 %v679, 0.0
        %v1007 = vmax.f32 %v848, 0.0
        %v1008 = vmax.f32 %v681, 0.0
        %v1009 = vmax.f32 %v850, 0.0
        %v1010 = vmax.f32 %v684, 0.0
        %v1011 = vmax.f32 %v853, 0.0
        %v1012 = vmax.f32 %v686, 0.0
        %v1013 = vmax.f32 %v855, 0.0
        %v1014 = vmax.f32 %v689, 0.0
        %v1015 = vmax.f32 %v858, 0.0
        %v1016 = vmax.f32 %v691, 0.0
        %v1017 = vmax.f32 %v860, 0.0
        %v1018 = vmax.f32 %v694, 0.0
        %v1019 = vmax.f32 %v863, 0.0
        %v1020 = vmax.f32 %v696, 0.0
        %v1021 = vmax.f32 %v865, 0.0
        %v1022 = vmax.f32 %v699, 0.0
        %v1023 = vmax.f32 %v868, 0.0
        %v1024 = vmax.f32 %v701, 0.0
        %v1025 = vmax.f32 %v870, 0.0
        %v1026 = vmax.f32 %v704, 0.0
        %v1027 = vmax.f32 %v873, 0.0
        %v1028 = vmax.f32 %v706, 0.0
        %v1029 = vmax.f32 %v875, 0.0
        %v1030 = vmax.f32 %v709, 0.0
        %v1031 = vmax.f32 %v878, 0.0
        %v1032 = vmax.f32 %v711, 0.0
        %v1033 = vmax.f32 %v880, 0.0
        %v1034 = vmax.f32 %v714, 0.0
        %v1035 = vmax.f32 %v883, 0.0
        %v1036 = vmax.f32 %v716, 0.0
        %v1037 = vmax.f32 %v885, 0.0
        %v1038 = vmax.f32 %v719, 0.0
        %v1039 = vmax.f32 %v888, 0.0
        %v1040 = vmax.f32 %v721, 0.0
        %v1041 = vmax.f32 %v890, 0.0
        %v1042 = vmax.f32 %v724, 0.0
        %v1043 = vmax.f32 %v893, 0.0
        %v1044 = vmax.f32 %v726, 0.0
        %v1045 = vmax.f32 %v895, 0.0
        %v1046 = vmax.f32 %v729, 0.0
        %v1047 = vmax.f32 %v898, 0.0
        %v1048 = vmax.f32 %v731, 0.0
        %v1049 = vmax.f32 %v900, 0.0
        %v1050 = vmax.f32 %v734, 0.0
        %v1051 = vmax.f32 %v903, 0.0
        %v1052 = vmax.f32 %v736, 0.0
        %v1053 = vmax.f32 %v905, 0.0
        %v1054 = vmax.f32 %v739, 0.0
        %v1055 = vmax.f32 %v908, 0.0
        %v1056 = vmax.f32 %v741, 0.0
        %v1057 = vmax.f32 %v910, 0.0
        %v1058 = vmax.f32 %v744, 0.0
        %v1059 = vmax.f32 %v913, 0.0
        %v1060 = vmax.f32 %v746, 0.0
        %v1061 = vmax.f32 %v915, 0.0
        %v1062 = vmax.f32 %v749, 0.0
        %v1063 = vmax.f32 %v918, 0.0
        %v1064 = vmax.f32 %v751, 0.0
        %v1065 = vmax.f32 %v920, 0.0
        %v1066 = vmax.f32 %v754, 0.0
        %v1067 = vmax.f32 %v923, 0.0
        %v1068 = vmax.f32 %v756, 0.0
        %v1069 = vmax.f32 %v925, 0.0
        %v1070 = vmax.f32 %v759, 0.0
        %v1071 = vmax.f32 %v928, 0.0
        %v1072 = vmax.f32 %v761, 0.0
        %v1073 = vmax.f32 %v930, 0.0
        %v1074 = vmax.f32 %v764, 0.0
        %v1075 = vmax.f32 %v933, 0.0
        %v1076 = vmax.f32 %v766, 0.0
        %v1077 = vmax.f32 %v935, 0.0
        %v1078 = vmax.f32 %v769, 0.0
        %v1079 = vmax.f32 %v938, 0.0
        %v1080 = vmax.f32 %v771, 0.0
        %v1081 = vmax.f32 %v940, 0.0
        %v1082 = vmax.f32 %v774, 0.0
        %v1083 = vmax.f32 %v943, 0.0
        %v1084 = vmax.f32 %v776, 0.0
        %v1085 = vmax.f32 %v945, 0.0
        %v1086 = vmax.f32 %v779, 0.0
        %v1087 = vmax.f32 %v948, 0.0
        %v1088 = vmax.f32 %v781, 0.0
        %v1089 = vmax.f32 %v950, 0.0
        %v1090 = vmax.f32 %v784, 0.0
        %v1091 = vmax.f32 %v953, 0.0
        %v1092 = vmax.f32 %v786, 0.0
        %v1093 = vmax.f32 %v955, 0.0
        %v1094 = vmax.f32 %v789, 0.0
        %v1095 = vmax.f32 %v958, 0.0
        %v1096 = vmax.f32 %v791, 0.0
        %v1097 = vmax.f32 %v960, 0.0
        %v1098 = vmax.f32 %v794, 0.0
        %v1099 = vmax.f32 %v963, 0.0
        %v1100 = vmax.f32 %v796, 0.0
        %v1101 = vmax.f32 %v965, 0.0
        %v1102 = vmax.f32 %v799, 0.0
        %v1103 = vmax.f32 %v968, 0.0
        %v1104 = vmax.f32 %v801, 0.0
        %v1105 = vmax.f32 %v970, 0.0
        %v1106 = vmax.f32 %v804, 0.0
        %v1107 = vmax.f32 %v973, 0.0
        %v1108 = vmax.f32 %v806, 0.0
        %v1109 = vmax.f32 %v975, 0.0
        %v1110 = vmax.f32 %v809, 0.0
        %v1111 = vmax.f32 %v978, 0.0
        %v1112 = vmax.f32 %v811, 0.0
        %v1113 = vmax.f32 %v980, 0.0
        %v1114 = vmax.f32 %v814, 0.0
        %v1115 = vmax.f32 %v983, 0.0
        %v1116 = vmax.f32 %v816, 0.0
        %v1117 = vmax.f32 %v985, 0.0
        %v1118 = vmax.f32 %v819, 0.0
        %v1119 = vmax.f32 %v988, 0.0
        %v1120 = vmax.f32 %v821, 0.0
        %v1121 = vmax.f32 %v990, 0.0
        %v1122 = vmax.f32 %v824, 0.0
        %v1123 = vmax.f32 %v993, 0.0
        %v1124 = vmax.f32 %v826, 0.0
        %v1125 = vmax.f32 %v995, 0.0
        %v1126 = vmax.f32 %v829, 0.0
        %v1127 = vmax.f32 %v998, 0.0
        %v1128 = vmax.f32 %v831, 0.0
        %v1129 = vmax.f32 %v1000, 0.0
        %v1130 = vld [vmem:[%s328] sm:$0xff]
        %v1131 = vld [vmem:[%s328 + $0x8] sm:$0xff]
        %v1132 = vld [vmem:[%s328 + $0x10] sm:$0xff]
        %v1133 = vld [vmem:[%s328 + $0x18] sm:$0xff]
        %v1134 = vld [vmem:[%s328 + $0x20] sm:$0xff]
        %v1135 = vld [vmem:[%s328 + $0x28] sm:$0xff]
        %v1136 = vld [vmem:[%s328 + $0x30] sm:$0xff]
        %v1137 = vld [vmem:[%s328 + $0x38] sm:$0xff]
        %v1138 = vld [vmem:[%s328 + $0x40] sm:$0xff]
        %v1139 = vld [vmem:[%s328 + $0x48] sm:$0xff]
        %v1140 = vld [vmem:[%s328 + $0x50] sm:$0xff]
        %v1141 = vld [vmem:[%s328 + $0x58] sm:$0xff]
        %v1142 = vld [vmem:[%s328 + $0x60] sm:$0xff]
        %v1143 = vld [vmem:[%s328 + $0x68] sm:$0xff]
        %v1144 = vld [vmem:[%s328 + $0x70] sm:$0xff]
        %v1145 = vld [vmem:[%s328 + $0x78] sm:$0xff]
        %v1146 = vld [vmem:[%s328 + $0x80] sm:$0xff]
        %v1147 = vld [vmem:[%s328 + $0x88] sm:$0xff]
        %v1148 = vld [vmem:[%s328 + $0x90] sm:$0xff]
        %v1149 = vld [vmem:[%s328 + $0x98] sm:$0xff]
        %v1150 = vld [vmem:[%s328 + $0xa0] sm:$0xff]
        %v1151 = vld [vmem:[%s328 + $0xa8] sm:$0xff]
        %v1152 = vld [vmem:[%s328 + $0xb0] sm:$0xff]
        %v1153 = vld [vmem:[%s328 + $0xb8] sm:$0xff]
        %v1154 = vld [vmem:[%s328 + $0xc0] sm:$0xff]
        %v1155 = vld [vmem:[%s328 + $0xc8] sm:$0xff]
        %v1156 = vld [vmem:[%s328 + $0xd0] sm:$0xff]
        %v1157 = vld [vmem:[%s328 + $0xd8] sm:$0xff]
        %v1158 = vld [vmem:[%s328 + $0xe0] sm:$0xff]
        %v1159 = vld [vmem:[%s328 + $0xe8] sm:$0xff]
        %v1160 = vld [vmem:[%s328 + $0xf0] sm:$0xff]
        %v1161 = vld [vmem:[%s328 + $0xf8] sm:$0xff]
        %v1162 = vld [vmem:[%s328 + $0x100] sm:$0xff]
        %v1163 = vld [vmem:[%s328 + $0x108] sm:$0xff]
        %v1164 = vld [vmem:[%s328 + $0x110] sm:$0xff]
        %v1165 = vld [vmem:[%s328 + $0x118] sm:$0xff]
        %v1166 = vld [vmem:[%s328 + $0x120] sm:$0xff]
        %v1167 = vld [vmem:[%s328 + $0x128] sm:$0xff]
        %v1168 = vld [vmem:[%s328 + $0x130] sm:$0xff]
        %v1169 = vld [vmem:[%s328 + $0x138] sm:$0xff]
        %v1170 = vld [vmem:[%s328 + $0x140] sm:$0xff]
        %v1171 = vld [vmem:[%s328 + $0x148] sm:$0xff]
        %v1172 = vld [vmem:[%s328 + $0x150] sm:$0xff]
        %v1173 = vld [vmem:[%s328 + $0x158] sm:$0xff]
        %v1174 = vld [vmem:[%s328 + $0x160] sm:$0xff]
        %v1175 = vld [vmem:[%s328 + $0x168] sm:$0xff]
        %v1176 = vld [vmem:[%s328 + $0x170] sm:$0xff]
        %v1177 = vld [vmem:[%s328 + $0x178] sm:$0xff]
        %v1178 = vld [vmem:[%s328 + $0x180] sm:$0xff]
        %v1179 = vld [vmem:[%s328 + $0x188] sm:$0xff]
        %v1180 = vld [vmem:[%s328 + $0x190] sm:$0xff]
        %v1181 = vld [vmem:[%s328 + $0x198] sm:$0xff]
        %v1182 = vld [vmem:[%s328 + $0x1a0] sm:$0xff]
        %v1183 = vld [vmem:[%s328 + $0x1a8] sm:$0xff]
        %v1184 = vld [vmem:[%s328 + $0x1b0] sm:$0xff]
        %v1185 = vld [vmem:[%s328 + $0x1b8] sm:$0xff]
        %v1186 = vld [vmem:[%s328 + $0x1c0] sm:$0xff]
        %v1187 = vld [vmem:[%s328 + $0x1c8] sm:$0xff]
        %v1188 = vld [vmem:[%s328 + $0x1d0] sm:$0xff]
        %v1189 = vld [vmem:[%s328 + $0x1d8] sm:$0xff]
        %v1190 = vld [vmem:[%s328 + $0x1e0] sm:$0xff]
        %v1191 = vld [vmem:[%s328 + $0x1e8] sm:$0xff]
        %v1192 = vld [vmem:[%s328 + $0x1f0] sm:$0xff]
        %v1193 = vld [vmem:[%s328 + $0x1f8] sm:$0xff]
        %v1194 = vld [vmem:[%s328 + $0x200] sm:$0xff]
        %v1195 = vld [vmem:[%s328 + $0x208] sm:$0xff]
        %v1196 = vld [vmem:[%s328 + $0x210] sm:$0xff]
        %v1197 = vld [vmem:[%s328 + $0x218] sm:$0xff]
        %v1198 = vld [vmem:[%s328 + $0x220] sm:$0xff]
        %v1199 = vld [vmem:[%s328 + $0x228] sm:$0xff]
        %v1200 = vld [vmem:[%s328 + $0x230] sm:$0xff]
        %v1201 = vld [vmem:[%s328 + $0x238] sm:$0xff]
        %v1202 = vld [vmem:[%s328 + $0x240] sm:$0xff]
        %v1203 = vld [vmem:[%s328 + $0x248] sm:$0xff]
        %v1204 = vld [vmem:[%s328 + $0x250] sm:$0xff]
        %v1205 = vld [vmem:[%s328 + $0x258] sm:$0xff]
        %v1206 = vld [vmem:[%s328 + $0x260] sm:$0xff]
        %v1207 = vld [vmem:[%s328 + $0x268] sm:$0xff]
        %v1208 = vld [vmem:[%s328 + $0x270] sm:$0xff]
        %v1209 = vld [vmem:[%s328 + $0x278] sm:$0xff]
        %v1210 = vld [vmem:[%s328 + $0x280] sm:$0xff]
        %v1211 = vld [vmem:[%s328 + $0x288] sm:$0xff]
        %v1212 = vld [vmem:[%s328 + $0x290] sm:$0xff]
        %v1213 = vld [vmem:[%s328 + $0x298] sm:$0xff]
        %v1214 = vld [vmem:[%s328 + $0x2a0] sm:$0xff]
        %v1215 = vld [vmem:[%s328 + $0x2a8] sm:$0xff]
        %v1216 = vld [vmem:[%s328 + $0x2b0] sm:$0xff]
        %v1217 = vld [vmem:[%s328 + $0x2b8] sm:$0xff]
        %v1218 = vld [vmem:[%s328 + $0x2c0] sm:$0xff]
        %v1219 = vld [vmem:[%s328 + $0x2c8] sm:$0xff]
        %v1220 = vld [vmem:[%s328 + $0x2d0] sm:$0xff]
        %v1221 = vld [vmem:[%s328 + $0x2d8] sm:$0xff]
        %v1222 = vld [vmem:[%s328 + $0x2e0] sm:$0xff]
        %v1223 = vld [vmem:[%s328 + $0x2e8] sm:$0xff]
        %v1224 = vld [vmem:[%s328 + $0x2f0] sm:$0xff]
        %v1225 = vld [vmem:[%s328 + $0x2f8] sm:$0xff]
        %v1226 = vld [vmem:[%s328 + $0x300] sm:$0xff]
        %v1227 = vld [vmem:[%s328 + $0x308] sm:$0xff]
        %v1228 = vld [vmem:[%s328 + $0x310] sm:$0xff]
        %v1229 = vld [vmem:[%s328 + $0x318] sm:$0xff]
        %v1230 = vld [vmem:[%s328 + $0x320] sm:$0xff]
        %v1231 = vld [vmem:[%s328 + $0x328] sm:$0xff]
        %v1232 = vld [vmem:[%s328 + $0x330] sm:$0xff]
        %v1233 = vld [vmem:[%s328 + $0x338] sm:$0xff]
        %v1234 = vld [vmem:[%s328 + $0x340] sm:$0xff]
        %v1235 = vld [vmem:[%s328 + $0x348] sm:$0xff]
        %v1236 = vld [vmem:[%s328 + $0x350] sm:$0xff]
        %v1237 = vld [vmem:[%s328 + $0x358] sm:$0xff]
        %v1238 = vld [vmem:[%s328 + $0x360] sm:$0xff]
        %v1239 = vld [vmem:[%s328 + $0x368] sm:$0xff]
        %v1240 = vld [vmem:[%s328 + $0x370] sm:$0xff]
        %v1241 = vld [vmem:[%s328 + $0x378] sm:$0xff]
        %v1242 = vld [vmem:[%s328 + $0x380] sm:$0xff]
        %v1243 = vld [vmem:[%s328 + $0x388] sm:$0xff]
        %v1244 = vld [vmem:[%s328 + $0x390] sm:$0xff]
        %v1245 = vld [vmem:[%s328 + $0x398] sm:$0xff]
        %v1246 = vld [vmem:[%s328 + $0x3a0] sm:$0xff]
        %v1247 = vld [vmem:[%s328 + $0x3a8] sm:$0xff]
        %v1248 = vld [vmem:[%s328 + $0x3b0] sm:$0xff]
        %v1249 = vld [vmem:[%s328 + $0x3b8] sm:$0xff]
        %v1250 = vld [vmem:[%s328 + $0x3c0] sm:$0xff]
        %v1251 = vld [vmem:[%s328 + $0x3c8] sm:$0xff]
        %v1252 = vld [vmem:[%s328 + $0x3d0] sm:$0xff]
        %v1253 = vld [vmem:[%s328 + $0x3d8] sm:$0xff]
        %v1254 = vld [vmem:[%s328 + $0x3e0] sm:$0xff]
        %v1255 = vld [vmem:[%s328 + $0x3e8] sm:$0xff]
        %v1256 = vld [vmem:[%s328 + $0x3f0] sm:$0xff]
        %v1257 = vld [vmem:[%s328 + $0x3f8] sm:$0xff]
        %v1258 = vpack.c.bf16 %v1004, %v1002
        %v1259 = vpack.c.bf16 %v1005, %v1003
        %v1260 = vpack.c.bf16 %v1008, %v1006
        %v1261 = vpack.c.bf16 %v1009, %v1007
        %v1262 = vpack.c.bf16 %v1012, %v1010
        %v1263 = vpack.c.bf16 %v1013, %v1011
        %v1264 = vpack.c.bf16 %v1016, %v1014
        %v1265 = vpack.c.bf16 %v1017, %v1015
        %v1266 = vpack.c.bf16 %v1020, %v1018
        %v1267 = vpack.c.bf16 %v1021, %v1019
        %v1268 = vpack.c.bf16 %v1024, %v1022
        %v1269 = vpack.c.bf16 %v1025, %v1023
        %v1270 = vpack.c.bf16 %v1028, %v1026
        %v1271 = vpack.c.bf16 %v1029, %v1027
        %v1272 = vpack.c.bf16 %v1032, %v1030
        %v1273 = vpack.c.bf16 %v1033, %v1031
        %v1274 = vpack.c.bf16 %v1036, %v1034
        %v1275 = vpack.c.bf16 %v1037, %v1035
        %v1276 = vpack.c.bf16 %v1040, %v1038
        %v1277 = vpack.c.bf16 %v1041, %v1039
        %v1278 = vpack.c.bf16 %v1044, %v1042
        %v1279 = vpack.c.bf16 %v1045, %v1043
        %v1280 = vpack.c.bf16 %v1048, %v1046
        %v1281 = vpack.c.bf16 %v1049, %v1047
        %v1282 = vpack.c.bf16 %v1052, %v1050
        %v1283 = vpack.c.bf16 %v1053, %v1051
        %v1284 = vpack.c.bf16 %v1056, %v1054
        %v1285 = vpack.c.bf16 %v1057, %v1055
        %v1286 = vpack.c.bf16 %v1060, %v1058
        %v1287 = vpack.c.bf16 %v1061, %v1059
        %v1288 = vpack.c.bf16 %v1064, %v1062
        %v1289 = vpack.c.bf16 %v1065, %v1063
        %v1290 = vpack.c.bf16 %v1068, %v1066
        %v1291 = vpack.c.bf16 %v1069, %v1067
        %v1292 = vpack.c.bf16 %v1072, %v1070
        %v1293 = vpack.c.bf16 %v1073, %v1071
        %v1294 = vpack.c.bf16 %v1076, %v1074
        %v1295 = vpack.c.bf16 %v1077, %v1075
        %v1296 = vpack.c.bf16 %v1080, %v1078
        %v1297 = vpack.c.bf16 %v1081, %v1079
        %v1298 = vpack.c.bf16 %v1084, %v1082
        %v1299 = vpack.c.bf16 %v1085, %v1083
        %v1300 = vpack.c.bf16 %v1088, %v1086
        %v1301 = vpack.c.bf16 %v1089, %v1087
        %v1302 = vpack.c.bf16 %v1092, %v1090
        %v1303 = vpack.c.bf16 %v1093, %v1091
        %v1304 = vpack.c.bf16 %v1096, %v1094
        %v1305 = vpack.c.bf16 %v1097, %v1095
        %v1306 = vpack.c.bf16 %v1100, %v1098
        %v1307 = vpack.c.bf16 %v1101, %v1099
        %v1308 = vpack.c.bf16 %v1104, %v1102
        %v1309 = vpack.c.bf16 %v1105, %v1103
        %v1310 = vpack.c.bf16 %v1108, %v1106
        %v1311 = vpack.c.bf16 %v1109, %v1107
        %v1312 = vpack.c.bf16 %v1112, %v1110
        %v1313 = vpack.c.bf16 %v1113, %v1111
        %v1314 = vpack.c.bf16 %v1116, %v1114
        %v1315 = vpack.c.bf16 %v1117, %v1115
        %v1316 = vpack.c.bf16 %v1120, %v1118
        %v1317 = vpack.c.bf16 %v1121, %v1119
        %v1318 = vpack.c.bf16 %v1124, %v1122
        %v1319 = vpack.c.bf16 %v1125, %v1123
        %v1320 = vpack.c.bf16 %v1128, %v1126
        %v1321 = vpack.c.bf16 %v1129, %v1127
        %v1322 = vld [vmem:[#allocation8] sm:$0xff]
        %v1323 = vld [vmem:[#allocation8 + $0x8] sm:$0xff]
        %v1324 = vld [vmem:[#allocation8 + $0x10] sm:$0xff]
        %v1325 = vld [vmem:[#allocation8 + $0x18] sm:$0xff]
        %v1326 = vld [vmem:[#allocation8 + $0x20] sm:$0xff]
        %v1327 = vld [vmem:[#allocation8 + $0x28] sm:$0xff]
        %v1328 = vld [vmem:[#allocation8 + $0x30] sm:$0xff]
        %v1329 = vld [vmem:[#allocation8 + $0x38] sm:$0xff]
        %v1330 = vld [vmem:[#allocation8 + $0x40] sm:$0xff]
        %v1331 = vld [vmem:[#allocation8 + $0x48] sm:$0xff]
        %v1332 = vld [vmem:[#allocation8 + $0x50] sm:$0xff]
        %v1333 = vld [vmem:[#allocation8 + $0x58] sm:$0xff]
        %v1334 = vld [vmem:[#allocation8 + $0x60] sm:$0xff]
        %v1335 = vld [vmem:[#allocation8 + $0x68] sm:$0xff]
        %v1336 = vld [vmem:[#allocation8 + $0x70] sm:$0xff]
        %v1337 = vld [vmem:[#allocation8 + $0x78] sm:$0xff]
        %v1338 = vld [vmem:[#allocation8 + $0x80] sm:$0xff]
        %v1339 = vld [vmem:[#allocation8 + $0x88] sm:$0xff]
        %v1340 = vld [vmem:[#allocation8 + $0x90] sm:$0xff]
        %v1341 = vld [vmem:[#allocation8 + $0x98] sm:$0xff]
        %v1342 = vld [vmem:[#allocation8 + $0xa0] sm:$0xff]
        %v1343 = vld [vmem:[#allocation8 + $0xa8] sm:$0xff]
        %v1344 = vld [vmem:[#allocation8 + $0xb0] sm:$0xff]
        %v1345 = vld [vmem:[#allocation8 + $0xb8] sm:$0xff]
        %v1346 = vld [vmem:[#allocation8 + $0xc0] sm:$0xff]
        %v1347 = vld [vmem:[#allocation8 + $0xc8] sm:$0xff]
        %v1348 = vld [vmem:[#allocation8 + $0xd0] sm:$0xff]
        %v1349 = vld [vmem:[#allocation8 + $0xd8] sm:$0xff]
        %v1350 = vld [vmem:[#allocation8 + $0xe0] sm:$0xff]
        %v1351 = vld [vmem:[#allocation8 + $0xe8] sm:$0xff]
        %v1352 = vld [vmem:[#allocation8 + $0xf0] sm:$0xff]
        %v1353 = vld [vmem:[#allocation8 + $0xf8] sm:$0xff]
        %v1386 = vunpack.c.l.b16 %v1322
        %v1387 = vunpack.c.h.b16 %v1322
        %v1388 = vunpack.c.l.b16 %v1323
        %v1389 = vunpack.c.h.b16 %v1323
        %v1390 = vunpack.c.l.b16 %v1324
        %v1391 = vunpack.c.h.b16 %v1324
        %v1392 = vunpack.c.l.b16 %v1325
        %v1393 = vunpack.c.h.b16 %v1325
        %v1394 = vunpack.c.l.b16 %v1326
        %v1395 = vunpack.c.h.b16 %v1326
        %v1396 = vunpack.c.l.b16 %v1327
        %v1397 = vunpack.c.h.b16 %v1327
        %v1398 = vunpack.c.l.b16 %v1328
        %v1399 = vunpack.c.h.b16 %v1328
        %v1400 = vunpack.c.l.b16 %v1329
        %v1401 = vunpack.c.h.b16 %v1329
        %v1402 = vunpack.c.l.b16 %v1330
        %v1403 = vunpack.c.h.b16 %v1330
        %v1404 = vunpack.c.l.b16 %v1331
        %v1405 = vunpack.c.h.b16 %v1331
        %v1406 = vunpack.c.l.b16 %v1332
        %v1407 = vunpack.c.h.b16 %v1332
        %v1408 = vunpack.c.l.b16 %v1333
        %v1409 = vunpack.c.h.b16 %v1333
        %v1410 = vunpack.c.l.b16 %v1334
        %v1411 = vunpack.c.h.b16 %v1334
        %v1412 = vunpack.c.l.b16 %v1335
        %v1413 = vunpack.c.h.b16 %v1335
        %v1414 = vunpack.c.l.b16 %v1336
        %v1415 = vunpack.c.h.b16 %v1336
        %v1416 = vunpack.c.l.b16 %v1337
        %v1417 = vunpack.c.h.b16 %v1337
        %v1418 = vunpack.c.l.b16 %v1338
        %v1419 = vunpack.c.h.b16 %v1338
        %v1420 = vunpack.c.l.b16 %v1339
        %v1421 = vunpack.c.h.b16 %v1339
        %v1422 = vunpack.c.l.b16 %v1340
        %v1423 = vunpack.c.h.b16 %v1340
        %v1424 = vunpack.c.l.b16 %v1341
        %v1425 = vunpack.c.h.b16 %v1341
        %v1426 = vunpack.c.l.b16 %v1342
        %v1427 = vunpack.c.h.b16 %v1342
        %v1428 = vunpack.c.l.b16 %v1343
        %v1429 = vunpack.c.h.b16 %v1343
        %v1430 = vunpack.c.l.b16 %v1344
        %v1431 = vunpack.c.h.b16 %v1344
        %v1432 = vunpack.c.l.b16 %v1345
        %v1433 = vunpack.c.h.b16 %v1345
        %v1434 = vunpack.c.l.b16 %v1346
        %v1435 = vunpack.c.h.b16 %v1346
        %v1436 = vunpack.c.l.b16 %v1347
        %v1437 = vunpack.c.h.b16 %v1347
        %v1438 = vunpack.c.l.b16 %v1348
        %v1439 = vunpack.c.h.b16 %v1348
        %v1440 = vunpack.c.l.b16 %v1349
        %v1441 = vunpack.c.h.b16 %v1349
        %v1442 = vunpack.c.l.b16 %v1350
        %v1443 = vunpack.c.h.b16 %v1350
        %v1444 = vunpack.c.l.b16 %v1351
        %v1445 = vunpack.c.h.b16 %v1351
        %v1446 = vunpack.c.l.b16 %v1352
        %v1447 = vunpack.c.h.b16 %v1352
        %v1448 = vunpack.c.l.b16 %v1353
        %v1449 = vunpack.c.h.b16 %v1353
        %v1450 = vpack.c.b16 %v1388, %v1386
        %v1451 = vpack.c.b16 %v1389, %v1387
        %v1452 = vpack.c.b16 %v1392, %v1390
        %v1453 = vpack.c.b16 %v1393, %v1391
        %v1454 = vpack.c.b16 %v1396, %v1394
        %v1455 = vpack.c.b16 %v1397, %v1395
        %v1456 = vpack.c.b16 %v1400, %v1398
        %v1457 = vpack.c.b16 %v1401, %v1399
        %v1458 = vpack.c.b16 %v1404, %v1402
        %v1459 = vpack.c.b16 %v1405, %v1403
        %v1460 = vpack.c.b16 %v1408, %v1406
        %v1461 = vpack.c.b16 %v1409, %v1407
        %v1462 = vpack.c.b16 %v1412, %v1410
        %v1463 = vpack.c.b16 %v1413, %v1411
        %v1464 = vpack.c.b16 %v1416, %v1414
        %v1465 = vpack.c.b16 %v1417, %v1415
        %v1466 = vpack.c.b16 %v1420, %v1418
        %v1467 = vpack.c.b16 %v1421, %v1419
        %v1468 = vpack.c.b16 %v1424, %v1422
        %v1469 = vpack.c.b16 %v1425, %v1423
        %v1470 = vpack.c.b16 %v1428, %v1426
        %v1471 = vpack.c.b16 %v1429, %v1427
        %v1472 = vpack.c.b16 %v1432, %v1430
        %v1473 = vpack.c.b16 %v1433, %v1431
        %v1474 = vpack.c.b16 %v1436, %v1434
        %v1475 = vpack.c.b16 %v1437, %v1435
        %v1476 = vpack.c.b16 %v1440, %v1438
        %v1477 = vpack.c.b16 %v1441, %v1439
        %v1478 = vpack.c.b16 %v1444, %v1442
        %v1479 = vpack.c.b16 %v1445, %v1443
        %v1480 = vpack.c.b16 %v1448, %v1446
        %v1481 = vpack.c.b16 %v1449, %v1447
        %1514 = vmatpush.bf16.msra.mxu0 %v1464
        %1515 = vmatpush.bf16.msra.mxu0 %v1462
        %1516 = vmatpush.bf16.msra.mxu0 %v1460
        %1517 = vmatpush.bf16.msra.mxu0 %v1458
        %1518 = vmatpush.bf16.msra.mxu0 %v1456
        %1519 = vmatpush.bf16.msra.mxu0 %v1454
        %1520 = vmatpush.bf16.msra.mxu0 %v1452
        %1521 = vmatpush.bf16.msra.mxu0 %v1450
        %1522 = vmatmul.bf16.gmra.mxu0 %v1258
        %v1523 = vpop.f32.mrf.mxu0
        %v1524 = vadd.f32 0.0, %v1523
        %v1525 = vpop.f32.mrf.mxu0
        %v1526 = vadd.f32 0.0, %v1525
        %1527 = vmatmul.bf16.gmra.mxu0 %v1260
        %v1528 = vpop.f32.mrf.mxu0
        %v1529 = vadd.f32 0.0, %v1528
        %v1530 = vpop.f32.mrf.mxu0
        %v1531 = vadd.f32 0.0, %v1530
        %1532 = vmatmul.bf16.gmra.mxu0 %v1262
        %v1533 = vpop.f32.mrf.mxu0
        %v1534 = vadd.f32 0.0, %v1533
        %v1535 = vpop.f32.mrf.mxu0
        %v1536 = vadd.f32 0.0, %v1535
        %1537 = vmatmul.bf16.gmra.mxu0 %v1264
        %v1538 = vpop.f32.mrf.mxu0
        %v1539 = vadd.f32 0.0, %v1538
        %v1540 = vpop.f32.mrf.mxu0
        %v1541 = vadd.f32 0.0, %v1540
        %1542 = vmatmul.bf16.gmra.mxu0 %v1266
        %v1543 = vpop.f32.mrf.mxu0
        %v1544 = vadd.f32 0.0, %v1543
        %v1545 = vpop.f32.mrf.mxu0
        %v1546 = vadd.f32 0.0, %v1545
        %1547 = vmatmul.bf16.gmra.mxu0 %v1268
        %v1548 = vpop.f32.mrf.mxu0
        %v1549 = vadd.f32 0.0, %v1548
        %v1550 = vpop.f32.mrf.mxu0
        %v1551 = vadd.f32 0.0, %v1550
        %1552 = vmatmul.bf16.gmra.mxu0 %v1270
        %v1553 = vpop.f32.mrf.mxu0
        %v1554 = vadd.f32 0.0, %v1553
        %v1555 = vpop.f32.mrf.mxu0
        %v1556 = vadd.f32 0.0, %v1555
        %1557 = vmatmul.bf16.gmra.mxu0 %v1272
        %v1558 = vpop.f32.mrf.mxu0
        %v1559 = vadd.f32 0.0, %v1558
        %v1560 = vpop.f32.mrf.mxu0
        %v1561 = vadd.f32 0.0, %v1560
        %1562 = vmatmul.bf16.gmra.mxu0 %v1274
        %v1563 = vpop.f32.mrf.mxu0
        %v1564 = vadd.f32 0.0, %v1563
        %v1565 = vpop.f32.mrf.mxu0
        %v1566 = vadd.f32 0.0, %v1565
        %1567 = vmatmul.bf16.gmra.mxu0 %v1276
        %v1568 = vpop.f32.mrf.mxu0
        %v1569 = vadd.f32 0.0, %v1568
        %v1570 = vpop.f32.mrf.mxu0
        %v1571 = vadd.f32 0.0, %v1570
        %1572 = vmatmul.bf16.gmra.mxu0 %v1278
        %v1573 = vpop.f32.mrf.mxu0
        %v1574 = vadd.f32 0.0, %v1573
        %v1575 = vpop.f32.mrf.mxu0
        %v1576 = vadd.f32 0.0, %v1575
        %1577 = vmatmul.bf16.gmra.mxu0 %v1280
        %v1578 = vpop.f32.mrf.mxu0
        %v1579 = vadd.f32 0.0, %v1578
        %v1580 = vpop.f32.mrf.mxu0
        %v1581 = vadd.f32 0.0, %v1580
        %1582 = vmatmul.bf16.gmra.mxu0 %v1282
        %v1583 = vpop.f32.mrf.mxu0
        %v1584 = vadd.f32 0.0, %v1583
        %v1585 = vpop.f32.mrf.mxu0
        %v1586 = vadd.f32 0.0, %v1585
        %1587 = vmatmul.bf16.gmra.mxu0 %v1284
        %v1588 = vpop.f32.mrf.mxu0
        %v1589 = vadd.f32 0.0, %v1588
        %v1590 = vpop.f32.mrf.mxu0
        %v1591 = vadd.f32 0.0, %v1590
        %1592 = vmatmul.bf16.gmra.mxu0 %v1286
        %v1593 = vpop.f32.mrf.mxu0
        %v1594 = vadd.f32 0.0, %v1593
        %v1595 = vpop.f32.mrf.mxu0
        %v1596 = vadd.f32 0.0, %v1595
        %1597 = vmatmul.bf16.gmra.mxu0 %v1288
        %v1598 = vpop.f32.mrf.mxu0
        %v1599 = vadd.f32 0.0, %v1598
        %v1600 = vpop.f32.mrf.mxu0
        %v1601 = vadd.f32 0.0, %v1600
        %1602 = vmatmul.bf16.gmra.mxu0 %v1290
        %v1603 = vpop.f32.mrf.mxu0
        %v1604 = vadd.f32 0.0, %v1603
        %v1605 = vpop.f32.mrf.mxu0
        %v1606 = vadd.f32 0.0, %v1605
        %1607 = vmatmul.bf16.gmra.mxu0 %v1292
        %v1608 = vpop.f32.mrf.mxu0
        %v1609 = vadd.f32 0.0, %v1608
        %v1610 = vpop.f32.mrf.mxu0
        %v1611 = vadd.f32 0.0, %v1610
        %1612 = vmatmul.bf16.gmra.mxu0 %v1294
        %v1613 = vpop.f32.mrf.mxu0
        %v1614 = vadd.f32 0.0, %v1613
        %v1615 = vpop.f32.mrf.mxu0
        %v1616 = vadd.f32 0.0, %v1615
        %1617 = vmatmul.bf16.gmra.mxu0 %v1296
        %v1618 = vpop.f32.mrf.mxu0
        %v1619 = vadd.f32 0.0, %v1618
        %v1620 = vpop.f32.mrf.mxu0
        %v1621 = vadd.f32 0.0, %v1620
        %1622 = vmatmul.bf16.gmra.mxu0 %v1298
        %v1623 = vpop.f32.mrf.mxu0
        %v1624 = vadd.f32 0.0, %v1623
        %v1625 = vpop.f32.mrf.mxu0
        %v1626 = vadd.f32 0.0, %v1625
        %1627 = vmatmul.bf16.gmra.mxu0 %v1300
        %v1628 = vpop.f32.mrf.mxu0
        %v1629 = vadd.f32 0.0, %v1628
        %v1630 = vpop.f32.mrf.mxu0
        %v1631 = vadd.f32 0.0, %v1630
        %1632 = vmatmul.bf16.gmra.mxu0 %v1302
        %v1633 = vpop.f32.mrf.mxu0
        %v1634 = vadd.f32 0.0, %v1633
        %v1635 = vpop.f32.mrf.mxu0
        %v1636 = vadd.f32 0.0, %v1635
        %1637 = vmatmul.bf16.gmra.mxu0 %v1304
        %v1638 = vpop.f32.mrf.mxu0
        %v1639 = vadd.f32 0.0, %v1638
        %v1640 = vpop.f32.mrf.mxu0
        %v1641 = vadd.f32 0.0, %v1640
        %1642 = vmatmul.bf16.gmra.mxu0 %v1306
        %v1643 = vpop.f32.mrf.mxu0
        %v1644 = vadd.f32 0.0, %v1643
        %v1645 = vpop.f32.mrf.mxu0
        %v1646 = vadd.f32 0.0, %v1645
        %1647 = vmatmul.bf16.gmra.mxu0 %v1308
        %v1648 = vpop.f32.mrf.mxu0
        %v1649 = vadd.f32 0.0, %v1648
        %v1650 = vpop.f32.mrf.mxu0
        %v1651 = vadd.f32 0.0, %v1650
        %1652 = vmatmul.bf16.gmra.mxu0 %v1310
        %v1653 = vpop.f32.mrf.mxu0
        %v1654 = vadd.f32 0.0, %v1653
        %v1655 = vpop.f32.mrf.mxu0
        %v1656 = vadd.f32 0.0, %v1655
        %1657 = vmatmul.bf16.gmra.mxu0 %v1312
        %v1658 = vpop.f32.mrf.mxu0
        %v1659 = vadd.f32 0.0, %v1658
        %v1660 = vpop.f32.mrf.mxu0
        %v1661 = vadd.f32 0.0, %v1660
        %1662 = vmatmul.bf16.gmra.mxu0 %v1314
        %v1663 = vpop.f32.mrf.mxu0
        %v1664 = vadd.f32 0.0, %v1663
        %v1665 = vpop.f32.mrf.mxu0
        %v1666 = vadd.f32 0.0, %v1665
        %1667 = vmatmul.bf16.gmra.mxu0 %v1316
        %v1668 = vpop.f32.mrf.mxu0
        %v1669 = vadd.f32 0.0, %v1668
        %v1670 = vpop.f32.mrf.mxu0
        %v1671 = vadd.f32 0.0, %v1670
        %1672 = vmatmul.bf16.gmra.mxu0 %v1318
        %v1673 = vpop.f32.mrf.mxu0
        %v1674 = vadd.f32 0.0, %v1673
        %v1675 = vpop.f32.mrf.mxu0
        %v1676 = vadd.f32 0.0, %v1675
        %1677 = vmatmul.bf16.gmra.mxu0 %v1320
        %v1678 = vpop.f32.mrf.mxu0
        %v1679 = vadd.f32 0.0, %v1678
        %v1680 = vpop.f32.mrf.mxu0
        %v1681 = vadd.f32 0.0, %v1680
        %1682 = vdwg.mxu0
        %1683 = vmatpush.bf16.msra.mxu0 %v1480
        %1684 = vmatpush.bf16.msra.mxu0 %v1478
        %1685 = vmatpush.bf16.msra.mxu0 %v1476
        %1686 = vmatpush.bf16.msra.mxu0 %v1474
        %1687 = vmatpush.bf16.msra.mxu0 %v1472
        %1688 = vmatpush.bf16.msra.mxu0 %v1470
        %1689 = vmatpush.bf16.msra.mxu0 %v1468
        %1690 = vmatpush.bf16.msra.mxu0 %v1466
        %1691 = vmatmul.bf16.gmra.mxu0 %v1259
        %v1692 = vpop.f32.mrf.mxu0
        %v1693 = vadd.f32 %v1524, %v1692
        %v1694 = vpop.f32.mrf.mxu0
        %v1695 = vadd.f32 %v1526, %v1694
        %1696 = vmatmul.bf16.gmra.mxu0 %v1261
        %v1697 = vpop.f32.mrf.mxu0
        %v1698 = vadd.f32 %v1529, %v1697
        %v1699 = vpop.f32.mrf.mxu0
        %v1700 = vadd.f32 %v1531, %v1699
        %1701 = vmatmul.bf16.gmra.mxu0 %v1263
        %v1702 = vpop.f32.mrf.mxu0
        %v1703 = vadd.f32 %v1534, %v1702
        %v1704 = vpop.f32.mrf.mxu0
        %v1705 = vadd.f32 %v1536, %v1704
        %1706 = vmatmul.bf16.gmra.mxu0 %v1265
        %v1707 = vpop.f32.mrf.mxu0
        %v1708 = vadd.f32 %v1539, %v1707
        %v1709 = vpop.f32.mrf.mxu0
        %v1710 = vadd.f32 %v1541, %v1709
        %1711 = vmatmul.bf16.gmra.mxu0 %v1267
        %v1712 = vpop.f32.mrf.mxu0
        %v1713 = vadd.f32 %v1544, %v1712
        %v1714 = vpop.f32.mrf.mxu0
        %v1715 = vadd.f32 %v1546, %v1714
        %1716 = vmatmul.bf16.gmra.mxu0 %v1269
        %v1717 = vpop.f32.mrf.mxu0
        %v1718 = vadd.f32 %v1549, %v1717
        %v1719 = vpop.f32.mrf.mxu0
        %v1720 = vadd.f32 %v1551, %v1719
        %1721 = vmatmul.bf16.gmra.mxu0 %v1271
        %v1722 = vpop.f32.mrf.mxu0
        %v1723 = vadd.f32 %v1554, %v1722
        %v1724 = vpop.f32.mrf.mxu0
        %v1725 = vadd.f32 %v1556, %v1724
        %1726 = vmatmul.bf16.gmra.mxu0 %v1273
        %v1727 = vpop.f32.mrf.mxu0
        %v1728 = vadd.f32 %v1559, %v1727
        %v1729 = vpop.f32.mrf.mxu0
        %v1730 = vadd.f32 %v1561, %v1729
        %1731 = vmatmul.bf16.gmra.mxu0 %v1275
        %v1732 = vpop.f32.mrf.mxu0
        %v1733 = vadd.f32 %v1564, %v1732
        %v1734 = vpop.f32.mrf.mxu0
        %v1735 = vadd.f32 %v1566, %v1734
        %1736 = vmatmul.bf16.gmra.mxu0 %v1277
        %v1737 = vpop.f32.mrf.mxu0
        %v1738 = vadd.f32 %v1569, %v1737
        %v1739 = vpop.f32.mrf.mxu0
        %v1740 = vadd.f32 %v1571, %v1739
        %1741 = vmatmul.bf16.gmra.mxu0 %v1279
        %v1742 = vpop.f32.mrf.mxu0
        %v1743 = vadd.f32 %v1574, %v1742
        %v1744 = vpop.f32.mrf.mxu0
        %v1745 = vadd.f32 %v1576, %v1744
        %1746 = vmatmul.bf16.gmra.mxu0 %v1281
        %v1747 = vpop.f32.mrf.mxu0
        %v1748 = vadd.f32 %v1579, %v1747
        %v1749 = vpop.f32.mrf.mxu0
        %v1750 = vadd.f32 %v1581, %v1749
        %1751 = vmatmul.bf16.gmra.mxu0 %v1283
        %v1752 = vpop.f32.mrf.mxu0
        %v1753 = vadd.f32 %v1584, %v1752
        %v1754 = vpop.f32.mrf.mxu0
        %v1755 = vadd.f32 %v1586, %v1754
        %1756 = vmatmul.bf16.gmra.mxu0 %v1285
        %v1757 = vpop.f32.mrf.mxu0
        %v1758 = vadd.f32 %v1589, %v1757
        %v1759 = vpop.f32.mrf.mxu0
        %v1760 = vadd.f32 %v1591, %v1759
        %1761 = vmatmul.bf16.gmra.mxu0 %v1287
        %v1762 = vpop.f32.mrf.mxu0
        %v1763 = vadd.f32 %v1594, %v1762
        %v1764 = vpop.f32.mrf.mxu0
        %v1765 = vadd.f32 %v1596, %v1764
        %1766 = vmatmul.bf16.gmra.mxu0 %v1289
        %v1767 = vpop.f32.mrf.mxu0
        %v1768 = vadd.f32 %v1599, %v1767
        %v1769 = vpop.f32.mrf.mxu0
        %v1770 = vadd.f32 %v1601, %v1769
        %1771 = vmatmul.bf16.gmra.mxu0 %v1291
        %v1772 = vpop.f32.mrf.mxu0
        %v1773 = vadd.f32 %v1604, %v1772
        %v1774 = vpop.f32.mrf.mxu0
        %v1775 = vadd.f32 %v1606, %v1774
        %1776 = vmatmul.bf16.gmra.mxu0 %v1293
        %v1777 = vpop.f32.mrf.mxu0
        %v1778 = vadd.f32 %v1609, %v1777
        %v1779 = vpop.f32.mrf.mxu0
        %v1780 = vadd.f32 %v1611, %v1779
        %1781 = vmatmul.bf16.gmra.mxu0 %v1295
        %v1782 = vpop.f32.mrf.mxu0
        %v1783 = vadd.f32 %v1614, %v1782
        %v1784 = vpop.f32.mrf.mxu0
        %v1785 = vadd.f32 %v1616, %v1784
        %1786 = vmatmul.bf16.gmra.mxu0 %v1297
        %v1787 = vpop.f32.mrf.mxu0
        %v1788 = vadd.f32 %v1619, %v1787
        %v1789 = vpop.f32.mrf.mxu0
        %v1790 = vadd.f32 %v1621, %v1789
        %1791 = vmatmul.bf16.gmra.mxu0 %v1299
        %v1792 = vpop.f32.mrf.mxu0
        %v1793 = vadd.f32 %v1624, %v1792
        %v1794 = vpop.f32.mrf.mxu0
        %v1795 = vadd.f32 %v1626, %v1794
        %1796 = vmatmul.bf16.gmra.mxu0 %v1301
        %v1797 = vpop.f32.mrf.mxu0
        %v1798 = vadd.f32 %v1629, %v1797
        %v1799 = vpop.f32.mrf.mxu0
        %v1800 = vadd.f32 %v1631, %v1799
        %1801 = vmatmul.bf16.gmra.mxu0 %v1303
        %v1802 = vpop.f32.mrf.mxu0
        %v1803 = vadd.f32 %v1634, %v1802
        %v1804 = vpop.f32.mrf.mxu0
        %v1805 = vadd.f32 %v1636, %v1804
        %1806 = vmatmul.bf16.gmra.mxu0 %v1305
        %v1807 = vpop.f32.mrf.mxu0
        %v1808 = vadd.f32 %v1639, %v1807
        %v1809 = vpop.f32.mrf.mxu0
        %v1810 = vadd.f32 %v1641, %v1809
        %1811 = vmatmul.bf16.gmra.mxu0 %v1307
        %v1812 = vpop.f32.mrf.mxu0
        %v1813 = vadd.f32 %v1644, %v1812
        %v1814 = vpop.f32.mrf.mxu0
        %v1815 = vadd.f32 %v1646, %v1814
        %1816 = vmatmul.bf16.gmra.mxu0 %v1309
        %v1817 = vpop.f32.mrf.mxu0
        %v1818 = vadd.f32 %v1649, %v1817
        %v1819 = vpop.f32.mrf.mxu0
        %v1820 = vadd.f32 %v1651, %v1819
        %1821 = vmatmul.bf16.gmra.mxu0 %v1311
        %v1822 = vpop.f32.mrf.mxu0
        %v1823 = vadd.f32 %v1654, %v1822
        %v1824 = vpop.f32.mrf.mxu0
        %v1825 = vadd.f32 %v1656, %v1824
        %1826 = vmatmul.bf16.gmra.mxu0 %v1313
        %v1827 = vpop.f32.mrf.mxu0
        %v1828 = vadd.f32 %v1659, %v1827
        %v1829 = vpop.f32.mrf.mxu0
        %v1830 = vadd.f32 %v1661, %v1829
        %1831 = vmatmul.bf16.gmra.mxu0 %v1315
        %v1832 = vpop.f32.mrf.mxu0
        %v1833 = vadd.f32 %v1664, %v1832
        %v1834 = vpop.f32.mrf.mxu0
        %v1835 = vadd.f32 %v1666, %v1834
        %1836 = vmatmul.bf16.gmra.mxu0 %v1317
        %v1837 = vpop.f32.mrf.mxu0
        %v1838 = vadd.f32 %v1669, %v1837
        %v1839 = vpop.f32.mrf.mxu0
        %v1840 = vadd.f32 %v1671, %v1839
        %1841 = vmatmul.bf16.gmra.mxu0 %v1319
        %v1842 = vpop.f32.mrf.mxu0
        %v1843 = vadd.f32 %v1674, %v1842
        %v1844 = vpop.f32.mrf.mxu0
        %v1845 = vadd.f32 %v1676, %v1844
        %1846 = vmatmul.bf16.gmra.mxu0 %v1321
        %v1847 = vpop.f32.mrf.mxu0
        %v1848 = vadd.f32 %v1679, %v1847
        %v1849 = vpop.f32.mrf.mxu0
        %v1850 = vadd.f32 %v1681, %v1849
        %1851 = vdwg.mxu0
        %1852 = vmatpush.bf16.msra.mxu0 %v1465
        %1853 = vmatpush.bf16.msra.mxu0 %v1463
        %1854 = vmatpush.bf16.msra.mxu0 %v1461
        %1855 = vmatpush.bf16.msra.mxu0 %v1459
        %1856 = vmatpush.bf16.msra.mxu0 %v1457
        %1857 = vmatpush.bf16.msra.mxu0 %v1455
        %1858 = vmatpush.bf16.msra.mxu0 %v1453
        %1859 = vmatpush.bf16.msra.mxu0 %v1451
        %1860 = vmatmul.bf16.gmra.mxu0 %v1258
        %v1861 = vpop.f32.mrf.mxu0
        %v1862 = vadd.f32 0.0, %v1861
        %v1863 = vpop.f32.mrf.mxu0
        %v1864 = vadd.f32 0.0, %v1863
        %1865 = vmatmul.bf16.gmra.mxu0 %v1260
        %v1866 = vpop.f32.mrf.mxu0
        %v1867 = vadd.f32 0.0, %v1866
        %v1868 = vpop.f32.mrf.mxu0
        %v1869 = vadd.f32 0.0, %v1868
        %1870 = vmatmul.bf16.gmra.mxu0 %v1262
        %v1871 = vpop.f32.mrf.mxu0
        %v1872 = vadd.f32 0.0, %v1871
        %v1873 = vpop.f32.mrf.mxu0
        %v1874 = vadd.f32 0.0, %v1873
        %1875 = vmatmul.bf16.gmra.mxu0 %v1264
        %v1876 = vpop.f32.mrf.mxu0
        %v1877 = vadd.f32 0.0, %v1876
        %v1878 = vpop.f32.mrf.mxu0
        %v1879 = vadd.f32 0.0, %v1878
        %1880 = vmatmul.bf16.gmra.mxu0 %v1266
        %v1881 = vpop.f32.mrf.mxu0
        %v1882 = vadd.f32 0.0, %v1881
        %v1883 = vpop.f32.mrf.mxu0
        %v1884 = vadd.f32 0.0, %v1883
        %1885 = vmatmul.bf16.gmra.mxu0 %v1268
        %v1886 = vpop.f32.mrf.mxu0
        %v1887 = vadd.f32 0.0, %v1886
        %v1888 = vpop.f32.mrf.mxu0
        %v1889 = vadd.f32 0.0, %v1888
        %1890 = vmatmul.bf16.gmra.mxu0 %v1270
        %v1891 = vpop.f32.mrf.mxu0
        %v1892 = vadd.f32 0.0, %v1891
        %v1893 = vpop.f32.mrf.mxu0
        %v1894 = vadd.f32 0.0, %v1893
        %1895 = vmatmul.bf16.gmra.mxu0 %v1272
        %v1896 = vpop.f32.mrf.mxu0
        %v1897 = vadd.f32 0.0, %v1896
        %v1898 = vpop.f32.mrf.mxu0
        %v1899 = vadd.f32 0.0, %v1898
        %1900 = vmatmul.bf16.gmra.mxu0 %v1274
        %v1901 = vpop.f32.mrf.mxu0
        %v1902 = vadd.f32 0.0, %v1901
        %v1903 = vpop.f32.mrf.mxu0
        %v1904 = vadd.f32 0.0, %v1903
        %1905 = vmatmul.bf16.gmra.mxu0 %v1276
        %v1906 = vpop.f32.mrf.mxu0
        %v1907 = vadd.f32 0.0, %v1906
        %v1908 = vpop.f32.mrf.mxu0
        %v1909 = vadd.f32 0.0, %v1908
        %1910 = vmatmul.bf16.gmra.mxu0 %v1278
        %v1911 = vpop.f32.mrf.mxu0
        %v1912 = vadd.f32 0.0, %v1911
        %v1913 = vpop.f32.mrf.mxu0
        %v1914 = vadd.f32 0.0, %v1913
        %1915 = vmatmul.bf16.gmra.mxu0 %v1280
        %v1916 = vpop.f32.mrf.mxu0
        %v1917 = vadd.f32 0.0, %v1916
        %v1918 = vpop.f32.mrf.mxu0
        %v1919 = vadd.f32 0.0, %v1918
        %1920 = vmatmul.bf16.gmra.mxu0 %v1282
        %v1921 = vpop.f32.mrf.mxu0
        %v1922 = vadd.f32 0.0, %v1921
        %v1923 = vpop.f32.mrf.mxu0
        %v1924 = vadd.f32 0.0, %v1923
        %1925 = vmatmul.bf16.gmra.mxu0 %v1284
        %v1926 = vpop.f32.mrf.mxu0
        %v1927 = vadd.f32 0.0, %v1926
        %v1928 = vpop.f32.mrf.mxu0
        %v1929 = vadd.f32 0.0, %v1928
        %1930 = vmatmul.bf16.gmra.mxu0 %v1286
        %v1931 = vpop.f32.mrf.mxu0
        %v1932 = vadd.f32 0.0, %v1931
        %v1933 = vpop.f32.mrf.mxu0
        %v1934 = vadd.f32 0.0, %v1933
        %1935 = vmatmul.bf16.gmra.mxu0 %v1288
        %v1936 = vpop.f32.mrf.mxu0
        %v1937 = vadd.f32 0.0, %v1936
        %v1938 = vpop.f32.mrf.mxu0
        %v1939 = vadd.f32 0.0, %v1938
        %1940 = vmatmul.bf16.gmra.mxu0 %v1290
        %v1941 = vpop.f32.mrf.mxu0
        %v1942 = vadd.f32 0.0, %v1941
        %v1943 = vpop.f32.mrf.mxu0
        %v1944 = vadd.f32 0.0, %v1943
        %1945 = vmatmul.bf16.gmra.mxu0 %v1292
        %v1946 = vpop.f32.mrf.mxu0
        %v1947 = vadd.f32 0.0, %v1946
        %v1948 = vpop.f32.mrf.mxu0
        %v1949 = vadd.f32 0.0, %v1948
        %1950 = vmatmul.bf16.gmra.mxu0 %v1294
        %v1951 = vpop.f32.mrf.mxu0
        %v1952 = vadd.f32 0.0, %v1951
        %v1953 = vpop.f32.mrf.mxu0
        %v1954 = vadd.f32 0.0, %v1953
        %1955 = vmatmul.bf16.gmra.mxu0 %v1296
        %v1956 = vpop.f32.mrf.mxu0
        %v1957 = vadd.f32 0.0, %v1956
        %v1958 = vpop.f32.mrf.mxu0
        %v1959 = vadd.f32 0.0, %v1958
        %1960 = vmatmul.bf16.gmra.mxu0 %v1298
        %v1961 = vpop.f32.mrf.mxu0
        %v1962 = vadd.f32 0.0, %v1961
        %v1963 = vpop.f32.mrf.mxu0
        %v1964 = vadd.f32 0.0, %v1963
        %1965 = vmatmul.bf16.gmra.mxu0 %v1300
        %v1966 = vpop.f32.mrf.mxu0
        %v1967 = vadd.f32 0.0, %v1966
        %v1968 = vpop.f32.mrf.mxu0
        %v1969 = vadd.f32 0.0, %v1968
        %1970 = vmatmul.bf16.gmra.mxu0 %v1302
        %v1971 = vpop.f32.mrf.mxu0
        %v1972 = vadd.f32 0.0, %v1971
        %v1973 = vpop.f32.mrf.mxu0
        %v1974 = vadd.f32 0.0, %v1973
        %1975 = vmatmul.bf16.gmra.mxu0 %v1304
        %v1976 = vpop.f32.mrf.mxu0
        %v1977 = vadd.f32 0.0, %v1976
        %v1978 = vpop.f32.mrf.mxu0
        %v1979 = vadd.f32 0.0, %v1978
        %1980 = vmatmul.bf16.gmra.mxu0 %v1306
        %v1981 = vpop.f32.mrf.mxu0
        %v1982 = vadd.f32 0.0, %v1981
        %v1983 = vpop.f32.mrf.mxu0
        %v1984 = vadd.f32 0.0, %v1983
        %1985 = vmatmul.bf16.gmra.mxu0 %v1308
        %v1986 = vpop.f32.mrf.mxu0
        %v1987 = vadd.f32 0.0, %v1986
        %v1988 = vpop.f32.mrf.mxu0
        %v1989 = vadd.f32 0.0, %v1988
        %1990 = vmatmul.bf16.gmra.mxu0 %v1310
        %v1991 = vpop.f32.mrf.mxu0
        %v1992 = vadd.f32 0.0, %v1991
        %v1993 = vpop.f32.mrf.mxu0
        %v1994 = vadd.f32 0.0, %v1993
        %1995 = vmatmul.bf16.gmra.mxu0 %v1312
        %v1996 = vpop.f32.mrf.mxu0
        %v1997 = vadd.f32 0.0, %v1996
        %v1998 = vpop.f32.mrf.mxu0
        %v1999 = vadd.f32 0.0, %v1998
        %2000 = vmatmul.bf16.gmra.mxu0 %v1314
        %v2001 = vpop.f32.mrf.mxu0
        %v2002 = vadd.f32 0.0, %v2001
        %v2003 = vpop.f32.mrf.mxu0
        %v2004 = vadd.f32 0.0, %v2003
        %2005 = vmatmul.bf16.gmra.mxu0 %v1316
        %v2006 = vpop.f32.mrf.mxu0
        %v2007 = vadd.f32 0.0, %v2006
        %v2008 = vpop.f32.mrf.mxu0
        %v2009 = vadd.f32 0.0, %v2008
        %2010 = vmatmul.bf16.gmra.mxu0 %v1318
        %v2011 = vpop.f32.mrf.mxu0
        %v2012 = vadd.f32 0.0, %v2011
        %v2013 = vpop.f32.mrf.mxu0
        %v2014 = vadd.f32 0.0, %v2013
        %2015 = vmatmul.bf16.gmra.mxu0 %v1320
        %v2016 = vpop.f32.mrf.mxu0
        %v2017 = vadd.f32 0.0, %v2016
        %v2018 = vpop.f32.mrf.mxu0
        %v2019 = vadd.f32 0.0, %v2018
        %2020 = vdwg.mxu0
        %2021 = vmatpush.bf16.msra.mxu0 %v1481
        %2022 = vmatpush.bf16.msra.mxu0 %v1479
        %2023 = vmatpush.bf16.msra.mxu0 %v1477
        %2024 = vmatpush.bf16.msra.mxu0 %v1475
        %2025 = vmatpush.bf16.msra.mxu0 %v1473
        %2026 = vmatpush.bf16.msra.mxu0 %v1471
        %2027 = vmatpush.bf16.msra.mxu0 %v1469
        %2028 = vmatpush.bf16.msra.mxu0 %v1467
        %2029 = vmatmul.bf16.gmra.mxu0 %v1259
        %v2030 = vpop.f32.mrf.mxu0
        %v2031 = vadd.f32 %v1862, %v2030
        %v2032 = vpop.f32.mrf.mxu0
        %v2033 = vadd.f32 %v1864, %v2032
        %2034 = vmatmul.bf16.gmra.mxu0 %v1261
        %v2035 = vpop.f32.mrf.mxu0
        %v2036 = vadd.f32 %v1867, %v2035
        %v2037 = vpop.f32.mrf.mxu0
        %v2038 = vadd.f32 %v1869, %v2037
        %2039 = vmatmul.bf16.gmra.mxu0 %v1263
        %v2040 = vpop.f32.mrf.mxu0
        %v2041 = vadd.f32 %v1872, %v2040
        %v2042 = vpop.f32.mrf.mxu0
        %v2043 = vadd.f32 %v1874, %v2042
        %2044 = vmatmul.bf16.gmra.mxu0 %v1265
        %v2045 = vpop.f32.mrf.mxu0
        %v2046 = vadd.f32 %v1877, %v2045
        %v2047 = vpop.f32.mrf.mxu0
        %v2048 = vadd.f32 %v1879, %v2047
        %2049 = vmatmul.bf16.gmra.mxu0 %v1267
        %v2050 = vpop.f32.mrf.mxu0
        %v2051 = vadd.f32 %v1882, %v2050
        %v2052 = vpop.f32.mrf.mxu0
        %v2053 = vadd.f32 %v1884, %v2052
        %2054 = vmatmul.bf16.gmra.mxu0 %v1269
        %v2055 = vpop.f32.mrf.mxu0
        %v2056 = vadd.f32 %v1887, %v2055
        %v2057 = vpop.f32.mrf.mxu0
        %v2058 = vadd.f32 %v1889, %v2057
        %2059 = vmatmul.bf16.gmra.mxu0 %v1271
        %v2060 = vpop.f32.mrf.mxu0
        %v2061 = vadd.f32 %v1892, %v2060
        %v2062 = vpop.f32.mrf.mxu0
        %v2063 = vadd.f32 %v1894, %v2062
        %2064 = vmatmul.bf16.gmra.mxu0 %v1273
        %v2065 = vpop.f32.mrf.mxu0
        %v2066 = vadd.f32 %v1897, %v2065
        %v2067 = vpop.f32.mrf.mxu0
        %v2068 = vadd.f32 %v1899, %v2067
        %2069 = vmatmul.bf16.gmra.mxu0 %v1275
        %v2070 = vpop.f32.mrf.mxu0
        %v2071 = vadd.f32 %v1902, %v2070
        %v2072 = vpop.f32.mrf.mxu0
        %v2073 = vadd.f32 %v1904, %v2072
        %2074 = vmatmul.bf16.gmra.mxu0 %v1277
        %v2075 = vpop.f32.mrf.mxu0
        %v2076 = vadd.f32 %v1907, %v2075
        %v2077 = vpop.f32.mrf.mxu0
        %v2078 = vadd.f32 %v1909, %v2077
        %2079 = vmatmul.bf16.gmra.mxu0 %v1279
        %v2080 = vpop.f32.mrf.mxu0
        %v2081 = vadd.f32 %v1912, %v2080
        %v2082 = vpop.f32.mrf.mxu0
        %v2083 = vadd.f32 %v1914, %v2082
        %2084 = vmatmul.bf16.gmra.mxu0 %v1281
        %v2085 = vpop.f32.mrf.mxu0
        %v2086 = vadd.f32 %v1917, %v2085
        %v2087 = vpop.f32.mrf.mxu0
        %v2088 = vadd.f32 %v1919, %v2087
        %2089 = vmatmul.bf16.gmra.mxu0 %v1283
        %v2090 = vpop.f32.mrf.mxu0
        %v2091 = vadd.f32 %v1922, %v2090
        %v2092 = vpop.f32.mrf.mxu0
        %v2093 = vadd.f32 %v1924, %v2092
        %2094 = vmatmul.bf16.gmra.mxu0 %v1285
        %v2095 = vpop.f32.mrf.mxu0
        %v2096 = vadd.f32 %v1927, %v2095
        %v2097 = vpop.f32.mrf.mxu0
        %v2098 = vadd.f32 %v1929, %v2097
        %2099 = vmatmul.bf16.gmra.mxu0 %v1287
        %v2100 = vpop.f32.mrf.mxu0
        %v2101 = vadd.f32 %v1932, %v2100
        %v2102 = vpop.f32.mrf.mxu0
        %v2103 = vadd.f32 %v1934, %v2102
        %2104 = vmatmul.bf16.gmra.mxu0 %v1289
        %v2105 = vpop.f32.mrf.mxu0
        %v2106 = vadd.f32 %v1937, %v2105
        %v2107 = vpop.f32.mrf.mxu0
        %v2108 = vadd.f32 %v1939, %v2107
        %2109 = vmatmul.bf16.gmra.mxu0 %v1291
        %v2110 = vpop.f32.mrf.mxu0
        %v2111 = vadd.f32 %v1942, %v2110
        %v2112 = vpop.f32.mrf.mxu0
        %v2113 = vadd.f32 %v1944, %v2112
        %2114 = vmatmul.bf16.gmra.mxu0 %v1293
        %v2115 = vpop.f32.mrf.mxu0
        %v2116 = vadd.f32 %v1947, %v2115
        %v2117 = vpop.f32.mrf.mxu0
        %v2118 = vadd.f32 %v1949, %v2117
        %2119 = vmatmul.bf16.gmra.mxu0 %v1295
        %v2120 = vpop.f32.mrf.mxu0
        %v2121 = vadd.f32 %v1952, %v2120
        %v2122 = vpop.f32.mrf.mxu0
        %v2123 = vadd.f32 %v1954, %v2122
        %2124 = vmatmul.bf16.gmra.mxu0 %v1297
        %v2125 = vpop.f32.mrf.mxu0
        %v2126 = vadd.f32 %v1957, %v2125
        %v2127 = vpop.f32.mrf.mxu0
        %v2128 = vadd.f32 %v1959, %v2127
        %2129 = vmatmul.bf16.gmra.mxu0 %v1299
        %v2130 = vpop.f32.mrf.mxu0
        %v2131 = vadd.f32 %v1962, %v2130
        %v2132 = vpop.f32.mrf.mxu0
        %v2133 = vadd.f32 %v1964, %v2132
        %2134 = vmatmul.bf16.gmra.mxu0 %v1301
        %v2135 = vpop.f32.mrf.mxu0
        %v2136 = vadd.f32 %v1967, %v2135
        %v2137 = vpop.f32.mrf.mxu0
        %v2138 = vadd.f32 %v1969, %v2137
        %2139 = vmatmul.bf16.gmra.mxu0 %v1303
        %v2140 = vpop.f32.mrf.mxu0
        %v2141 = vadd.f32 %v1972, %v2140
        %v2142 = vpop.f32.mrf.mxu0
        %v2143 = vadd.f32 %v1974, %v2142
        %2144 = vmatmul.bf16.gmra.mxu0 %v1305
        %v2145 = vpop.f32.mrf.mxu0
        %v2146 = vadd.f32 %v1977, %v2145
        %v2147 = vpop.f32.mrf.mxu0
        %v2148 = vadd.f32 %v1979, %v2147
        %2149 = vmatmul.bf16.gmra.mxu0 %v1307
        %v2150 = vpop.f32.mrf.mxu0
        %v2151 = vadd.f32 %v1982, %v2150
        %v2152 = vpop.f32.mrf.mxu0
        %v2153 = vadd.f32 %v1984, %v2152
        %2154 = vmatmul.bf16.gmra.mxu0 %v1309
        %v2155 = vpop.f32.mrf.mxu0
        %v2156 = vadd.f32 %v1987, %v2155
        %v2157 = vpop.f32.mrf.mxu0
        %v2158 = vadd.f32 %v1989, %v2157
        %2159 = vmatmul.bf16.gmra.mxu0 %v1311
        %v2160 = vpop.f32.mrf.mxu0
        %v2161 = vadd.f32 %v1992, %v2160
        %v2162 = vpop.f32.mrf.mxu0
        %v2163 = vadd.f32 %v1994, %v2162
        %2164 = vmatmul.bf16.gmra.mxu0 %v1313
        %v2165 = vpop.f32.mrf.mxu0
        %v2166 = vadd.f32 %v1997, %v2165
        %v2167 = vpop.f32.mrf.mxu0
        %v2168 = vadd.f32 %v1999, %v2167
        %2169 = vmatmul.bf16.gmra.mxu0 %v1315
        %v2170 = vpop.f32.mrf.mxu0
        %v2171 = vadd.f32 %v2002, %v2170
        %v2172 = vpop.f32.mrf.mxu0
        %v2173 = vadd.f32 %v2004, %v2172
        %2174 = vmatmul.bf16.gmra.mxu0 %v1317
        %v2175 = vpop.f32.mrf.mxu0
        %v2176 = vadd.f32 %v2007, %v2175
        %v2177 = vpop.f32.mrf.mxu0
        %v2178 = vadd.f32 %v2009, %v2177
        %2179 = vmatmul.bf16.gmra.mxu0 %v1319
        %v2180 = vpop.f32.mrf.mxu0
        %v2181 = vadd.f32 %v2012, %v2180
        %v2182 = vpop.f32.mrf.mxu0
        %v2183 = vadd.f32 %v2014, %v2182
        %2184 = vmatmul.bf16.gmra.mxu0 %v1321
        %v2185 = vpop.f32.mrf.mxu0
        %v2186 = vadd.f32 %v2017, %v2185
        %v2187 = vpop.f32.mrf.mxu0
        %v2188 = vadd.f32 %v2019, %v2187
        %2189 = vdwg.mxu0
        %v2190 = vadd.f32 %v1130, %v1693
        %v2191 = vadd.f32 %v1131, %v2031
        %v2192 = vadd.f32 %v1132, %v1695
        %v2193 = vadd.f32 %v1133, %v2033
        %v2194 = vadd.f32 %v1134, %v1698
        %v2195 = vadd.f32 %v1135, %v2036
        %v2196 = vadd.f32 %v1136, %v1700
        %v2197 = vadd.f32 %v1137, %v2038
        %v2198 = vadd.f32 %v1138, %v1703
        %v2199 = vadd.f32 %v1139, %v2041
        %v2200 = vadd.f32 %v1140, %v1705
        %v2201 = vadd.f32 %v1141, %v2043
        %v2202 = vadd.f32 %v1142, %v1708
        %v2203 = vadd.f32 %v1143, %v2046
        %v2204 = vadd.f32 %v1144, %v1710
        %v2205 = vadd.f32 %v1145, %v2048
        %v2206 = vadd.f32 %v1146, %v1713
        %v2207 = vadd.f32 %v1147, %v2051
        %v2208 = vadd.f32 %v1148, %v1715
        %v2209 = vadd.f32 %v1149, %v2053
        %v2210 = vadd.f32 %v1150, %v1718
        %v2211 = vadd.f32 %v1151, %v2056
        %v2212 = vadd.f32 %v1152, %v1720
        %v2213 = vadd.f32 %v1153, %v2058
        %v2214 = vadd.f32 %v1154, %v1723
        %v2215 = vadd.f32 %v1155, %v2061
        %v2216 = vadd.f32 %v1156, %v1725
        %v2217 = vadd.f32 %v1157, %v2063
        %v2218 = vadd.f32 %v1158, %v1728
        %v2219 = vadd.f32 %v1159, %v2066
        %v2220 = vadd.f32 %v1160, %v1730
        %v2221 = vadd.f32 %v1161, %v2068
        %v2222 = vadd.f32 %v1162, %v1733
        %v2223 = vadd.f32 %v1163, %v2071
        %v2224 = vadd.f32 %v1164, %v1735
        %v2225 = vadd.f32 %v1165, %v2073
        %v2226 = vadd.f32 %v1166, %v1738
        %v2227 = vadd.f32 %v1167, %v2076
        %v2228 = vadd.f32 %v1168, %v1740
        %v2229 = vadd.f32 %v1169, %v2078
        %v2230 = vadd.f32 %v1170, %v1743
        %v2231 = vadd.f32 %v1171, %v2081
        %v2232 = vadd.f32 %v1172, %v1745
        %v2233 = vadd.f32 %v1173, %v2083
        %v2234 = vadd.f32 %v1174, %v1748
        %v2235 = vadd.f32 %v1175, %v2086
        %v2236 = vadd.f32 %v1176, %v1750
        %v2237 = vadd.f32 %v1177, %v2088
        %v2238 = vadd.f32 %v1178, %v1753
        %v2239 = vadd.f32 %v1179, %v2091
        %v2240 = vadd.f32 %v1180, %v1755
        %v2241 = vadd.f32 %v1181, %v2093
        %v2242 = vadd.f32 %v1182, %v1758
        %v2243 = vadd.f32 %v1183, %v2096
        %v2244 = vadd.f32 %v1184, %v1760
        %v2245 = vadd.f32 %v1185, %v2098
        %v2246 = vadd.f32 %v1186, %v1763
        %v2247 = vadd.f32 %v1187, %v2101
        %v2248 = vadd.f32 %v1188, %v1765
        %v2249 = vadd.f32 %v1189, %v2103
        %v2250 = vadd.f32 %v1190, %v1768
        %v2251 = vadd.f32 %v1191, %v2106
        %v2252 = vadd.f32 %v1192, %v1770
        %v2253 = vadd.f32 %v1193, %v2108
        %v2254 = vadd.f32 %v1194, %v1773
        %v2255 = vadd.f32 %v1195, %v2111
        %v2256 = vadd.f32 %v1196, %v1775
        %v2257 = vadd.f32 %v1197, %v2113
        %v2258 = vadd.f32 %v1198, %v1778
        %v2259 = vadd.f32 %v1199, %v2116
        %v2260 = vadd.f32 %v1200, %v1780
        %v2261 = vadd.f32 %v1201, %v2118
        %v2262 = vadd.f32 %v1202, %v1783
        %v2263 = vadd.f32 %v1203, %v2121
        %v2264 = vadd.f32 %v1204, %v1785
        %v2265 = vadd.f32 %v1205, %v2123
        %v2266 = vadd.f32 %v1206, %v1788
        %v2267 = vadd.f32 %v1207, %v2126
        %v2268 = vadd.f32 %v1208, %v1790
        %v2269 = vadd.f32 %v1209, %v2128
        %v2270 = vadd.f32 %v1210, %v1793
        %v2271 = vadd.f32 %v1211, %v2131
        %v2272 = vadd.f32 %v1212, %v1795
        %v2273 = vadd.f32 %v1213, %v2133
        %v2274 = vadd.f32 %v1214, %v1798
        %v2275 = vadd.f32 %v1215, %v2136
        %v2276 = vadd.f32 %v1216, %v1800
        %v2277 = vadd.f32 %v1217, %v2138
        %v2278 = vadd.f32 %v1218, %v1803
        %v2279 = vadd.f32 %v1219, %v2141
        %v2280 = vadd.f32 %v1220, %v1805
        %v2281 = vadd.f32 %v1221, %v2143
        %v2282 = vadd.f32 %v1222, %v1808
        %v2283 = vadd.f32 %v1223, %v2146
        %v2284 = vadd.f32 %v1224, %v1810
        %v2285 = vadd.f32 %v1225, %v2148
        %v2286 = vadd.f32 %v1226, %v1813
        %v2287 = vadd.f32 %v1227, %v2151
        %v2288 = vadd.f32 %v1228, %v1815
        %v2289 = vadd.f32 %v1229, %v2153
        %v2290 = vadd.f32 %v1230, %v1818
        %v2291 = vadd.f32 %v1231, %v2156
        %v2292 = vadd.f32 %v1232, %v1820
        %v2293 = vadd.f32 %v1233, %v2158
        %v2294 = vadd.f32 %v1234, %v1823
        %v2295 = vadd.f32 %v1235, %v2161
        %v2296 = vadd.f32 %v1236, %v1825
        %v2297 = vadd.f32 %v1237, %v2163
        %v2298 = vadd.f32 %v1238, %v1828
        %v2299 = vadd.f32 %v1239, %v2166
        %v2300 = vadd.f32 %v1240, %v1830
        %v2301 = vadd.f32 %v1241, %v2168
        %v2302 = vadd.f32 %v1242, %v1833
        %v2303 = vadd.f32 %v1243, %v2171
        %v2304 = vadd.f32 %v1244, %v1835
        %v2305 = vadd.f32 %v1245, %v2173
        %v2306 = vadd.f32 %v1246, %v1838
        %v2307 = vadd.f32 %v1247, %v2176
        %v2308 = vadd.f32 %v1248, %v1840
        %v2309 = vadd.f32 %v1249, %v2178
        %v2310 = vadd.f32 %v1250, %v1843
        %v2311 = vadd.f32 %v1251, %v2181
        %v2312 = vadd.f32 %v1252, %v1845
        %v2313 = vadd.f32 %v1253, %v2183
        %v2314 = vadd.f32 %v1254, %v1848
        %v2315 = vadd.f32 %v1255, %v2186
        %v2316 = vadd.f32 %v1256, %v1850
        %v2317 = vadd.f32 %v1257, %v2188
        %2318 = vst [vmem:[%s328] sm:$0xff] %v2190
        %2319 = vst [vmem:[%s328 + $0x8] sm:$0xff] %v2191
        %2320 = vst [vmem:[%s328 + $0x10] sm:$0xff] %v2192
        %2321 = vst [vmem:[%s328 + $0x18] sm:$0xff] %v2193
        %2322 = vst [vmem:[%s328 + $0x20] sm:$0xff] %v2194
        %2323 = vst [vmem:[%s328 + $0x28] sm:$0xff] %v2195
        %2324 = vst [vmem:[%s328 + $0x30] sm:$0xff] %v2196
        %2325 = vst [vmem:[%s328 + $0x38] sm:$0xff] %v2197
        %2326 = vst [vmem:[%s328 + $0x40] sm:$0xff] %v2198
        %2327 = vst [vmem:[%s328 + $0x48] sm:$0xff] %v2199
        %2328 = vst [vmem:[%s328 + $0x50] sm:$0xff] %v2200
        %2329 = vst [vmem:[%s328 + $0x58] sm:$0xff] %v2201
        %2330 = vst [vmem:[%s328 + $0x60] sm:$0xff] %v2202
        %2331 = vst [vmem:[%s328 + $0x68] sm:$0xff] %v2203
        %2332 = vst [vmem:[%s328 + $0x70] sm:$0xff] %v2204
        %2333 = vst [vmem:[%s328 + $0x78] sm:$0xff] %v2205
        %2334 = vst [vmem:[%s328 + $0x80] sm:$0xff] %v2206
        %2335 = vst [vmem:[%s328 + $0x88] sm:$0xff] %v2207
        %2336 = vst [vmem:[%s328 + $0x90] sm:$0xff] %v2208
        %2337 = vst [vmem:[%s328 + $0x98] sm:$0xff] %v2209
        %2338 = vst [vmem:[%s328 + $0xa0] sm:$0xff] %v2210
        %2339 = vst [vmem:[%s328 + $0xa8] sm:$0xff] %v2211
        %2340 = vst [vmem:[%s328 + $0xb0] sm:$0xff] %v2212
        %2341 = vst [vmem:[%s328 + $0xb8] sm:$0xff] %v2213
        %2342 = vst [vmem:[%s328 + $0xc0] sm:$0xff] %v2214
        %2343 = vst [vmem:[%s328 + $0xc8] sm:$0xff] %v2215
        %2344 = vst [vmem:[%s328 + $0xd0] sm:$0xff] %v2216
        %2345 = vst [vmem:[%s328 + $0xd8] sm:$0xff] %v2217
        %2346 = vst [vmem:[%s328 + $0xe0] sm:$0xff] %v2218
        %2347 = vst [vmem:[%s328 + $0xe8] sm:$0xff] %v2219
        %2348 = vst [vmem:[%s328 + $0xf0] sm:$0xff] %v2220
        %2349 = vst [vmem:[%s328 + $0xf8] sm:$0xff] %v2221
        %2350 = vst [vmem:[%s328 + $0x100] sm:$0xff] %v2222
        %2351 = vst [vmem:[%s328 + $0x108] sm:$0xff] %v2223
        %2352 = vst [vmem:[%s328 + $0x110] sm:$0xff] %v2224
        %2353 = vst [vmem:[%s328 + $0x118] sm:$0xff] %v2225
        %2354 = vst [vmem:[%s328 + $0x120] sm:$0xff] %v2226
        %2355 = vst [vmem:[%s328 + $0x128] sm:$0xff] %v2227
        %2356 = vst [vmem:[%s328 + $0x130] sm:$0xff] %v2228
        %2357 = vst [vmem:[%s328 + $0x138] sm:$0xff] %v2229
        %2358 = vst [vmem:[%s328 + $0x140] sm:$0xff] %v2230
        %2359 = vst [vmem:[%s328 + $0x148] sm:$0xff] %v2231
        %2360 = vst [vmem:[%s328 + $0x150] sm:$0xff] %v2232
        %2361 = vst [vmem:[%s328 + $0x158] sm:$0xff] %v2233
        %2362 = vst [vmem:[%s328 + $0x160] sm:$0xff] %v2234
        %2363 = vst [vmem:[%s328 + $0x168] sm:$0xff] %v2235
        %2364 = vst [vmem:[%s328 + $0x170] sm:$0xff] %v2236
        %2365 = vst [vmem:[%s328 + $0x178] sm:$0xff] %v2237
        %2366 = vst [vmem:[%s328 + $0x180] sm:$0xff] %v2238
        %2367 = vst [vmem:[%s328 + $0x188] sm:$0xff] %v2239
        %2368 = vst [vmem:[%s328 + $0x190] sm:$0xff] %v2240
        %2369 = vst [vmem:[%s328 + $0x198] sm:$0xff] %v2241
        %2370 = vst [vmem:[%s328 + $0x1a0] sm:$0xff] %v2242
        %2371 = vst [vmem:[%s328 + $0x1a8] sm:$0xff] %v2243
        %2372 = vst [vmem:[%s328 + $0x1b0] sm:$0xff] %v2244
        %2373 = vst [vmem:[%s328 + $0x1b8] sm:$0xff] %v2245
        %2374 = vst [vmem:[%s328 + $0x1c0] sm:$0xff] %v2246
        %2375 = vst [vmem:[%s328 + $0x1c8] sm:$0xff] %v2247
        %2376 = vst [vmem:[%s328 + $0x1d0] sm:$0xff] %v2248
        %2377 = vst [vmem:[%s328 + $0x1d8] sm:$0xff] %v2249
        %2378 = vst [vmem:[%s328 + $0x1e0] sm:$0xff] %v2250
        %2379 = vst [vmem:[%s328 + $0x1e8] sm:$0xff] %v2251
        %2380 = vst [vmem:[%s328 + $0x1f0] sm:$0xff] %v2252
        %2381 = vst [vmem:[%s328 + $0x1f8] sm:$0xff] %v2253
        %2382 = vst [vmem:[%s328 + $0x200] sm:$0xff] %v2254
        %2383 = vst [vmem:[%s328 + $0x208] sm:$0xff] %v2255
        %2384 = vst [vmem:[%s328 + $0x210] sm:$0xff] %v2256
        %2385 = vst [vmem:[%s328 + $0x218] sm:$0xff] %v2257
        %2386 = vst [vmem:[%s328 + $0x220] sm:$0xff] %v2258
        %2387 = vst [vmem:[%s328 + $0x228] sm:$0xff] %v2259
        %2388 = vst [vmem:[%s328 + $0x230] sm:$0xff] %v2260
        %2389 = vst [vmem:[%s328 + $0x238] sm:$0xff] %v2261
        %2390 = vst [vmem:[%s328 + $0x240] sm:$0xff] %v2262
        %2391 = vst [vmem:[%s328 + $0x248] sm:$0xff] %v2263
        %2392 = vst [vmem:[%s328 + $0x250] sm:$0xff] %v2264
        %2393 = vst [vmem:[%s328 + $0x258] sm:$0xff] %v2265
        %2394 = vst [vmem:[%s328 + $0x260] sm:$0xff] %v2266
        %2395 = vst [vmem:[%s328 + $0x268] sm:$0xff] %v2267
        %2396 = vst [vmem:[%s328 + $0x270] sm:$0xff] %v2268
        %2397 = vst [vmem:[%s328 + $0x278] sm:$0xff] %v2269
        %2398 = vst [vmem:[%s328 + $0x280] sm:$0xff] %v2270
        %2399 = vst [vmem:[%s328 + $0x288] sm:$0xff] %v2271
        %2400 = vst [vmem:[%s328 + $0x290] sm:$0xff] %v2272
        %2401 = vst [vmem:[%s328 + $0x298] sm:$0xff] %v2273
        %2402 = vst [vmem:[%s328 + $0x2a0] sm:$0xff] %v2274
        %2403 = vst [vmem:[%s328 + $0x2a8] sm:$0xff] %v2275
        %2404 = vst [vmem:[%s328 + $0x2b0] sm:$0xff] %v2276
        %2405 = vst [vmem:[%s328 + $0x2b8] sm:$0xff] %v2277
        %2406 = vst [vmem:[%s328 + $0x2c0] sm:$0xff] %v2278
        %2407 = vst [vmem:[%s328 + $0x2c8] sm:$0xff] %v2279
        %2408 = vst [vmem:[%s328 + $0x2d0] sm:$0xff] %v2280
        %2409 = vst [vmem:[%s328 + $0x2d8] sm:$0xff] %v2281
        %2410 = vst [vmem:[%s328 + $0x2e0] sm:$0xff] %v2282
        %2411 = vst [vmem:[%s328 + $0x2e8] sm:$0xff] %v2283
        %2412 = vst [vmem:[%s328 + $0x2f0] sm:$0xff] %v2284
        %2413 = vst [vmem:[%s328 + $0x2f8] sm:$0xff] %v2285
        %2414 = vst [vmem:[%s328 + $0x300] sm:$0xff] %v2286
        %2415 = vst [vmem:[%s328 + $0x308] sm:$0xff] %v2287
        %2416 = vst [vmem:[%s328 + $0x310] sm:$0xff] %v2288
        %2417 = vst [vmem:[%s328 + $0x318] sm:$0xff] %v2289
        %2418 = vst [vmem:[%s328 + $0x320] sm:$0xff] %v2290
        %2419 = vst [vmem:[%s328 + $0x328] sm:$0xff] %v2291
        %2420 = vst [vmem:[%s328 + $0x330] sm:$0xff] %v2292
        %2421 = vst [vmem:[%s328 + $0x338] sm:$0xff] %v2293
        %2422 = vst [vmem:[%s328 + $0x340] sm:$0xff] %v2294
        %2423 = vst [vmem:[%s328 + $0x348] sm:$0xff] %v2295
        %2424 = vst [vmem:[%s328 + $0x350] sm:$0xff] %v2296
        %2425 = vst [vmem:[%s328 + $0x358] sm:$0xff] %v2297
        %2426 = vst [vmem:[%s328 + $0x360] sm:$0xff] %v2298
        %2427 = vst [vmem:[%s328 + $0x368] sm:$0xff] %v2299
        %2428 = vst [vmem:[%s328 + $0x370] sm:$0xff] %v2300
        %2429 = vst [vmem:[%s328 + $0x378] sm:$0xff] %v2301
        %2430 = vst [vmem:[%s328 + $0x380] sm:$0xff] %v2302
        %2431 = vst [vmem:[%s328 + $0x388] sm:$0xff] %v2303
        %2432 = vst [vmem:[%s328 + $0x390] sm:$0xff] %v2304
        %2433 = vst [vmem:[%s328 + $0x398] sm:$0xff] %v2305
        %2434 = vst [vmem:[%s328 + $0x3a0] sm:$0xff] %v2306
        %2435 = vst [vmem:[%s328 + $0x3a8] sm:$0xff] %v2307
        %2436 = vst [vmem:[%s328 + $0x3b0] sm:$0xff] %v2308
        %2437 = vst [vmem:[%s328 + $0x3b8] sm:$0xff] %v2309
        %2438 = vst [vmem:[%s328 + $0x3c0] sm:$0xff] %v2310
        %2439 = vst [vmem:[%s328 + $0x3c8] sm:$0xff] %v2311
        %2440 = vst [vmem:[%s328 + $0x3d0] sm:$0xff] %v2312
        %2441 = vst [vmem:[%s328 + $0x3d8] sm:$0xff] %v2313
        %2442 = vst [vmem:[%s328 + $0x3e0] sm:$0xff] %v2314
        %2443 = vst [vmem:[%s328 + $0x3e8] sm:$0xff] %v2315
        %2444 = vst [vmem:[%s328 + $0x3f0] sm:$0xff] %v2316
        %2445 = vst [vmem:[%s328 + $0x3f8] sm:$0xff] %v2317
        // Predicated region
        $region61: #{mlp_forward.1} parent=39 // pred_check
          %p2446 = pneg %p334
        $region62: #{mlp_forward.1} parent=39 // pred_check_branch
          %2448 = sbr.rel (%p2446) target = $region64
        $region63: #{mlp_forward.1} parent=39 // pred_region
          %v2449 = vld [vmem:[%s328] sm:$0xff]
          %v2450 = vld [vmem:[%s328 + $0x8] sm:$0xff]
          %v2451 = vld [vmem:[%s328 + $0x10] sm:$0xff]
          %v2452 = vld [vmem:[%s328 + $0x18] sm:$0xff]
          %v2453 = vld [vmem:[%s328 + $0x20] sm:$0xff]
          %v2454 = vld [vmem:[%s328 + $0x28] sm:$0xff]
          %v2455 = vld [vmem:[%s328 + $0x30] sm:$0xff]
          %v2456 = vld [vmem:[%s328 + $0x38] sm:$0xff]
          %v2457 = vld [vmem:[%s328 + $0x40] sm:$0xff]
          %v2458 = vld [vmem:[%s328 + $0x48] sm:$0xff]
          %v2459 = vld [vmem:[%s328 + $0x50] sm:$0xff]
          %v2460 = vld [vmem:[%s328 + $0x58] sm:$0xff]
          %v2461 = vld [vmem:[%s328 + $0x60] sm:$0xff]
          %v2462 = vld [vmem:[%s328 + $0x68] sm:$0xff]
          %v2463 = vld [vmem:[%s328 + $0x70] sm:$0xff]
          %v2464 = vld [vmem:[%s328 + $0x78] sm:$0xff]
          %v2465 = vld [vmem:[%s328 + $0x80] sm:$0xff]
          %v2466 = vld [vmem:[%s328 + $0x88] sm:$0xff]
          %v2467 = vld [vmem:[%s328 + $0x90] sm:$0xff]
          %v2468 = vld [vmem:[%s328 + $0x98] sm:$0xff]
          %v2469 = vld [vmem:[%s328 + $0xa0] sm:$0xff]
          %v2470 = vld [vmem:[%s328 + $0xa8] sm:$0xff]
          %v2471 = vld [vmem:[%s328 + $0xb0] sm:$0xff]
          %v2472 = vld [vmem:[%s328 + $0xb8] sm:$0xff]
          %v2473 = vld [vmem:[%s328 + $0xc0] sm:$0xff]
          %v2474 = vld [vmem:[%s328 + $0xc8] sm:$0xff]
          %v2475 = vld [vmem:[%s328 + $0xd0] sm:$0xff]
          %v2476 = vld [vmem:[%s328 + $0xd8] sm:$0xff]
          %v2477 = vld [vmem:[%s328 + $0xe0] sm:$0xff]
          %v2478 = vld [vmem:[%s328 + $0xe8] sm:$0xff]
          %v2479 = vld [vmem:[%s328 + $0xf0] sm:$0xff]
          %v2480 = vld [vmem:[%s328 + $0xf8] sm:$0xff]
          %v2481 = vld [vmem:[%s328 + $0x100] sm:$0xff]
          %v2482 = vld [vmem:[%s328 + $0x108] sm:$0xff]
          %v2483 = vld [vmem:[%s328 + $0x110] sm:$0xff]
          %v2484 = vld [vmem:[%s328 + $0x118] sm:$0xff]
          %v2485 = vld [vmem:[%s328 + $0x120] sm:$0xff]
          %v2486 = vld [vmem:[%s328 + $0x128] sm:$0xff]
          %v2487 = vld [vmem:[%s328 + $0x130] sm:$0xff]
          %v2488 = vld [vmem:[%s328 + $0x138] sm:$0xff]
          %v2489 = vld [vmem:[%s328 + $0x140] sm:$0xff]
          %v2490 = vld [vmem:[%s328 + $0x148] sm:$0xff]
          %v2491 = vld [vmem:[%s328 + $0x150] sm:$0xff]
          %v2492 = vld [vmem:[%s328 + $0x158] sm:$0xff]
          %v2493 = vld [vmem:[%s328 + $0x160] sm:$0xff]
          %v2494 = vld [vmem:[%s328 + $0x168] sm:$0xff]
          %v2495 = vld [vmem:[%s328 + $0x170] sm:$0xff]
          %v2496 = vld [vmem:[%s328 + $0x178] sm:$0xff]
          %v2497 = vld [vmem:[%s328 + $0x180] sm:$0xff]
          %v2498 = vld [vmem:[%s328 + $0x188] sm:$0xff]
          %v2499 = vld [vmem:[%s328 + $0x190] sm:$0xff]
          %v2500 = vld [vmem:[%s328 + $0x198] sm:$0xff]
          %v2501 = vld [vmem:[%s328 + $0x1a0] sm:$0xff]
          %v2502 = vld [vmem:[%s328 + $0x1a8] sm:$0xff]
          %v2503 = vld [vmem:[%s328 + $0x1b0] sm:$0xff]
          %v2504 = vld [vmem:[%s328 + $0x1b8] sm:$0xff]
          %v2505 = vld [vmem:[%s328 + $0x1c0] sm:$0xff]
          %v2506 = vld [vmem:[%s328 + $0x1c8] sm:$0xff]
          %v2507 = vld [vmem:[%s328 + $0x1d0] sm:$0xff]
          %v2508 = vld [vmem:[%s328 + $0x1d8] sm:$0xff]
          %v2509 = vld [vmem:[%s328 + $0x1e0] sm:$0xff]
          %v2510 = vld [vmem:[%s328 + $0x1e8] sm:$0xff]
          %v2511 = vld [vmem:[%s328 + $0x1f0] sm:$0xff]
          %v2512 = vld [vmem:[%s328 + $0x1f8] sm:$0xff]
          %v2513 = vld [vmem:[%s328 + $0x200] sm:$0xff]
          %v2514 = vld [vmem:[%s328 + $0x208] sm:$0xff]
          %v2515 = vld [vmem:[%s328 + $0x210] sm:$0xff]
          %v2516 = vld [vmem:[%s328 + $0x218] sm:$0xff]
          %v2517 = vld [vmem:[%s328 + $0x220] sm:$0xff]
          %v2518 = vld [vmem:[%s328 + $0x228] sm:$0xff]
          %v2519 = vld [vmem:[%s328 + $0x230] sm:$0xff]
          %v2520 = vld [vmem:[%s328 + $0x238] sm:$0xff]
          %v2521 = vld [vmem:[%s328 + $0x240] sm:$0xff]
          %v2522 = vld [vmem:[%s328 + $0x248] sm:$0xff]
          %v2523 = vld [vmem:[%s328 + $0x250] sm:$0xff]
          %v2524 = vld [vmem:[%s328 + $0x258] sm:$0xff]
          %v2525 = vld [vmem:[%s328 + $0x260] sm:$0xff]
          %v2526 = vld [vmem:[%s328 + $0x268] sm:$0xff]
          %v2527 = vld [vmem:[%s328 + $0x270] sm:$0xff]
          %v2528 = vld [vmem:[%s328 + $0x278] sm:$0xff]
          %v2529 = vld [vmem:[%s328 + $0x280] sm:$0xff]
          %v2530 = vld [vmem:[%s328 + $0x288] sm:$0xff]
          %v2531 = vld [vmem:[%s328 + $0x290] sm:$0xff]
          %v2532 = vld [vmem:[%s328 + $0x298] sm:$0xff]
          %v2533 = vld [vmem:[%s328 + $0x2a0] sm:$0xff]
          %v2534 = vld [vmem:[%s328 + $0x2a8] sm:$0xff]
          %v2535 = vld [vmem:[%s328 + $0x2b0] sm:$0xff]
          %v2536 = vld [vmem:[%s328 + $0x2b8] sm:$0xff]
          %v2537 = vld [vmem:[%s328 + $0x2c0] sm:$0xff]
          %v2538 = vld [vmem:[%s328 + $0x2c8] sm:$0xff]
          %v2539 = vld [vmem:[%s328 + $0x2d0] sm:$0xff]
          %v2540 = vld [vmem:[%s328 + $0x2d8] sm:$0xff]
          %v2541 = vld [vmem:[%s328 + $0x2e0] sm:$0xff]
          %v2542 = vld [vmem:[%s328 + $0x2e8] sm:$0xff]
          %v2543 = vld [vmem:[%s328 + $0x2f0] sm:$0xff]
          %v2544 = vld [vmem:[%s328 + $0x2f8] sm:$0xff]
          %v2545 = vld [vmem:[%s328 + $0x300] sm:$0xff]
          %v2546 = vld [vmem:[%s328 + $0x308] sm:$0xff]
          %v2547 = vld [vmem:[%s328 + $0x310] sm:$0xff]
          %v2548 = vld [vmem:[%s328 + $0x318] sm:$0xff]
          %v2549 = vld [vmem:[%s328 + $0x320] sm:$0xff]
          %v2550 = vld [vmem:[%s328 + $0x328] sm:$0xff]
          %v2551 = vld [vmem:[%s328 + $0x330] sm:$0xff]
          %v2552 = vld [vmem:[%s328 + $0x338] sm:$0xff]
          %v2553 = vld [vmem:[%s328 + $0x340] sm:$0xff]
          %v2554 = vld [vmem:[%s328 + $0x348] sm:$0xff]
          %v2555 = vld [vmem:[%s328 + $0x350] sm:$0xff]
          %v2556 = vld [vmem:[%s328 + $0x358] sm:$0xff]
          %v2557 = vld [vmem:[%s328 + $0x360] sm:$0xff]
          %v2558 = vld [vmem:[%s328 + $0x368] sm:$0xff]
          %v2559 = vld [vmem:[%s328 + $0x370] sm:$0xff]
          %v2560 = vld [vmem:[%s328 + $0x378] sm:$0xff]
          %v2561 = vld [vmem:[%s328 + $0x380] sm:$0xff]
          %v2562 = vld [vmem:[%s328 + $0x388] sm:$0xff]
          %v2563 = vld [vmem:[%s328 + $0x390] sm:$0xff]
          %v2564 = vld [vmem:[%s328 + $0x398] sm:$0xff]
          %v2565 = vld [vmem:[%s328 + $0x3a0] sm:$0xff]
          %v2566 = vld [vmem:[%s328 + $0x3a8] sm:$0xff]
          %v2567 = vld [vmem:[%s328 + $0x3b0] sm:$0xff]
          %v2568 = vld [vmem:[%s328 + $0x3b8] sm:$0xff]
          %v2569 = vld [vmem:[%s328 + $0x3c0] sm:$0xff]
          %v2570 = vld [vmem:[%s328 + $0x3c8] sm:$0xff]
          %v2571 = vld [vmem:[%s328 + $0x3d0] sm:$0xff]
          %v2572 = vld [vmem:[%s328 + $0x3d8] sm:$0xff]
          %v2573 = vld [vmem:[%s328 + $0x3e0] sm:$0xff]
          %v2574 = vld [vmem:[%s328 + $0x3e8] sm:$0xff]
          %v2575 = vld [vmem:[%s328 + $0x3f0] sm:$0xff]
          %v2576 = vld [vmem:[%s328 + $0x3f8] sm:$0xff]
          %v2577 = vld [vmem:[%s4] sm:$0x3]
          %v2579 = vperm.slane %v2577, 0
          %v2580 = vperm.slane %v2577, 1
          %v2583 = vadd.f32 %v2449, %v2579
          %v2584 = vadd.f32 %v2450, %v2580
          %v2585 = vadd.f32 %v2451, %v2579
          %v2586 = vadd.f32 %v2452, %v2580
          %v2587 = vadd.f32 %v2453, %v2579
          %v2588 = vadd.f32 %v2454, %v2580
          %v2589 = vadd.f32 %v2455, %v2579
          %v2590 = vadd.f32 %v2456, %v2580
          %v2591 = vadd.f32 %v2457, %v2579
          %v2592 = vadd.f32 %v2458, %v2580
          %v2593 = vadd.f32 %v2459, %v2579
          %v2594 = vadd.f32 %v2460, %v2580
          %v2595 = vadd.f32 %v2461, %v2579
          %v2596 = vadd.f32 %v2462, %v2580
          %v2597 = vadd.f32 %v2463, %v2579
          %v2598 = vadd.f32 %v2464, %v2580
          %v2599 = vadd.f32 %v2465, %v2579
          %v2600 = vadd.f32 %v2466, %v2580
          %v2601 = vadd.f32 %v2467, %v2579
          %v2602 = vadd.f32 %v2468, %v2580
          %v2603 = vadd.f32 %v2469, %v2579
          %v2604 = vadd.f32 %v2470, %v2580
          %v2605 = vadd.f32 %v2471, %v2579
          %v2606 = vadd.f32 %v2472, %v2580
          %v2607 = vadd.f32 %v2473, %v2579
          %v2608 = vadd.f32 %v2474, %v2580
          %v2609 = vadd.f32 %v2475, %v2579
          %v2610 = vadd.f32 %v2476, %v2580
          %v2611 = vadd.f32 %v2477, %v2579
          %v2612 = vadd.f32 %v2478, %v2580
          %v2613 = vadd.f32 %v2479, %v2579
          %v2614 = vadd.f32 %v2480, %v2580
          %v2615 = vadd.f32 %v2481, %v2579
          %v2616 = vadd.f32 %v2482, %v2580
          %v2617 = vadd.f32 %v2483, %v2579
          %v2618 = vadd.f32 %v2484, %v2580
          %v2619 = vadd.f32 %v2485, %v2579
          %v2620 = vadd.f32 %v2486, %v2580
          %v2621 = vadd.f32 %v2487, %v2579
          %v2622 = vadd.f32 %v2488, %v2580
          %v2623 = vadd.f32 %v2489, %v2579
          %v2624 = vadd.f32 %v2490, %v2580
          %v2625 = vadd.f32 %v2491, %v2579
          %v2626 = vadd.f32 %v2492, %v2580
          %v2627 = vadd.f32 %v2493, %v2579
          %v2628 = vadd.f32 %v2494, %v2580
          %v2629 = vadd.f32 %v2495, %v2579
          %v2630 = vadd.f32 %v2496, %v2580
          %v2631 = vadd.f32 %v2497, %v2579
          %v2632 = vadd.f32 %v2498, %v2580
          %v2633 = vadd.f32 %v2499, %v2579
          %v2634 = vadd.f32 %v2500, %v2580
          %v2635 = vadd.f32 %v2501, %v2579
          %v2636 = vadd.f32 %v2502, %v2580
          %v2637 = vadd.f32 %v2503, %v2579
          %v2638 = vadd.f32 %v2504, %v2580
          %v2639 = vadd.f32 %v2505, %v2579
          %v2640 = vadd.f32 %v2506, %v2580
          %v2641 = vadd.f32 %v2507, %v2579
          %v2642 = vadd.f32 %v2508, %v2580
          %v2643 = vadd.f32 %v2509, %v2579
          %v2644 = vadd.f32 %v2510, %v2580
          %v2645 = vadd.f32 %v2511, %v2579
          %v2646 = vadd.f32 %v2512, %v2580
          %v2647 = vadd.f32 %v2513, %v2579
          %v2648 = vadd.f32 %v2514, %v2580
          %v2649 = vadd.f32 %v2515, %v2579
          %v2650 = vadd.f32 %v2516, %v2580
          %v2651 = vadd.f32 %v2517, %v2579
          %v2652 = vadd.f32 %v2518, %v2580
          %v2653 = vadd.f32 %v2519, %v2579
          %v2654 = vadd.f32 %v2520, %v2580
          %v2655 = vadd.f32 %v2521, %v2579
          %v2656 = vadd.f32 %v2522, %v2580
          %v2657 = vadd.f32 %v2523, %v2579
          %v2658 = vadd.f32 %v2524, %v2580
          %v2659 = vadd.f32 %v2525, %v2579
          %v2660 = vadd.f32 %v2526, %v2580
          %v2661 = vadd.f32 %v2527, %v2579
          %v2662 = vadd.f32 %v2528, %v2580
          %v2663 = vadd.f32 %v2529, %v2579
          %v2664 = vadd.f32 %v2530, %v2580
          %v2665 = vadd.f32 %v2531, %v2579
          %v2666 = vadd.f32 %v2532, %v2580
          %v2667 = vadd.f32 %v2533, %v2579
          %v2668 = vadd.f32 %v2534, %v2580
          %v2669 = vadd.f32 %v2535, %v2579
          %v2670 = vadd.f32 %v2536, %v2580
          %v2671 = vadd.f32 %v2537, %v2579
          %v2672 = vadd.f32 %v2538, %v2580
          %v2673 = vadd.f32 %v2539, %v2579
          %v2674 = vadd.f32 %v2540, %v2580
          %v2675 = vadd.f32 %v2541, %v2579
          %v2676 = vadd.f32 %v2542, %v2580
          %v2677 = vadd.f32 %v2543, %v2579
          %v2678 = vadd.f32 %v2544, %v2580
          %v2679 = vadd.f32 %v2545, %v2579
          %v2680 = vadd.f32 %v2546, %v2580
          %v2681 = vadd.f32 %v2547, %v2579
          %v2682 = vadd.f32 %v2548, %v2580
          %v2683 = vadd.f32 %v2549, %v2579
          %v2684 = vadd.f32 %v2550, %v2580
          %v2685 = vadd.f32 %v2551, %v2579
          %v2686 = vadd.f32 %v2552, %v2580
          %v2687 = vadd.f32 %v2553, %v2579
          %v2688 = vadd.f32 %v2554, %v2580
          %v2689 = vadd.f32 %v2555, %v2579
          %v2690 = vadd.f32 %v2556, %v2580
          %v2691 = vadd.f32 %v2557, %v2579
          %v2692 = vadd.f32 %v2558, %v2580
          %v2693 = vadd.f32 %v2559, %v2579
          %v2694 = vadd.f32 %v2560, %v2580
          %v2695 = vadd.f32 %v2561, %v2579
          %v2696 = vadd.f32 %v2562, %v2580
          %v2697 = vadd.f32 %v2563, %v2579
          %v2698 = vadd.f32 %v2564, %v2580
          %v2699 = vadd.f32 %v2565, %v2579
          %v2700 = vadd.f32 %v2566, %v2580
          %v2701 = vadd.f32 %v2567, %v2579
          %v2702 = vadd.f32 %v2568, %v2580
          %v2703 = vadd.f32 %v2569, %v2579
          %v2704 = vadd.f32 %v2570, %v2580
          %v2705 = vadd.f32 %v2571, %v2579
          %v2706 = vadd.f32 %v2572, %v2580
          %v2707 = vadd.f32 %v2573, %v2579
          %v2708 = vadd.f32 %v2574, %v2580
          %v2709 = vadd.f32 %v2575, %v2579
          %v2710 = vadd.f32 %v2576, %v2580
          %2711 = vst [vmem:[%s328] sm:$0xff] %v2583
          %2712 = vst [vmem:[%s328 + $0x8] sm:$0xff] %v2584
          %2713 = vst [vmem:[%s328 + $0x10] sm:$0xff] %v2585
          %2714 = vst [vmem:[%s328 + $0x18] sm:$0xff] %v2586
          %2715 = vst [vmem:[%s328 + $0x20] sm:$0xff] %v2587
          %2716 = vst [vmem:[%s328 + $0x28] sm:$0xff] %v2588
          %2717 = vst [vmem:[%s328 + $0x30] sm:$0xff] %v2589
          %2718 = vst [vmem:[%s328 + $0x38] sm:$0xff] %v2590
          %2719 = vst [vmem:[%s328 + $0x40] sm:$0xff] %v2591
          %2720 = vst [vmem:[%s328 + $0x48] sm:$0xff] %v2592
          %2721 = vst [vmem:[%s328 + $0x50] sm:$0xff] %v2593
          %2722 = vst [vmem:[%s328 + $0x58] sm:$0xff] %v2594
          %2723 = vst [vmem:[%s328 + $0x60] sm:$0xff] %v2595
          %2724 = vst [vmem:[%s328 + $0x68] sm:$0xff] %v2596
          %2725 = vst [vmem:[%s328 + $0x70] sm:$0xff] %v2597
          %2726 = vst [vmem:[%s328 + $0x78] sm:$0xff] %v2598
          %2727 = vst [vmem:[%s328 + $0x80] sm:$0xff] %v2599
          %2728 = vst [vmem:[%s328 + $0x88] sm:$0xff] %v2600
          %2729 = vst [vmem:[%s328 + $0x90] sm:$0xff] %v2601
          %2730 = vst [vmem:[%s328 + $0x98] sm:$0xff] %v2602
          %2731 = vst [vmem:[%s328 + $0xa0] sm:$0xff] %v2603
          %2732 = vst [vmem:[%s328 + $0xa8] sm:$0xff] %v2604
          %2733 = vst [vmem:[%s328 + $0xb0] sm:$0xff] %v2605
          %2734 = vst [vmem:[%s328 + $0xb8] sm:$0xff] %v2606
          %2735 = vst [vmem:[%s328 + $0xc0] sm:$0xff] %v2607
          %2736 = vst [vmem:[%s328 + $0xc8] sm:$0xff] %v2608
          %2737 = vst [vmem:[%s328 + $0xd0] sm:$0xff] %v2609
          %2738 = vst [vmem:[%s328 + $0xd8] sm:$0xff] %v2610
          %2739 = vst [vmem:[%s328 + $0xe0] sm:$0xff] %v2611
          %2740 = vst [vmem:[%s328 + $0xe8] sm:$0xff] %v2612
          %2741 = vst [vmem:[%s328 + $0xf0] sm:$0xff] %v2613
          %2742 = vst [vmem:[%s328 + $0xf8] sm:$0xff] %v2614
          %2743 = vst [vmem:[%s328 + $0x100] sm:$0xff] %v2615
          %2744 = vst [vmem:[%s328 + $0x108] sm:$0xff] %v2616
          %2745 = vst [vmem:[%s328 + $0x110] sm:$0xff] %v2617
          %2746 = vst [vmem:[%s328 + $0x118] sm:$0xff] %v2618
          %2747 = vst [vmem:[%s328 + $0x120] sm:$0xff] %v2619
          %2748 = vst [vmem:[%s328 + $0x128] sm:$0xff] %v2620
          %2749 = vst [vmem:[%s328 + $0x130] sm:$0xff] %v2621
          %2750 = vst [vmem:[%s328 + $0x138] sm:$0xff] %v2622
          %2751 = vst [vmem:[%s328 + $0x140] sm:$0xff] %v2623
          %2752 = vst [vmem:[%s328 + $0x148] sm:$0xff] %v2624
          %2753 = vst [vmem:[%s328 + $0x150] sm:$0xff] %v2625
          %2754 = vst [vmem:[%s328 + $0x158] sm:$0xff] %v2626
          %2755 = vst [vmem:[%s328 + $0x160] sm:$0xff] %v2627
          %2756 = vst [vmem:[%s328 + $0x168] sm:$0xff] %v2628
          %2757 = vst [vmem:[%s328 + $0x170] sm:$0xff] %v2629
          %2758 = vst [vmem:[%s328 + $0x178] sm:$0xff] %v2630
          %2759 = vst [vmem:[%s328 + $0x180] sm:$0xff] %v2631
          %2760 = vst [vmem:[%s328 + $0x188] sm:$0xff] %v2632
          %2761 = vst [vmem:[%s328 + $0x190] sm:$0xff] %v2633
          %2762 = vst [vmem:[%s328 + $0x198] sm:$0xff] %v2634
          %2763 = vst [vmem:[%s328 + $0x1a0] sm:$0xff] %v2635
          %2764 = vst [vmem:[%s328 + $0x1a8] sm:$0xff] %v2636
          %2765 = vst [vmem:[%s328 + $0x1b0] sm:$0xff] %v2637
          %2766 = vst [vmem:[%s328 + $0x1b8] sm:$0xff] %v2638
          %2767 = vst [vmem:[%s328 + $0x1c0] sm:$0xff] %v2639
          %2768 = vst [vmem:[%s328 + $0x1c8] sm:$0xff] %v2640
          %2769 = vst [vmem:[%s328 + $0x1d0] sm:$0xff] %v2641
          %2770 = vst [vmem:[%s328 + $0x1d8] sm:$0xff] %v2642
          %2771 = vst [vmem:[%s328 + $0x1e0] sm:$0xff] %v2643
          %2772 = vst [vmem:[%s328 + $0x1e8] sm:$0xff] %v2644
          %2773 = vst [vmem:[%s328 + $0x1f0] sm:$0xff] %v2645
          %2774 = vst [vmem:[%s328 + $0x1f8] sm:$0xff] %v2646
          %2775 = vst [vmem:[%s328 + $0x200] sm:$0xff] %v2647
          %2776 = vst [vmem:[%s328 + $0x208] sm:$0xff] %v2648
          %2777 = vst [vmem:[%s328 + $0x210] sm:$0xff] %v2649
          %2778 = vst [vmem:[%s328 + $0x218] sm:$0xff] %v2650
          %2779 = vst [vmem:[%s328 + $0x220] sm:$0xff] %v2651
          %2780 = vst [vmem:[%s328 + $0x228] sm:$0xff] %v2652
          %2781 = vst [vmem:[%s328 + $0x230] sm:$0xff] %v2653
          %2782 = vst [vmem:[%s328 + $0x238] sm:$0xff] %v2654
          %2783 = vst [vmem:[%s328 + $0x240] sm:$0xff] %v2655
          %2784 = vst [vmem:[%s328 + $0x248] sm:$0xff] %v2656
          %2785 = vst [vmem:[%s328 + $0x250] sm:$0xff] %v2657
          %2786 = vst [vmem:[%s328 + $0x258] sm:$0xff] %v2658
          %2787 = vst [vmem:[%s328 + $0x260] sm:$0xff] %v2659
          %2788 = vst [vmem:[%s328 + $0x268] sm:$0xff] %v2660
          %2789 = vst [vmem:[%s328 + $0x270] sm:$0xff] %v2661
          %2790 = vst [vmem:[%s328 + $0x278] sm:$0xff] %v2662
          %2791 = vst [vmem:[%s328 + $0x280] sm:$0xff] %v2663
          %2792 = vst [vmem:[%s328 + $0x288] sm:$0xff] %v2664
          %2793 = vst [vmem:[%s328 + $0x290] sm:$0xff] %v2665
          %2794 = vst [vmem:[%s328 + $0x298] sm:$0xff] %v2666
          %2795 = vst [vmem:[%s328 + $0x2a0] sm:$0xff] %v2667
          %2796 = vst [vmem:[%s328 + $0x2a8] sm:$0xff] %v2668
          %2797 = vst [vmem:[%s328 + $0x2b0] sm:$0xff] %v2669
          %2798 = vst [vmem:[%s328 + $0x2b8] sm:$0xff] %v2670
          %2799 = vst [vmem:[%s328 + $0x2c0] sm:$0xff] %v2671
          %2800 = vst [vmem:[%s328 + $0x2c8] sm:$0xff] %v2672
          %2801 = vst [vmem:[%s328 + $0x2d0] sm:$0xff] %v2673
          %2802 = vst [vmem:[%s328 + $0x2d8] sm:$0xff] %v2674
          %2803 = vst [vmem:[%s328 + $0x2e0] sm:$0xff] %v2675
          %2804 = vst [vmem:[%s328 + $0x2e8] sm:$0xff] %v2676
          %2805 = vst [vmem:[%s328 + $0x2f0] sm:$0xff] %v2677
          %2806 = vst [vmem:[%s328 + $0x2f8] sm:$0xff] %v2678
          %2807 = vst [vmem:[%s328 + $0x300] sm:$0xff] %v2679
          %2808 = vst [vmem:[%s328 + $0x308] sm:$0xff] %v2680
          %2809 = vst [vmem:[%s328 + $0x310] sm:$0xff] %v2681
          %2810 = vst [vmem:[%s328 + $0x318] sm:$0xff] %v2682
          %2811 = vst [vmem:[%s328 + $0x320] sm:$0xff] %v2683
          %2812 = vst [vmem:[%s328 + $0x328] sm:$0xff] %v2684
          %2813 = vst [vmem:[%s328 + $0x330] sm:$0xff] %v2685
          %2814 = vst [vmem:[%s328 + $0x338] sm:$0xff] %v2686
          %2815 = vst [vmem:[%s328 + $0x340] sm:$0xff] %v2687
          %2816 = vst [vmem:[%s328 + $0x348] sm:$0xff] %v2688
          %2817 = vst [vmem:[%s328 + $0x350] sm:$0xff] %v2689
          %2818 = vst [vmem:[%s328 + $0x358] sm:$0xff] %v2690
          %2819 = vst [vmem:[%s328 + $0x360] sm:$0xff] %v2691
          %2820 = vst [vmem:[%s328 + $0x368] sm:$0xff] %v2692
          %2821 = vst [vmem:[%s328 + $0x370] sm:$0xff] %v2693
          %2822 = vst [vmem:[%s328 + $0x378] sm:$0xff] %v2694
          %2823 = vst [vmem:[%s328 + $0x380] sm:$0xff] %v2695
          %2824 = vst [vmem:[%s328 + $0x388] sm:$0xff] %v2696
          %2825 = vst [vmem:[%s328 + $0x390] sm:$0xff] %v2697
          %2826 = vst [vmem:[%s328 + $0x398] sm:$0xff] %v2698
          %2827 = vst [vmem:[%s328 + $0x3a0] sm:$0xff] %v2699
          %2828 = vst [vmem:[%s328 + $0x3a8] sm:$0xff] %v2700
          %2829 = vst [vmem:[%s328 + $0x3b0] sm:$0xff] %v2701
          %2830 = vst [vmem:[%s328 + $0x3b8] sm:$0xff] %v2702
          %2831 = vst [vmem:[%s328 + $0x3c0] sm:$0xff] %v2703
          %2832 = vst [vmem:[%s328 + $0x3c8] sm:$0xff] %v2704
          %2833 = vst [vmem:[%s328 + $0x3d0] sm:$0xff] %v2705
          %2834 = vst [vmem:[%s328 + $0x3d8] sm:$0xff] %v2706
          %2835 = vst [vmem:[%s328 + $0x3e0] sm:$0xff] %v2707
          %2836 = vst [vmem:[%s328 + $0x3e8] sm:$0xff] %v2708
          %2837 = vst [vmem:[%s328 + $0x3f0] sm:$0xff] %v2709
          %2838 = vst [vmem:[%s328 + $0x3f8] sm:$0xff] %v2710
        $region64: #{mlp_forward.1} parent=39 // pred_fallthru
          _
        %s2839 = sand.u32 %s169, 1
        %s2840 = scalar_lea.sflag [#allocation4], %s2839
        %s2841 = sand.u32 %s169, 1
        %s2842 = smul.addr %s2841, 1024
        %s2843 = scalar_lea.vmem [#allocation10], %s2842
        // Predicated region
        $region65: #{mlp_forward.1} parent=39 // pred_check
          %p2844 = pneg %p179
        $region66: #{mlp_forward.1} parent=39 // pred_check_branch
          %2846 = sbr.rel (%p2844) target = $region68
        $region67: #{mlp_forward.1} parent=39 // pred_region
          %s2847 = smul.u32 64, %s28
          %2849 = vsyncadd %s2840, 0
          %s2850 = smul.addr %s2847, 2
          %s2851 = smul.addr %s2850, 8
          %s2852 = scalar_lea.hbm %s5, %s2851
          %s2853 = sshll.u32 %s2843, 4
          %s2854 = int_to_ptr.vmem [resolvable:$true] %s2853
          %s2855 = sshll.u32 %s2852, 4
          %s2856 = int_to_ptr.hbm [resolvable:$true] %s2855
          %2861 = dma.vmem_to_hbm [thread:$0]  %s2854, 16384, %s2856, %s2840, 256, 256, 16
        $region68: #{mlp_forward.1} parent=39 // pred_fallthru
          _
      $region40: #{mlp_forward.1} parent=5 // pred_fallthru
        _
      %p2862 = scmp.le.s32.totalorder 2, %s19
      // Predicated region
      $region69: #{mlp_forward.1} parent=5 // pred_check
        %p2863 = pneg %p2862
      $region70: #{mlp_forward.1} parent=5 // pred_check_branch
        %2865 = sbr.rel (%p2863) target = $region72
      $region71: #{mlp_forward.1} parent=5 // pred_region
        %s2866 = ssub.s32 %s19, 2
        // Predicated region
        $region73: #{mlp_forward.1} parent=71 // pred_check
          %p2867 = pneg %p185
        $region74: #{mlp_forward.1} parent=71 // pred_check_branch
          %2869 = sbr.rel (%p2867) target = $region76
        $region75: #{mlp_forward.1} parent=71 // pred_region
          %s2870 = sand.u32 %s170, 1
          %s2871 = scalar_lea.sflag [#allocation4], %s2870
          %s2872 = sand.u32 %s170, 1
          %s2873 = smul.addr %s2872, 1024
          %s2874 = scalar_lea.vmem [#allocation10], %s2873
          %2876 = dma.done %s2871, 16384
        $region76: #{mlp_forward.1} parent=71 // pred_fallthru
          _
      $region72: #{mlp_forward.1} parent=5 // pred_fallthru
        _
    $region6: #{mlp_forward.1} parent=1 // loop_footer
      %s23 = sadd.s32 1, %s19
    $region7: #{mlp_forward.1} parent=1 // loop_footer_branch
      %18 = sbr.rel target = $region3
    $region8: #{mlp_forward.1} parent=1 // loop_exit
      _
    %2877 = vsyncpa [#allocation3], 1
    %s2878 = scalar_lea.sflag [#allocation3], 1
    %2879 = vsyncpa %s2878, 1
    %2880 = vsyncpa [#allocation6], 1
    %2881 = vsyncpa [#allocation9], 1
    %2882 = vsyncpa [#allocation4], 1
    %s2883 = scalar_lea.sflag [#allocation4], 1
    %2884 = vsyncpa %s2883, 1

</llo_original>
